<compile_context>
chip_gen: v6e
topology: v6e:2x2x1
jax: 0.10.0
libtpu: 0.0.40
codegen_flags: <defaults>
</compile_context>

<pallas_src>
import functools

import jax
import jax.numpy as jnp
from jax import lax
from jax.experimental import pallas as pl
from jax.experimental.pallas import tpu as pltpu

_SUB = 8
_LANE = 128
_ALIGN = _SUB * _LANE            # 1024 elements per (8,128) tile
_MAX_BLOCK_ROWS = 4096           # (4096,128) f32 = 2 MiB per input per grid step
_SMALL_N = 64 * 1024             # below this, skip the kernel and let XLA fuse


def _sse_kernel(pred_ref, true_ref, out_ref, *, block_rows, rows):
    """Accumulates sum((pred - true)^2) into a resident (8, 128) output block."""
    k = pl.program_id(0)

    @pl.when(k == 0)
    def _init():
        out_ref[...] = jnp.zeros_like(out_ref)

    p = pred_ref[...].astype(jnp.float32)
    t = true_ref[...].astype(jnp.float32)
    diff = p - t

    def _accumulate(d):
        # Fold (block_rows, 128) -> (8, 128): pure elementwise vreg adds (VPU),
        # no cross-lane XLU work in the hot loop.
        sq = d * d
        out_ref[...] += jnp.sum(sq.reshape(block_rows // _SUB, _SUB, _LANE), axis=0)

    if rows % block_rows != 0:
        # Only the final grid step can cover rows past the end of the array;
        # gate the mask there so interior blocks stay on the cheap path.
        is_last = k == pl.num_programs(0) - 1

        @pl.when(is_last)
        def _masked():
            row0 = k * block_rows
            rid = row0 + lax.broadcasted_iota(jnp.int32, (block_rows, _LANE), 0)
            _accumulate(jnp.where(rid < rows, diff, 0.0))

        @pl.when(jnp.logical_not(is_last))
        def _unmasked():
            _accumulate(diff)
    else:
        _accumulate(diff)


def rmse_loss(pred, true):
    assert pred.shape == true.shape, "pred/true shapes must match"
    n_elems = pred.size

    # Small-input fast path: fixed pallas_call cost dominates; let XLA fuse it.
    if n_elems < _SMALL_N:
        d = pred.astype(jnp.float32) - true.astype(jnp.float32)
        return jnp.sqrt(jnp.mean(jnp.square(d)))

    p = jnp.ravel(pred)
    t = jnp.ravel(true)

    # Kernel covers the 1024-element-aligned prefix; the tiny tail is folded in XLA.
    n_main = n_elems - (n_elems % _ALIGN)
    n_tail = n_elems - n_main

    rows = n_main // _LANE            # multiple of 8
    p2 = p[:n_main].reshape(rows, _LANE)
    t2 = t[:n_main].reshape(rows, _LANE)

    block_rows = min(_MAX_BLOCK_ROWS, rows)   # full extent or a multiple of 8
    steps = pl.cdiv(rows, block_rows)

    kernel = functools.partial(_sse_kernel, block_rows=block_rows, rows=rows)

    partial = pl.pallas_call(
        kernel,
        out_shape=jax.ShapeDtypeStruct((_SUB, _LANE), jnp.float32),
        grid_spec=pltpu.PrefetchScalarGridSpec(
            num_scalar_prefetch=0,
            grid=(steps,),
            in_specs=[
                pl.BlockSpec((block_rows, _LANE), lambda k: (k, 0)),
                pl.BlockSpec((block_rows, _LANE), lambda k: (k, 0)),
            ],
            out_specs=pl.BlockSpec((_SUB, _LANE), lambda k: (0, 0)),
        ),
        compiler_params=pltpu.CompilerParams(
            dimension_semantics=("arbitrary",),
            vmem_limit_bytes=32 * 1024 * 1024,
        ),
    )(p2, t2)

    sse = jnp.sum(partial)
    if n_tail:
        dt = p[n_main:].astype(jnp.float32) - t[n_main:].astype(jnp.float32)
        sse = sse + jnp.sum(dt * dt)

    # Result is always f32 (PyTorch would return the input dtype for bf16 inputs).
    return jnp.sqrt(sse / n_elems)


if __name__ == "__main__":
    key = jax.random.PRNGKey(0)
    k1, k2, k3, k4, k5, k6 = jax.random.split(key, 6)

    def ref(p, t):
        d = p.astype(jnp.float32) - t.astype(jnp.float32)
        return jnp.sqrt(jnp.mean(jnp.square(d)))

    # Case 1: module-scale NCHW-like input (small -> fused XLA fast path).
    pred1 = jax.random.normal(k1, (2, 4, 16, 16), dtype=jnp.float32)
    true1 = jax.random.normal(k2, (2, 4, 16, 16), dtype=jnp.float32)
    out1 = rmse_loss(pred1, true1)
    jax.block_until_ready(out1)
    assert jnp.allclose(out1, ref(pred1, true1), rtol=1e-5, atol=1e-6), (out1, ref(pred1, true1))

    # Case 2: Pallas kernel path, multi-block grid with a ragged (masked) last block.
    pred2 = jax.random.normal(k3, (5, 1024, 128), dtype=jnp.float32)
    true2 = jax.random.normal(k4, (5, 1024, 128), dtype=jnp.float32)
    out2 = rmse_loss(pred2, true2)
    jax.block_until_ready(out2)
    assert jnp.allclose(out2, ref(pred2, true2), rtol=1e-5, atol=1e-6), (out2, ref(pred2, true2))

    # Case 3: Pallas kernel path with a misaligned element count (jnp-folded tail).
    pred3 = jax.random.normal(k5, (519, 401), dtype=jnp.float32)
    true3 = jax.random.normal(k6, (519, 401), dtype=jnp.float32)
    out3 = rmse_loss(pred3, true3)
    jax.block_until_ready(out3)
    assert jnp.allclose(out3, ref(pred3, true3), rtol=1e-5, atol=1e-6), (out3, ref(pred3, true3))

    print("KERNEL_OK")
</pallas_src>

<mosaic_0001>
module attributes {stable_mosaic.version = 11 : i64} {
  func.func @_sse_kernel(%arg0: i32, %arg1: memref<4096x128xf32, #tpu.memory_space<vmem>>, %arg2: memref<4096x128xf32, #tpu.memory_space<vmem>>, %arg3: memref<8x128xf32, #tpu.memory_space<vmem>>) attributes {dimension_semantics = [#tpu.dimension_semantics<arbitrary>], iteration_bounds = array<i64: 2>, scalar_prefetch = 0 : i64, scratch_operands = 0 : i64, tpu.core_type = #tpu.core_type<tc>, window_params = [{transform_indices = @transform_0, window_bounds = array<i64: 4096, 128>}, {transform_indices = @transform_1, window_bounds = array<i64: 4096, 128>}, {pipeline_mode = #tpu.pipeline_mode<synchronous>, transform_indices = @transform_2, window_bounds = array<i64: 8, 128>}]} {
    %c0_i32 = arith.constant 0 : i32
    %0 = arith.cmpi eq, %arg0, %c0_i32 : i32
    %1 = arith.extui %0 : i1 to i32
    %c0_i32_0 = arith.constant 0 : i32
    %2 = arith.cmpi ne, %1, %c0_i32_0 : i32
    scf.if %2 {
      %cst = arith.constant 0.000000e+00 : f32
      %12 = vector.broadcast %cst : f32 to vector<8x128xf32>
      %c0_6 = arith.constant 0 : index
      %c0_7 = arith.constant 0 : index
      %13 = vector.load %arg3[%c0_6, %c0_7] : memref<8x128xf32, #tpu.memory_space<vmem>>, vector<8x128xf32>
      tpu.vector_store %arg3[%c0_6, %c0_7], %12 {strides = array<i32>} : memref<8x128xf32, #tpu.memory_space<vmem>>, vector<8x128xf32>,
    } else {
    }
    %c0 = arith.constant 0 : index
    %c0_1 = arith.constant 0 : index
    %3 = vector.load %arg1[%c0, %c0_1] : memref<4096x128xf32, #tpu.memory_space<vmem>>, vector<4096x128xf32>
    %c0_2 = arith.constant 0 : index
    %c0_3 = arith.constant 0 : index
    %4 = vector.load %arg2[%c0_2, %c0_3] : memref<4096x128xf32, #tpu.memory_space<vmem>>, vector<4096x128xf32>
    %5 = arith.subf %3, %4 : vector<4096x128xf32>
    %c1_i32 = arith.constant 1 : i32
    %6 = arith.cmpi eq, %arg0, %c1_i32 : i32
    %7 = arith.extui %6 : i1 to i32
    %c0_i32_4 = arith.constant 0 : i32
    %8 = arith.cmpi ne, %7, %c0_i32_4 : i32
    scf.if %8 {
      %c4096_i32 = arith.constant 4096 : i32
      %12 = arith.muli %arg0, %c4096_i32 : i32
      %13 = tpu.iota {dimensions = array<i32: 0>} : vector<4096x128xi32>
      %14 = vector.broadcast %12 : i32 to vector<4096x128xi32>
      %15 = arith.addi %14, %13 : vector<4096x128xi32>
      %c5120_i32 = arith.constant 5120 : i32
      %16 = vector.broadcast %c5120_i32 : i32 to vector<4096x128xi32>
      %17 = arith.cmpi slt, %15, %16 : vector<4096x128xi32>
      %cst = arith.constant 0.000000e+00 : f32
      %18 = vector.broadcast %cst : f32 to vector<4096x128xf32>
      %19 = arith.select %17, %5, %18 : vector<4096x128xi1>, vector<4096x128xf32>
      %20 = arith.mulf %19, %19 : vector<4096x128xf32>
      %c0_6 = arith.constant 0 : index
      %c0_7 = arith.constant 0 : index
      %21 = vector.load %arg3[%c0_6, %c0_7] : memref<8x128xf32, #tpu.memory_space<vmem>>, vector<8x128xf32>
      %22 = vector.shape_cast %20 : vector<4096x128xf32> to vector<512x8x128xf32>
      %cst_8 = arith.constant dense<0.000000e+00> : vector<8x128xf32>
      %23 = vector.multi_reduction <add>, %22, %cst_8 [0] : vector<512x8x128xf32> to vector<8x128xf32>
      %24 = arith.addf %21, %23 : vector<8x128xf32>
      %c0_9 = arith.constant 0 : index
      %c0_10 = arith.constant 0 : index
      %25 = vector.load %arg3[%c0_9, %c0_10] : memref<8x128xf32, #tpu.memory_space<vmem>>, vector<8x128xf32>
      tpu.vector_store %arg3[%c0_9, %c0_10], %24 {strides = array<i32>} : memref<8x128xf32, #tpu.memory_space<vmem>>, vector<8x128xf32>,
    } else {
    }
    %true = arith.constant true
    %9 = arith.xori %6, %true : i1
    %10 = arith.extui %9 : i1 to i32
    %c0_i32_5 = arith.constant 0 : i32
    %11 = arith.cmpi ne, %10, %c0_i32_5 : i32
    scf.if %11 {
      %12 = arith.mulf %5, %5 : vector<4096x128xf32>
      %c0_6 = arith.constant 0 : index
      %c0_7 = arith.constant 0 : index
      %13 = vector.load %arg3[%c0_6, %c0_7] : memref<8x128xf32, #tpu.memory_space<vmem>>, vector<8x128xf32>
      %14 = vector.shape_cast %12 : vector<4096x128xf32> to vector<512x8x128xf32>
      %cst = arith.constant dense<0.000000e+00> : vector<8x128xf32>
      %15 = vector.multi_reduction <add>, %14, %cst [0] : vector<512x8x128xf32> to vector<8x128xf32>
      %16 = arith.addf %13, %15 : vector<8x128xf32>
      %c0_8 = arith.constant 0 : index
      %c0_9 = arith.constant 0 : index
      %17 = vector.load %arg3[%c0_8, %c0_9] : memref<8x128xf32, #tpu.memory_space<vmem>>, vector<8x128xf32>
      tpu.vector_store %arg3[%c0_8, %c0_9], %16 {strides = array<i32>} : memref<8x128xf32, #tpu.memory_space<vmem>>, vector<8x128xf32>,
    } else {
    }
    return
  }
  func.func @transform_0(%arg0: i32) -> (i32, i32) {
    %c0_i32 = arith.constant 0 : i32
    %c0_i32_0 = arith.constant 0 : i32
    return %arg0, %c0_i32 : i32, i32
  }
  func.func @transform_1(%arg0: i32) -> (i32, i32) {
    %c0_i32 = arith.constant 0 : i32
    %c0_i32_0 = arith.constant 0 : i32
    return %arg0, %c0_i32 : i32, i32
  }
  func.func @transform_2(%arg0: i32) -> (i32, i32) {
    %c0_i32 = arith.constant 0 : i32
    %c0_i32_0 = arith.constant 0 : i32
    %c0_i32_1 = arith.constant 0 : i32
    return %c0_i32, %c0_i32_0 : i32, i32
  }
}

</mosaic_0001>

<llo_original>
// kernel: tpu_custom_call.1
$region0: #{tpu_custom_call.1}
  #allocation0 [shape = 'u32[]', space=smem, size = 0x4, offset = 0x4, fixed_abs, tag = 'smem constant byte address 0x4 - core index']
  #allocation1 [shape = 'u32[144,128]{1,0:T(1,128)}', space=vmem, size = 0x12000, scoped, tag = 'internal scratch']
  %s0 = inlined_call_operand.hbm [shape: f32[5120,128], index: 0, kind: input, shape index: {}]
  %s1 = inlined_call_operand.hbm [shape: f32[5120,128], index: 1, kind: input, shape index: {}]
  %s2 = inlined_call_operand.hbm [shape: f32[8,128], index: 2, kind: output, shape index: {}]
  %s3 = sld [smem:[#allocation0]]
  $region61: #{tpu_custom_call.1} parent=0
    _
  %s5 = ssub.s32 1, %s3
  %s6 = scalar_select 0, %s5, %s3
  $region1: #{tpu_custom_call.1} parent=0
    #allocation2 [shape = 'u8[4194304]{0}', space=vmem, size = 0x400000, scoped, tag = 'input window, operand 0']
    #allocation3 [shape = 's32[2]{0}', space=sflag, size = 0x8, scoped, tag = 'scoped memory for tpu_custom_call.1']
    #allocation4 [shape = 's32[2]{0}', space=sflag, size = 0x8, scoped, tag = 'scoped memory for tpu_custom_call.1']
    #allocation5 [shape = 'u8[4194304]{0}', space=vmem, size = 0x400000, scoped, tag = 'input window, operand 1']
    #allocation6 [shape = 's32[2]{0}', space=sflag, size = 0x8, scoped, tag = 'scoped memory for tpu_custom_call.1']
    #allocation7 [shape = 'u8[4096]{0}', space=vmem, size = 0x1000, scoped, tag = 'output window, operand 0, single buffered']
    %7 = vsyncpa [#allocation3], 0
    %s8 = scalar_lea.sflag [#allocation3], 1
    %9 = vsyncpa %s8, 0
    %10 = vsyncpa [#allocation6], 0
    %s11 = scalar_lea.sflag [#allocation6], 1
    %12 = vsyncpa %s11, 0
    %13 = vsyncpa [#allocation4], 0
    loop: start=0, step=1, limit=4
    $region2: #{tpu_custom_call.1} parent=1 // loop_pre_header
      _
    $region3: #{tpu_custom_call.1} parent=1 // loop_header
      %s15 = sphi 0, %s19
      %p16 = scmp.ge.s32.totalorder %s15, 4
      %s25 = sphi 0, %s27
      %s28 = sphi 0, %s25
      %s29 = sphi 0, %s28
      %s45 = sphi 0, %s29
      %s51 = sphi 0, %s53
      %s54 = sphi 0, %s51
      %s55 = sphi 0, %s54
      %s71 = sphi 0, %s55
      %s75 = sphi 0, %s75
      %s77 = sphi 0, %s75
      %s78 = sphi 0, %s77
      %s92 = sphi 0, %s78
    $region4: #{tpu_custom_call.1} parent=1 // loop_header_branch
      %18 = sbr.rel (%p16) target = $region8
    $region5: #{tpu_custom_call.1} parent=1 // loop_body
      %s20 = ssub.s32 %s15, 1
      %s21 = ssub.s32 %s15, 2
      %s22 = sadd.s32 %s15, 1
      %s23 = ssub.s32 %s15, %s22
      %p24 = scmp.eq.s32.totalorder %s23, 0
      %s26 = sadd.s32 %s25, 1
      %s27 = scalar_select %p24, %s25, %s26
      %p30 = pneg %p24
      %p31 = scmp.eq.s32.totalorder %s15, 1
      %p32 = por %p30, %p31
      %p33 = scmp.ne.s32.totalorder %s25, %s28
      %p34 = scmp.eq.s32.totalorder %s15, 0
      %p35 = por %p33, %p34
      %p36 = scmp.ne.s32.totalorder %s25, %s28
      %p37 = scmp.eq.s32.totalorder %s20, 1
      %p38 = por %p36, %p37
      %p39 = scmp.ne.s32.totalorder %s28, %s29
      %p40 = scmp.eq.s32.totalorder %s20, 0
      %p41 = por %p39, %p40
      %p42 = scmp.ne.s32.totalorder %s28, %s29
      %p43 = scmp.eq.s32.totalorder %s21, 1
      %p44 = por %p42, %p43
      %p46 = scmp.ne.s32.totalorder %s29, %s45
      %p47 = scmp.eq.s32.totalorder %s21, 0
      %p48 = por %p46, %p47
      %s49 = ssub.s32 %s15, %s22
      %p50 = scmp.eq.s32.totalorder %s49, 0
      %s52 = sadd.s32 %s51, 1
      %s53 = scalar_select %p50, %s51, %s52
      %p56 = pneg %p50
      %p57 = scmp.eq.s32.totalorder %s15, 1
      %p58 = por %p56, %p57
      %p59 = scmp.ne.s32.totalorder %s51, %s54
      %p60 = scmp.eq.s32.totalorder %s15, 0
      %p61 = por %p59, %p60
      %p62 = scmp.ne.s32.totalorder %s51, %s54
      %p63 = scmp.eq.s32.totalorder %s20, 1
      %p64 = por %p62, %p63
      %p65 = scmp.ne.s32.totalorder %s54, %s55
      %p66 = scmp.eq.s32.totalorder %s20, 0
      %p67 = por %p65, %p66
      %p68 = scmp.ne.s32.totalorder %s54, %s55
      %p69 = scmp.eq.s32.totalorder %s21, 1
      %p70 = por %p68, %p69
      %p72 = scmp.ne.s32.totalorder %s55, %s71
      %p73 = scmp.eq.s32.totalorder %s21, 0
      %p74 = por %p72, %p73
      %s76 = sadd.s32 %s75, 1
      %p79 = scmp.eq.s32.totalorder %s15, 1
      %p80 = scmp.ne.s32.totalorder %s75, %s77
      %p81 = scmp.eq.s32.totalorder %s15, 0
      %p82 = por %p80, %p81
      %p83 = scmp.ne.s32.totalorder %s75, %s77
      %p84 = scmp.eq.s32.totalorder %s20, 1
      %p85 = por %p83, %p84
      %p86 = scmp.ne.s32.totalorder %s77, %s78
      %p87 = scmp.eq.s32.totalorder %s20, 0
      %p88 = por %p86, %p87
      %p89 = scmp.ne.s32.totalorder %s77, %s78
      %p90 = scmp.eq.s32.totalorder %s21, 1
      %p91 = por %p89, %p90
      %p93 = scmp.ne.s32.totalorder %s78, %s92
      %p94 = scmp.eq.s32.totalorder %s21, 0
      %p95 = por %p93, %p94
      %p96 = scmp.le.s32.totalorder 1, %s15
      %p97 = scmp.lt.s32.totalorder %s15, 3
      %p98 = pnand %p96, %p97
      %p99 = pneg %p98
      // Predicated region
      $region9: #{tpu_custom_call.1} parent=5 // pred_check
        _
      $region10: #{tpu_custom_call.1} parent=5 // pred_check_branch
        %101 = sbr.rel (%p98) target = $region12
      $region11: #{tpu_custom_call.1} parent=5 // pred_region
        %s102 = ssub.s32 %s15, 1
      $region12: #{tpu_custom_call.1} parent=5 // pred_fallthru
        _
      %p103 = scmp.lt.s32.totalorder %s15, 2
      // Predicated region
      $region13: #{tpu_custom_call.1} parent=5 // pred_check
        %p104 = pneg %p103
      $region14: #{tpu_custom_call.1} parent=5 // pred_check_branch
        %106 = sbr.rel (%p104) target = $region16
      $region15: #{tpu_custom_call.1} parent=5 // pred_region
        // Predicated region
        $region17: #{tpu_custom_call.1} parent=15 // pred_check
          %p107 = pneg %p35
        $region18: #{tpu_custom_call.1} parent=15 // pred_check_branch
          %109 = sbr.rel (%p107) target = $region20
        $region19: #{tpu_custom_call.1} parent=15 // pred_region
          %s110 = sand.u32 %s25, 1
          %s111 = scalar_lea.sflag [#allocation3], %s110
          %s112 = sand.u32 %s25, 1
          %s113 = smul.addr %s112, 4096
          %s114 = scalar_lea.vmem [#allocation2], %s113
          %s115 = smul.u32 512, %s15
          %s116 = ssub.s32 640, %s115
          %p117 = scmp.lt.s32.totalorder %s116, 512
          %s118 = scalar_select %p117, %s116, 512
          %s119 = smul.u32 128, %s118
          %s121 = ssub.s32 65536, %s119
          %122 = vsyncadd %s111, %s121
          %p123 = scmp.ne.s32.totalorder 0, %s119
          %s124 = smul.addr %s115, 128
          %s125 = scalar_lea.hbm %s0, %s124
          %s126 = smul.u32 8, %s118
          %s127 = sshll.u32 %s114, 4
          %s128 = int_to_ptr.vmem [resolvable:$true] %s127
          %s129 = sshll.u32 %s126, 4
          %133 = dma.hbm_to_vmem [thread:$0]  (%p123), %s125, %s129, %s128, %s111, 128, 128, 8
        $region20: #{tpu_custom_call.1} parent=15 // pred_fallthru
          _
        // Predicated region
        $region21: #{tpu_custom_call.1} parent=15 // pred_check
          %p134 = pneg %p61
        $region22: #{tpu_custom_call.1} parent=15 // pred_check_branch
          %136 = sbr.rel (%p134) target = $region24
        $region23: #{tpu_custom_call.1} parent=15 // pred_region
          %s137 = sand.u32 %s51, 1
          %s138 = scalar_lea.sflag [#allocation6], %s137
          %s139 = sand.u32 %s51, 1
          %s140 = smul.addr %s139, 4096
          %s141 = scalar_lea.vmem [#allocation5], %s140
          %s142 = smul.u32 512, %s15
          %s143 = ssub.s32 640, %s142
          %p144 = scmp.lt.s32.totalorder %s143, 512
          %s145 = scalar_select %p144, %s143, 512
          %s146 = smul.u32 128, %s145
          %s148 = ssub.s32 65536, %s146
          %149 = vsyncadd %s138, %s148
          %p150 = scmp.ne.s32.totalorder 0, %s146
          %s151 = smul.addr %s142, 128
          %s152 = scalar_lea.hbm %s1, %s151
          %s153 = smul.u32 8, %s145
          %s154 = sshll.u32 %s141, 4
          %s155 = int_to_ptr.vmem [resolvable:$true] %s154
          %s156 = sshll.u32 %s153, 4
          %160 = dma.hbm_to_vmem [thread:$0]  (%p150), %s152, %s156, %s155, %s138, 128, 128, 8
        $region24: #{tpu_custom_call.1} parent=15 // pred_fallthru
          _
      $region16: #{tpu_custom_call.1} parent=5 // pred_fallthru
        _
      %p161 = scmp.le.s32.totalorder 1, %s15
      %p162 = scmp.lt.s32.totalorder %s15, 3
      %p163 = pnand %p161, %p162
      %p164 = pneg %p163
      // Predicated region
      $region25: #{tpu_custom_call.1} parent=5 // pred_check
        _
      $region26: #{tpu_custom_call.1} parent=5 // pred_check_branch
        %166 = sbr.rel (%p163) target = $region28
      $region27: #{tpu_custom_call.1} parent=5 // pred_region
        %s167 = ssub.s32 %s15, 1
        %s168 = sand.u32 %s28, 1
        %s169 = scalar_lea.sflag [#allocation3], %s168
        %s170 = sand.u32 %s28, 1
        %s171 = smul.addr %s170, 4096
        %s172 = scalar_lea.vmem [#allocation2], %s171
        // Predicated region
        $region29: #{tpu_custom_call.1} parent=27 // pred_check
          %p173 = pneg %p41
        $region30: #{tpu_custom_call.1} parent=27 // pred_check_branch
          %175 = sbr.rel (%p173) target = $region32
        $region31: #{tpu_custom_call.1} parent=27 // pred_region
          %176 = dma.done %s169, 65536
        $region32: #{tpu_custom_call.1} parent=27 // pred_fallthru
          _
        %s177 = sand.u32 %s54, 1
        %s178 = scalar_lea.sflag [#allocation6], %s177
        %s179 = sand.u32 %s54, 1
        %s180 = smul.addr %s179, 4096
        %s181 = scalar_lea.vmem [#allocation5], %s180
        // Predicated region
        $region33: #{tpu_custom_call.1} parent=27 // pred_check
          %p182 = pneg %p67
        $region34: #{tpu_custom_call.1} parent=27 // pred_check_branch
          %184 = sbr.rel (%p182) target = $region36
        $region35: #{tpu_custom_call.1} parent=27 // pred_region
          %185 = dma.done %s178, 65536
        $region36: #{tpu_custom_call.1} parent=27 // pred_fallthru
          _
        %s186 = sand.u32 %s28, 1
        %s187 = scalar_lea.sflag [#allocation3], %s186
        %s188 = sand.u32 %s28, 1
        %s189 = smul.addr %s188, 4096
        %s190 = scalar_lea.vmem [#allocation2], %s189
        %p191 = pneg %p41
        %p192 = pneg %p38
        %s193 = sand.u32 %s54, 1
        %s194 = scalar_lea.sflag [#allocation6], %s193
        %s195 = sand.u32 %s54, 1
        %s196 = smul.addr %s195, 4096
        %s197 = scalar_lea.vmem [#allocation5], %s196
        %p198 = pneg %p67
        %p199 = pneg %p64
        %p200 = pneg %p88
        %p201 = pneg %p85
        %s202 = smul.u32 512, %s20
        %s203 = ssub.s32 640, %s202
        %p204 = scmp.lt.s32.totalorder %s203, 512
        %s205 = scalar_select %p204, %s203, 512
        %s206 = smul.u32 128, %s205
        %s207 = smul.u32 512, %s20
        %s208 = ssub.s32 640, %s207
        %p209 = scmp.lt.s32.totalorder %s208, 512
        %s210 = scalar_select %p209, %s208, 512
        %s211 = smul.u32 128, %s210
        %p212 = scmp.eq.s32.totalorder %s20, 0
        // Predicated region
        $region37: #{tpu_custom_call.1} parent=27 // pred_check
          %p213 = pneg %p212
        $region38: #{tpu_custom_call.1} parent=27 // pred_check_branch
          %215 = sbr.rel (%p213) target = $region40
        $region39: #{tpu_custom_call.1} parent=27 // pred_region
          %216 = vst [vmem:[#allocation7] sm:$0xff] 0.0
        $region40: #{tpu_custom_call.1} parent=27 // pred_fallthru
          _
        %v217 = vld [vmem:[%s172] sm:$0xff]
        %v218 = vld [vmem:[%s172 + $0x8] sm:$0xff]
        %v219 = vld [vmem:[%s172 + $0x10] sm:$0xff]
        %v220 = vld [vmem:[%s172 + $0x18] sm:$0xff]
        %v221 = vld [vmem:[%s172 + $0x20] sm:$0xff]
        %v222 = vld [vmem:[%s172 + $0x28] sm:$0xff]
        %v223 = vld [vmem:[%s172 + $0x30] sm:$0xff]
        %v224 = vld [vmem:[%s172 + $0x38] sm:$0xff]
        %v225 = vld [vmem:[%s172 + $0x40] sm:$0xff]
        %v226 = vld [vmem:[%s172 + $0x48] sm:$0xff]
        %v227 = vld [vmem:[%s172 + $0x50] sm:$0xff]
        %v228 = vld [vmem:[%s172 + $0x58] sm:$0xff]
        %v229 = vld [vmem:[%s172 + $0x60] sm:$0xff]
        %v230 = vld [vmem:[%s172 + $0x68] sm:$0xff]
        %v231 = vld [vmem:[%s172 + $0x70] sm:$0xff]
        %v232 = vld [vmem:[%s172 + $0x78] sm:$0xff]
        %v233 = vld [vmem:[%s172 + $0x80] sm:$0xff]
        %v234 = vld [vmem:[%s172 + $0x88] sm:$0xff]
        %v235 = vld [vmem:[%s172 + $0x90] sm:$0xff]
        %v236 = vld [vmem:[%s172 + $0x98] sm:$0xff]
        %v237 = vld [vmem:[%s172 + $0xa0] sm:$0xff]
        %v238 = vld [vmem:[%s172 + $0xa8] sm:$0xff]
        %v239 = vld [vmem:[%s172 + $0xb0] sm:$0xff]
        %v240 = vld [vmem:[%s172 + $0xb8] sm:$0xff]
        %v241 = vld [vmem:[%s172 + $0xc0] sm:$0xff]
        %v242 = vld [vmem:[%s172 + $0xc8] sm:$0xff]
        %v243 = vld [vmem:[%s172 + $0xd0] sm:$0xff]
        %v244 = vld [vmem:[%s172 + $0xd8] sm:$0xff]
        %v245 = vld [vmem:[%s172 + $0xe0] sm:$0xff]
        %v246 = vld [vmem:[%s172 + $0xe8] sm:$0xff]
        %v247 = vld [vmem:[%s172 + $0xf0] sm:$0xff]
        %v248 = vld [vmem:[%s172 + $0xf8] sm:$0xff]
        %v249 = vld [vmem:[%s172 + $0x100] sm:$0xff]
        %v250 = vld [vmem:[%s172 + $0x108] sm:$0xff]
        %v251 = vld [vmem:[%s172 + $0x110] sm:$0xff]
        %v252 = vld [vmem:[%s172 + $0x118] sm:$0xff]
        %v253 = vld [vmem:[%s172 + $0x120] sm:$0xff]
        %v254 = vld [vmem:[%s172 + $0x128] sm:$0xff]
        %v255 = vld [vmem:[%s172 + $0x130] sm:$0xff]
        %v256 = vld [vmem:[%s172 + $0x138] sm:$0xff]
        %v257 = vld [vmem:[%s172 + $0x140] sm:$0xff]
        %v258 = vld [vmem:[%s172 + $0x148] sm:$0xff]
        %v259 = vld [vmem:[%s172 + $0x150] sm:$0xff]
        %v260 = vld [vmem:[%s172 + $0x158] sm:$0xff]
        %v261 = vld [vmem:[%s172 + $0x160] sm:$0xff]
        %v262 = vld [vmem:[%s172 + $0x168] sm:$0xff]
        %v263 = vld [vmem:[%s172 + $0x170] sm:$0xff]
        %v264 = vld [vmem:[%s172 + $0x178] sm:$0xff]
        %v265 = vld [vmem:[%s172 + $0x180] sm:$0xff]
        %v266 = vld [vmem:[%s172 + $0x188] sm:$0xff]
        %v267 = vld [vmem:[%s172 + $0x190] sm:$0xff]
        %v268 = vld [vmem:[%s172 + $0x198] sm:$0xff]
        %v269 = vld [vmem:[%s172 + $0x1a0] sm:$0xff]
        %v270 = vld [vmem:[%s172 + $0x1a8] sm:$0xff]
        %v271 = vld [vmem:[%s172 + $0x1b0] sm:$0xff]
        %v272 = vld [vmem:[%s172 + $0x1b8] sm:$0xff]
        %v273 = vld [vmem:[%s172 + $0x1c0] sm:$0xff]
        %v274 = vld [vmem:[%s172 + $0x1c8] sm:$0xff]
        %v275 = vld [vmem:[%s172 + $0x1d0] sm:$0xff]
        %v276 = vld [vmem:[%s172 + $0x1d8] sm:$0xff]
        %v277 = vld [vmem:[%s172 + $0x1e0] sm:$0xff]
        %v278 = vld [vmem:[%s172 + $0x1e8] sm:$0xff]
        %v279 = vld [vmem:[%s172 + $0x1f0] sm:$0xff]
        %v280 = vld [vmem:[%s172 + $0x1f8] sm:$0xff]
        %v281 = vld [vmem:[%s172 + $0x200] sm:$0xff]
        %v282 = vld [vmem:[%s172 + $0x208] sm:$0xff]
        %v283 = vld [vmem:[%s172 + $0x210] sm:$0xff]
        %v284 = vld [vmem:[%s172 + $0x218] sm:$0xff]
        %v285 = vld [vmem:[%s172 + $0x220] sm:$0xff]
        %v286 = vld [vmem:[%s172 + $0x228] sm:$0xff]
        %v287 = vld [vmem:[%s172 + $0x230] sm:$0xff]
        %v288 = vld [vmem:[%s172 + $0x238] sm:$0xff]
        %v289 = vld [vmem:[%s172 + $0x240] sm:$0xff]
        %v290 = vld [vmem:[%s172 + $0x248] sm:$0xff]
        %v291 = vld [vmem:[%s172 + $0x250] sm:$0xff]
        %v292 = vld [vmem:[%s172 + $0x258] sm:$0xff]
        %v293 = vld [vmem:[%s172 + $0x260] sm:$0xff]
        %v294 = vld [vmem:[%s172 + $0x268] sm:$0xff]
        %v295 = vld [vmem:[%s172 + $0x270] sm:$0xff]
        %v296 = vld [vmem:[%s172 + $0x278] sm:$0xff]
        %v297 = vld [vmem:[%s172 + $0x280] sm:$0xff]
        %v298 = vld [vmem:[%s172 + $0x288] sm:$0xff]
        %v299 = vld [vmem:[%s172 + $0x290] sm:$0xff]
        %v300 = vld [vmem:[%s172 + $0x298] sm:$0xff]
        %v301 = vld [vmem:[%s172 + $0x2a0] sm:$0xff]
        %v302 = vld [vmem:[%s172 + $0x2a8] sm:$0xff]
        %v303 = vld [vmem:[%s172 + $0x2b0] sm:$0xff]
        %v304 = vld [vmem:[%s172 + $0x2b8] sm:$0xff]
        %v305 = vld [vmem:[%s172 + $0x2c0] sm:$0xff]
        %v306 = vld [vmem:[%s172 + $0x2c8] sm:$0xff]
        %v307 = vld [vmem:[%s172 + $0x2d0] sm:$0xff]
        %v308 = vld [vmem:[%s172 + $0x2d8] sm:$0xff]
        %v309 = vld [vmem:[%s172 + $0x2e0] sm:$0xff]
        %v310 = vld [vmem:[%s172 + $0x2e8] sm:$0xff]
        %v311 = vld [vmem:[%s172 + $0x2f0] sm:$0xff]
        %v312 = vld [vmem:[%s172 + $0x2f8] sm:$0xff]
        %v313 = vld [vmem:[%s172 + $0x300] sm:$0xff]
        %v314 = vld [vmem:[%s172 + $0x308] sm:$0xff]
        %v315 = vld [vmem:[%s172 + $0x310] sm:$0xff]
        %v316 = vld [vmem:[%s172 + $0x318] sm:$0xff]
        %v317 = vld [vmem:[%s172 + $0x320] sm:$0xff]
        %v318 = vld [vmem:[%s172 + $0x328] sm:$0xff]
        %v319 = vld [vmem:[%s172 + $0x330] sm:$0xff]
        %v320 = vld [vmem:[%s172 + $0x338] sm:$0xff]
        %v321 = vld [vmem:[%s172 + $0x340] sm:$0xff]
        %v322 = vld [vmem:[%s172 + $0x348] sm:$0xff]
        %v323 = vld [vmem:[%s172 + $0x350] sm:$0xff]
        %v324 = vld [vmem:[%s172 + $0x358] sm:$0xff]
        %v325 = vld [vmem:[%s172 + $0x360] sm:$0xff]
        %v326 = vld [vmem:[%s172 + $0x368] sm:$0xff]
        %v327 = vld [vmem:[%s172 + $0x370] sm:$0xff]
        %v328 = vld [vmem:[%s172 + $0x378] sm:$0xff]
        %v329 = vld [vmem:[%s172 + $0x380] sm:$0xff]
        %v330 = vld [vmem:[%s172 + $0x388] sm:$0xff]
        %v331 = vld [vmem:[%s172 + $0x390] sm:$0xff]
        %v332 = vld [vmem:[%s172 + $0x398] sm:$0xff]
        %v333 = vld [vmem:[%s172 + $0x3a0] sm:$0xff]
        %v334 = vld [vmem:[%s172 + $0x3a8] sm:$0xff]
        %v335 = vld [vmem:[%s172 + $0x3b0] sm:$0xff]
        %v336 = vld [vmem:[%s172 + $0x3b8] sm:$0xff]
        %v337 = vld [vmem:[%s172 + $0x3c0] sm:$0xff]
        %v338 = vld [vmem:[%s172 + $0x3c8] sm:$0xff]
        %v339 = vld [vmem:[%s172 + $0x3d0] sm:$0xff]
        %v340 = vld [vmem:[%s172 + $0x3d8] sm:$0xff]
        %v341 = vld [vmem:[%s172 + $0x3e0] sm:$0xff]
        %v342 = vld [vmem:[%s172 + $0x3e8] sm:$0xff]
        %v343 = vld [vmem:[%s172 + $0x3f0] sm:$0xff]
        %v344 = vld [vmem:[%s172 + $0x3f8] sm:$0xff]
        %v345 = vld [vmem:[%s172 + $0x400] sm:$0xff]
        %v346 = vld [vmem:[%s172 + $0x408] sm:$0xff]
        %v347 = vld [vmem:[%s172 + $0x410] sm:$0xff]
        %v348 = vld [vmem:[%s172 + $0x418] sm:$0xff]
        %v349 = vld [vmem:[%s172 + $0x420] sm:$0xff]
        %v350 = vld [vmem:[%s172 + $0x428] sm:$0xff]
        %v351 = vld [vmem:[%s172 + $0x430] sm:$0xff]
        %v352 = vld [vmem:[%s172 + $0x438] sm:$0xff]
        %v353 = vld [vmem:[%s172 + $0x440] sm:$0xff]
        %v354 = vld [vmem:[%s172 + $0x448] sm:$0xff]
        %v355 = vld [vmem:[%s172 + $0x450] sm:$0xff]
        %v356 = vld [vmem:[%s172 + $0x458] sm:$0xff]
        %v357 = vld [vmem:[%s172 + $0x460] sm:$0xff]
        %v358 = vld [vmem:[%s172 + $0x468] sm:$0xff]
        %v359 = vld [vmem:[%s172 + $0x470] sm:$0xff]
        %v360 = vld [vmem:[%s172 + $0x478] sm:$0xff]
        %v361 = vld [vmem:[%s172 + $0x480] sm:$0xff]
        %v362 = vld [vmem:[%s172 + $0x488] sm:$0xff]
        %v363 = vld [vmem:[%s172 + $0x490] sm:$0xff]
        %v364 = vld [vmem:[%s172 + $0x498] sm:$0xff]
        %v365 = vld [vmem:[%s172 + $0x4a0] sm:$0xff]
        %v366 = vld [vmem:[%s172 + $0x4a8] sm:$0xff]
        %v367 = vld [vmem:[%s172 + $0x4b0] sm:$0xff]
        %v368 = vld [vmem:[%s172 + $0x4b8] sm:$0xff]
        %v369 = vld [vmem:[%s172 + $0x4c0] sm:$0xff]
        %v370 = vld [vmem:[%s172 + $0x4c8] sm:$0xff]
        %v371 = vld [vmem:[%s172 + $0x4d0] sm:$0xff]
        %v372 = vld [vmem:[%s172 + $0x4d8] sm:$0xff]
        %v373 = vld [vmem:[%s172 + $0x4e0] sm:$0xff]
        %v374 = vld [vmem:[%s172 + $0x4e8] sm:$0xff]
        %v375 = vld [vmem:[%s172 + $0x4f0] sm:$0xff]
        %v376 = vld [vmem:[%s172 + $0x4f8] sm:$0xff]
        %v377 = vld [vmem:[%s172 + $0x500] sm:$0xff]
        %v378 = vld [vmem:[%s172 + $0x508] sm:$0xff]
        %v379 = vld [vmem:[%s172 + $0x510] sm:$0xff]
        %v380 = vld [vmem:[%s172 + $0x518] sm:$0xff]
        %v381 = vld [vmem:[%s172 + $0x520] sm:$0xff]
        %v382 = vld [vmem:[%s172 + $0x528] sm:$0xff]
        %v383 = vld [vmem:[%s172 + $0x530] sm:$0xff]
        %v384 = vld [vmem:[%s172 + $0x538] sm:$0xff]
        %v385 = vld [vmem:[%s172 + $0x540] sm:$0xff]
        %v386 = vld [vmem:[%s172 + $0x548] sm:$0xff]
        %v387 = vld [vmem:[%s172 + $0x550] sm:$0xff]
        %v388 = vld [vmem:[%s172 + $0x558] sm:$0xff]
        %v389 = vld [vmem:[%s172 + $0x560] sm:$0xff]
        %v390 = vld [vmem:[%s172 + $0x568] sm:$0xff]
        %v391 = vld [vmem:[%s172 + $0x570] sm:$0xff]
        %v392 = vld [vmem:[%s172 + $0x578] sm:$0xff]
        %v393 = vld [vmem:[%s172 + $0x580] sm:$0xff]
        %v394 = vld [vmem:[%s172 + $0x588] sm:$0xff]
        %v395 = vld [vmem:[%s172 + $0x590] sm:$0xff]
        %v396 = vld [vmem:[%s172 + $0x598] sm:$0xff]
        %v397 = vld [vmem:[%s172 + $0x5a0] sm:$0xff]
        %v398 = vld [vmem:[%s172 + $0x5a8] sm:$0xff]
        %v399 = vld [vmem:[%s172 + $0x5b0] sm:$0xff]
        %v400 = vld [vmem:[%s172 + $0x5b8] sm:$0xff]
        %v401 = vld [vmem:[%s172 + $0x5c0] sm:$0xff]
        %v402 = vld [vmem:[%s172 + $0x5c8] sm:$0xff]
        %v403 = vld [vmem:[%s172 + $0x5d0] sm:$0xff]
        %v404 = vld [vmem:[%s172 + $0x5d8] sm:$0xff]
        %v405 = vld [vmem:[%s172 + $0x5e0] sm:$0xff]
        %v406 = vld [vmem:[%s172 + $0x5e8] sm:$0xff]
        %v407 = vld [vmem:[%s172 + $0x5f0] sm:$0xff]
        %v408 = vld [vmem:[%s172 + $0x5f8] sm:$0xff]
        %v409 = vld [vmem:[%s172 + $0x600] sm:$0xff]
        %v410 = vld [vmem:[%s172 + $0x608] sm:$0xff]
        %v411 = vld [vmem:[%s172 + $0x610] sm:$0xff]
        %v412 = vld [vmem:[%s172 + $0x618] sm:$0xff]
        %v413 = vld [vmem:[%s172 + $0x620] sm:$0xff]
        %v414 = vld [vmem:[%s172 + $0x628] sm:$0xff]
        %v415 = vld [vmem:[%s172 + $0x630] sm:$0xff]
        %v416 = vld [vmem:[%s172 + $0x638] sm:$0xff]
        %v417 = vld [vmem:[%s172 + $0x640] sm:$0xff]
        %v418 = vld [vmem:[%s172 + $0x648] sm:$0xff]
        %v419 = vld [vmem:[%s172 + $0x650] sm:$0xff]
        %v420 = vld [vmem:[%s172 + $0x658] sm:$0xff]
        %v421 = vld [vmem:[%s172 + $0x660] sm:$0xff]
        %v422 = vld [vmem:[%s172 + $0x668] sm:$0xff]
        %v423 = vld [vmem:[%s172 + $0x670] sm:$0xff]
        %v424 = vld [vmem:[%s172 + $0x678] sm:$0xff]
        %v425 = vld [vmem:[%s172 + $0x680] sm:$0xff]
        %v426 = vld [vmem:[%s172 + $0x688] sm:$0xff]
        %v427 = vld [vmem:[%s172 + $0x690] sm:$0xff]
        %v428 = vld [vmem:[%s172 + $0x698] sm:$0xff]
        %v429 = vld [vmem:[%s172 + $0x6a0] sm:$0xff]
        %v430 = vld [vmem:[%s172 + $0x6a8] sm:$0xff]
        %v431 = vld [vmem:[%s172 + $0x6b0] sm:$0xff]
        %v432 = vld [vmem:[%s172 + $0x6b8] sm:$0xff]
        %v433 = vld [vmem:[%s172 + $0x6c0] sm:$0xff]
        %v434 = vld [vmem:[%s172 + $0x6c8] sm:$0xff]
        %v435 = vld [vmem:[%s172 + $0x6d0] sm:$0xff]
        %v436 = vld [vmem:[%s172 + $0x6d8] sm:$0xff]
        %v437 = vld [vmem:[%s172 + $0x6e0] sm:$0xff]
        %v438 = vld [vmem:[%s172 + $0x6e8] sm:$0xff]
        %v439 = vld [vmem:[%s172 + $0x6f0] sm:$0xff]
        %v440 = vld [vmem:[%s172 + $0x6f8] sm:$0xff]
        %v441 = vld [vmem:[%s172 + $0x700] sm:$0xff]
        %v442 = vld [vmem:[%s172 + $0x708] sm:$0xff]
        %v443 = vld [vmem:[%s172 + $0x710] sm:$0xff]
        %v444 = vld [vmem:[%s172 + $0x718] sm:$0xff]
        %v445 = vld [vmem:[%s172 + $0x720] sm:$0xff]
        %v446 = vld [vmem:[%s172 + $0x728] sm:$0xff]
        %v447 = vld [vmem:[%s172 + $0x730] sm:$0xff]
        %v448 = vld [vmem:[%s172 + $0x738] sm:$0xff]
        %v449 = vld [vmem:[%s172 + $0x740] sm:$0xff]
        %v450 = vld [vmem:[%s172 + $0x748] sm:$0xff]
        %v451 = vld [vmem:[%s172 + $0x750] sm:$0xff]
        %v452 = vld [vmem:[%s172 + $0x758] sm:$0xff]
        %v453 = vld [vmem:[%s172 + $0x760] sm:$0xff]
        %v454 = vld [vmem:[%s172 + $0x768] sm:$0xff]
        %v455 = vld [vmem:[%s172 + $0x770] sm:$0xff]
        %v456 = vld [vmem:[%s172 + $0x778] sm:$0xff]
        %v457 = vld [vmem:[%s172 + $0x780] sm:$0xff]
        %v458 = vld [vmem:[%s172 + $0x788] sm:$0xff]
        %v459 = vld [vmem:[%s172 + $0x790] sm:$0xff]
        %v460 = vld [vmem:[%s172 + $0x798] sm:$0xff]
        %v461 = vld [vmem:[%s172 + $0x7a0] sm:$0xff]
        %v462 = vld [vmem:[%s172 + $0x7a8] sm:$0xff]
        %v463 = vld [vmem:[%s172 + $0x7b0] sm:$0xff]
        %v464 = vld [vmem:[%s172 + $0x7b8] sm:$0xff]
        %v465 = vld [vmem:[%s172 + $0x7c0] sm:$0xff]
        %v466 = vld [vmem:[%s172 + $0x7c8] sm:$0xff]
        %v467 = vld [vmem:[%s172 + $0x7d0] sm:$0xff]
        %v468 = vld [vmem:[%s172 + $0x7d8] sm:$0xff]
        %v469 = vld [vmem:[%s172 + $0x7e0] sm:$0xff]
        %v470 = vld [vmem:[%s172 + $0x7e8] sm:$0xff]
        %v471 = vld [vmem:[%s172 + $0x7f0] sm:$0xff]
        %v472 = vld [vmem:[%s172 + $0x7f8] sm:$0xff]
        %v473 = vld [vmem:[%s172 + $0x800] sm:$0xff]
        %v474 = vld [vmem:[%s172 + $0x808] sm:$0xff]
        %v475 = vld [vmem:[%s172 + $0x810] sm:$0xff]
        %v476 = vld [vmem:[%s172 + $0x818] sm:$0xff]
        %v477 = vld [vmem:[%s172 + $0x820] sm:$0xff]
        %v478 = vld [vmem:[%s172 + $0x828] sm:$0xff]
        %v479 = vld [vmem:[%s172 + $0x830] sm:$0xff]
        %v480 = vld [vmem:[%s172 + $0x838] sm:$0xff]
        %v481 = vld [vmem:[%s172 + $0x840] sm:$0xff]
        %v482 = vld [vmem:[%s172 + $0x848] sm:$0xff]
        %v483 = vld [vmem:[%s172 + $0x850] sm:$0xff]
        %v484 = vld [vmem:[%s172 + $0x858] sm:$0xff]
        %v485 = vld [vmem:[%s172 + $0x860] sm:$0xff]
        %v486 = vld [vmem:[%s172 + $0x868] sm:$0xff]
        %v487 = vld [vmem:[%s172 + $0x870] sm:$0xff]
        %v488 = vld [vmem:[%s172 + $0x878] sm:$0xff]
        %v489 = vld [vmem:[%s172 + $0x880] sm:$0xff]
        %v490 = vld [vmem:[%s172 + $0x888] sm:$0xff]
        %v491 = vld [vmem:[%s172 + $0x890] sm:$0xff]
        %v492 = vld [vmem:[%s172 + $0x898] sm:$0xff]
        %v493 = vld [vmem:[%s172 + $0x8a0] sm:$0xff]
        %v494 = vld [vmem:[%s172 + $0x8a8] sm:$0xff]
        %v495 = vld [vmem:[%s172 + $0x8b0] sm:$0xff]
        %v496 = vld [vmem:[%s172 + $0x8b8] sm:$0xff]
        %v497 = vld [vmem:[%s172 + $0x8c0] sm:$0xff]
        %v498 = vld [vmem:[%s172 + $0x8c8] sm:$0xff]
        %v499 = vld [vmem:[%s172 + $0x8d0] sm:$0xff]
        %v500 = vld [vmem:[%s172 + $0x8d8] sm:$0xff]
        %v501 = vld [vmem:[%s172 + $0x8e0] sm:$0xff]
        %v502 = vld [vmem:[%s172 + $0x8e8] sm:$0xff]
        %v503 = vld [vmem:[%s172 + $0x8f0] sm:$0xff]
        %v504 = vld [vmem:[%s172 + $0x8f8] sm:$0xff]
        %v505 = vld [vmem:[%s172 + $0x900] sm:$0xff]
        %v506 = vld [vmem:[%s172 + $0x908] sm:$0xff]
        %v507 = vld [vmem:[%s172 + $0x910] sm:$0xff]
        %v508 = vld [vmem:[%s172 + $0x918] sm:$0xff]
        %v509 = vld [vmem:[%s172 + $0x920] sm:$0xff]
        %v510 = vld [vmem:[%s172 + $0x928] sm:$0xff]
        %v511 = vld [vmem:[%s172 + $0x930] sm:$0xff]
        %v512 = vld [vmem:[%s172 + $0x938] sm:$0xff]
        %v513 = vld [vmem:[%s172 + $0x940] sm:$0xff]
        %v514 = vld [vmem:[%s172 + $0x948] sm:$0xff]
        %v515 = vld [vmem:[%s172 + $0x950] sm:$0xff]
        %v516 = vld [vmem:[%s172 + $0x958] sm:$0xff]
        %v517 = vld [vmem:[%s172 + $0x960] sm:$0xff]
        %v518 = vld [vmem:[%s172 + $0x968] sm:$0xff]
        %v519 = vld [vmem:[%s172 + $0x970] sm:$0xff]
        %v520 = vld [vmem:[%s172 + $0x978] sm:$0xff]
        %v521 = vld [vmem:[%s172 + $0x980] sm:$0xff]
        %v522 = vld [vmem:[%s172 + $0x988] sm:$0xff]
        %v523 = vld [vmem:[%s172 + $0x990] sm:$0xff]
        %v524 = vld [vmem:[%s172 + $0x998] sm:$0xff]
        %v525 = vld [vmem:[%s172 + $0x9a0] sm:$0xff]
        %v526 = vld [vmem:[%s172 + $0x9a8] sm:$0xff]
        %v527 = vld [vmem:[%s172 + $0x9b0] sm:$0xff]
        %v528 = vld [vmem:[%s172 + $0x9b8] sm:$0xff]
        %v529 = vld [vmem:[%s172 + $0x9c0] sm:$0xff]
        %v530 = vld [vmem:[%s172 + $0x9c8] sm:$0xff]
        %v531 = vld [vmem:[%s172 + $0x9d0] sm:$0xff]
        %v532 = vld [vmem:[%s172 + $0x9d8] sm:$0xff]
        %v533 = vld [vmem:[%s172 + $0x9e0] sm:$0xff]
        %v534 = vld [vmem:[%s172 + $0x9e8] sm:$0xff]
        %v535 = vld [vmem:[%s172 + $0x9f0] sm:$0xff]
        %v536 = vld [vmem:[%s172 + $0x9f8] sm:$0xff]
        %v537 = vld [vmem:[%s172 + $0xa00] sm:$0xff]
        %v538 = vld [vmem:[%s172 + $0xa08] sm:$0xff]
        %v539 = vld [vmem:[%s172 + $0xa10] sm:$0xff]
        %v540 = vld [vmem:[%s172 + $0xa18] sm:$0xff]
        %v541 = vld [vmem:[%s172 + $0xa20] sm:$0xff]
        %v542 = vld [vmem:[%s172 + $0xa28] sm:$0xff]
        %v543 = vld [vmem:[%s172 + $0xa30] sm:$0xff]
        %v544 = vld [vmem:[%s172 + $0xa38] sm:$0xff]
        %v545 = vld [vmem:[%s172 + $0xa40] sm:$0xff]
        %v546 = vld [vmem:[%s172 + $0xa48] sm:$0xff]
        %v547 = vld [vmem:[%s172 + $0xa50] sm:$0xff]
        %v548 = vld [vmem:[%s172 + $0xa58] sm:$0xff]
        %v549 = vld [vmem:[%s172 + $0xa60] sm:$0xff]
        %v550 = vld [vmem:[%s172 + $0xa68] sm:$0xff]
        %v551 = vld [vmem:[%s172 + $0xa70] sm:$0xff]
        %v552 = vld [vmem:[%s172 + $0xa78] sm:$0xff]
        %v553 = vld [vmem:[%s172 + $0xa80] sm:$0xff]
        %v554 = vld [vmem:[%s172 + $0xa88] sm:$0xff]
        %v555 = vld [vmem:[%s172 + $0xa90] sm:$0xff]
        %v556 = vld [vmem:[%s172 + $0xa98] sm:$0xff]
        %v557 = vld [vmem:[%s172 + $0xaa0] sm:$0xff]
        %v558 = vld [vmem:[%s172 + $0xaa8] sm:$0xff]
        %v559 = vld [vmem:[%s172 + $0xab0] sm:$0xff]
        %v560 = vld [vmem:[%s172 + $0xab8] sm:$0xff]
        %v561 = vld [vmem:[%s172 + $0xac0] sm:$0xff]
        %v562 = vld [vmem:[%s172 + $0xac8] sm:$0xff]
        %v563 = vld [vmem:[%s172 + $0xad0] sm:$0xff]
        %v564 = vld [vmem:[%s172 + $0xad8] sm:$0xff]
        %v565 = vld [vmem:[%s172 + $0xae0] sm:$0xff]
        %v566 = vld [vmem:[%s172 + $0xae8] sm:$0xff]
        %v567 = vld [vmem:[%s172 + $0xaf0] sm:$0xff]
        %v568 = vld [vmem:[%s172 + $0xaf8] sm:$0xff]
        %v569 = vld [vmem:[%s172 + $0xb00] sm:$0xff]
        %v570 = vld [vmem:[%s172 + $0xb08] sm:$0xff]
        %v571 = vld [vmem:[%s172 + $0xb10] sm:$0xff]
        %v572 = vld [vmem:[%s172 + $0xb18] sm:$0xff]
        %v573 = vld [vmem:[%s172 + $0xb20] sm:$0xff]
        %v574 = vld [vmem:[%s172 + $0xb28] sm:$0xff]
        %v575 = vld [vmem:[%s172 + $0xb30] sm:$0xff]
        %v576 = vld [vmem:[%s172 + $0xb38] sm:$0xff]
        %v577 = vld [vmem:[%s172 + $0xb40] sm:$0xff]
        %v578 = vld [vmem:[%s172 + $0xb48] sm:$0xff]
        %v579 = vld [vmem:[%s172 + $0xb50] sm:$0xff]
        %v580 = vld [vmem:[%s172 + $0xb58] sm:$0xff]
        %v581 = vld [vmem:[%s172 + $0xb60] sm:$0xff]
        %v582 = vld [vmem:[%s172 + $0xb68] sm:$0xff]
        %v583 = vld [vmem:[%s172 + $0xb70] sm:$0xff]
        %v584 = vld [vmem:[%s172 + $0xb78] sm:$0xff]
        %v585 = vld [vmem:[%s172 + $0xb80] sm:$0xff]
        %v586 = vld [vmem:[%s172 + $0xb88] sm:$0xff]
        %v587 = vld [vmem:[%s172 + $0xb90] sm:$0xff]
        %v588 = vld [vmem:[%s172 + $0xb98] sm:$0xff]
        %v589 = vld [vmem:[%s172 + $0xba0] sm:$0xff]
        %v590 = vld [vmem:[%s172 + $0xba8] sm:$0xff]
        %v591 = vld [vmem:[%s172 + $0xbb0] sm:$0xff]
        %v592 = vld [vmem:[%s172 + $0xbb8] sm:$0xff]
        %v593 = vld [vmem:[%s172 + $0xbc0] sm:$0xff]
        %v594 = vld [vmem:[%s172 + $0xbc8] sm:$0xff]
        %v595 = vld [vmem:[%s172 + $0xbd0] sm:$0xff]
        %v596 = vld [vmem:[%s172 + $0xbd8] sm:$0xff]
        %v597 = vld [vmem:[%s172 + $0xbe0] sm:$0xff]
        %v598 = vld [vmem:[%s172 + $0xbe8] sm:$0xff]
        %v599 = vld [vmem:[%s172 + $0xbf0] sm:$0xff]
        %v600 = vld [vmem:[%s172 + $0xbf8] sm:$0xff]
        %v601 = vld [vmem:[%s172 + $0xc00] sm:$0xff]
        %v602 = vld [vmem:[%s172 + $0xc08] sm:$0xff]
        %v603 = vld [vmem:[%s172 + $0xc10] sm:$0xff]
        %v604 = vld [vmem:[%s172 + $0xc18] sm:$0xff]
        %v605 = vld [vmem:[%s172 + $0xc20] sm:$0xff]
        %v606 = vld [vmem:[%s172 + $0xc28] sm:$0xff]
        %v607 = vld [vmem:[%s172 + $0xc30] sm:$0xff]
        %v608 = vld [vmem:[%s172 + $0xc38] sm:$0xff]
        %v609 = vld [vmem:[%s172 + $0xc40] sm:$0xff]
        %v610 = vld [vmem:[%s172 + $0xc48] sm:$0xff]
        %v611 = vld [vmem:[%s172 + $0xc50] sm:$0xff]
        %v612 = vld [vmem:[%s172 + $0xc58] sm:$0xff]
        %v613 = vld [vmem:[%s172 + $0xc60] sm:$0xff]
        %v614 = vld [vmem:[%s172 + $0xc68] sm:$0xff]
        %v615 = vld [vmem:[%s172 + $0xc70] sm:$0xff]
        %v616 = vld [vmem:[%s172 + $0xc78] sm:$0xff]
        %v617 = vld [vmem:[%s172 + $0xc80] sm:$0xff]
        %v618 = vld [vmem:[%s172 + $0xc88] sm:$0xff]
        %v619 = vld [vmem:[%s172 + $0xc90] sm:$0xff]
        %v620 = vld [vmem:[%s172 + $0xc98] sm:$0xff]
        %v621 = vld [vmem:[%s172 + $0xca0] sm:$0xff]
        %v622 = vld [vmem:[%s172 + $0xca8] sm:$0xff]
        %v623 = vld [vmem:[%s172 + $0xcb0] sm:$0xff]
        %v624 = vld [vmem:[%s172 + $0xcb8] sm:$0xff]
        %v625 = vld [vmem:[%s172 + $0xcc0] sm:$0xff]
        %v626 = vld [vmem:[%s172 + $0xcc8] sm:$0xff]
        %v627 = vld [vmem:[%s172 + $0xcd0] sm:$0xff]
        %v628 = vld [vmem:[%s172 + $0xcd8] sm:$0xff]
        %v629 = vld [vmem:[%s172 + $0xce0] sm:$0xff]
        %v630 = vld [vmem:[%s172 + $0xce8] sm:$0xff]
        %v631 = vld [vmem:[%s172 + $0xcf0] sm:$0xff]
        %v632 = vld [vmem:[%s172 + $0xcf8] sm:$0xff]
        %v633 = vld [vmem:[%s172 + $0xd00] sm:$0xff]
        %v634 = vld [vmem:[%s172 + $0xd08] sm:$0xff]
        %v635 = vld [vmem:[%s172 + $0xd10] sm:$0xff]
        %v636 = vld [vmem:[%s172 + $0xd18] sm:$0xff]
        %v637 = vld [vmem:[%s172 + $0xd20] sm:$0xff]
        %v638 = vld [vmem:[%s172 + $0xd28] sm:$0xff]
        %v639 = vld [vmem:[%s172 + $0xd30] sm:$0xff]
        %v640 = vld [vmem:[%s172 + $0xd38] sm:$0xff]
        %v641 = vld [vmem:[%s172 + $0xd40] sm:$0xff]
        %v642 = vld [vmem:[%s172 + $0xd48] sm:$0xff]
        %v643 = vld [vmem:[%s172 + $0xd50] sm:$0xff]
        %v644 = vld [vmem:[%s172 + $0xd58] sm:$0xff]
        %v645 = vld [vmem:[%s172 + $0xd60] sm:$0xff]
        %v646 = vld [vmem:[%s172 + $0xd68] sm:$0xff]
        %v647 = vld [vmem:[%s172 + $0xd70] sm:$0xff]
        %v648 = vld [vmem:[%s172 + $0xd78] sm:$0xff]
        %v649 = vld [vmem:[%s172 + $0xd80] sm:$0xff]
        %v650 = vld [vmem:[%s172 + $0xd88] sm:$0xff]
        %v651 = vld [vmem:[%s172 + $0xd90] sm:$0xff]
        %v652 = vld [vmem:[%s172 + $0xd98] sm:$0xff]
        %v653 = vld [vmem:[%s172 + $0xda0] sm:$0xff]
        %v654 = vld [vmem:[%s172 + $0xda8] sm:$0xff]
        %v655 = vld [vmem:[%s172 + $0xdb0] sm:$0xff]
        %v656 = vld [vmem:[%s172 + $0xdb8] sm:$0xff]
        %v657 = vld [vmem:[%s172 + $0xdc0] sm:$0xff]
        %v658 = vld [vmem:[%s172 + $0xdc8] sm:$0xff]
        %v659 = vld [vmem:[%s172 + $0xdd0] sm:$0xff]
        %v660 = vld [vmem:[%s172 + $0xdd8] sm:$0xff]
        %v661 = vld [vmem:[%s172 + $0xde0] sm:$0xff]
        %v662 = vld [vmem:[%s172 + $0xde8] sm:$0xff]
        %v663 = vld [vmem:[%s172 + $0xdf0] sm:$0xff]
        %v664 = vld [vmem:[%s172 + $0xdf8] sm:$0xff]
        %v665 = vld [vmem:[%s172 + $0xe00] sm:$0xff]
        %v666 = vld [vmem:[%s172 + $0xe08] sm:$0xff]
        %v667 = vld [vmem:[%s172 + $0xe10] sm:$0xff]
        %v668 = vld [vmem:[%s172 + $0xe18] sm:$0xff]
        %v669 = vld [vmem:[%s172 + $0xe20] sm:$0xff]
        %v670 = vld [vmem:[%s172 + $0xe28] sm:$0xff]
        %v671 = vld [vmem:[%s172 + $0xe30] sm:$0xff]
        %v672 = vld [vmem:[%s172 + $0xe38] sm:$0xff]
        %v673 = vld [vmem:[%s172 + $0xe40] sm:$0xff]
        %v674 = vld [vmem:[%s172 + $0xe48] sm:$0xff]
        %v675 = vld [vmem:[%s172 + $0xe50] sm:$0xff]
        %v676 = vld [vmem:[%s172 + $0xe58] sm:$0xff]
        %v677 = vld [vmem:[%s172 + $0xe60] sm:$0xff]
        %v678 = vld [vmem:[%s172 + $0xe68] sm:$0xff]
        %v679 = vld [vmem:[%s172 + $0xe70] sm:$0xff]
        %v680 = vld [vmem:[%s172 + $0xe78] sm:$0xff]
        %v681 = vld [vmem:[%s172 + $0xe80] sm:$0xff]
        %v682 = vld [vmem:[%s172 + $0xe88] sm:$0xff]
        %v683 = vld [vmem:[%s172 + $0xe90] sm:$0xff]
        %v684 = vld [vmem:[%s172 + $0xe98] sm:$0xff]
        %v685 = vld [vmem:[%s172 + $0xea0] sm:$0xff]
        %v686 = vld [vmem:[%s172 + $0xea8] sm:$0xff]
        %v687 = vld [vmem:[%s172 + $0xeb0] sm:$0xff]
        %v688 = vld [vmem:[%s172 + $0xeb8] sm:$0xff]
        %v689 = vld [vmem:[%s172 + $0xec0] sm:$0xff]
        %v690 = vld [vmem:[%s172 + $0xec8] sm:$0xff]
        %v691 = vld [vmem:[%s172 + $0xed0] sm:$0xff]
        %v692 = vld [vmem:[%s172 + $0xed8] sm:$0xff]
        %v693 = vld [vmem:[%s172 + $0xee0] sm:$0xff]
        %v694 = vld [vmem:[%s172 + $0xee8] sm:$0xff]
        %v695 = vld [vmem:[%s172 + $0xef0] sm:$0xff]
        %v696 = vld [vmem:[%s172 + $0xef8] sm:$0xff]
        %v697 = vld [vmem:[%s172 + $0xf00] sm:$0xff]
        %v698 = vld [vmem:[%s172 + $0xf08] sm:$0xff]
        %v699 = vld [vmem:[%s172 + $0xf10] sm:$0xff]
        %v700 = vld [vmem:[%s172 + $0xf18] sm:$0xff]
        %v701 = vld [vmem:[%s172 + $0xf20] sm:$0xff]
        %v702 = vld [vmem:[%s172 + $0xf28] sm:$0xff]
        %v703 = vld [vmem:[%s172 + $0xf30] sm:$0xff]
        %v704 = vld [vmem:[%s172 + $0xf38] sm:$0xff]
        %v705 = vld [vmem:[%s172 + $0xf40] sm:$0xff]
        %v706 = vld [vmem:[%s172 + $0xf48] sm:$0xff]
        %v707 = vld [vmem:[%s172 + $0xf50] sm:$0xff]
        %v708 = vld [vmem:[%s172 + $0xf58] sm:$0xff]
        %v709 = vld [vmem:[%s172 + $0xf60] sm:$0xff]
        %v710 = vld [vmem:[%s172 + $0xf68] sm:$0xff]
        %v711 = vld [vmem:[%s172 + $0xf70] sm:$0xff]
        %v712 = vld [vmem:[%s172 + $0xf78] sm:$0xff]
        %v713 = vld [vmem:[%s172 + $0xf80] sm:$0xff]
        %v714 = vld [vmem:[%s172 + $0xf88] sm:$0xff]
        %v715 = vld [vmem:[%s172 + $0xf90] sm:$0xff]
        %v716 = vld [vmem:[%s172 + $0xf98] sm:$0xff]
        %v717 = vld [vmem:[%s172 + $0xfa0] sm:$0xff]
        %v718 = vld [vmem:[%s172 + $0xfa8] sm:$0xff]
        %v719 = vld [vmem:[%s172 + $0xfb0] sm:$0xff]
        %v720 = vld [vmem:[%s172 + $0xfb8] sm:$0xff]
        %v721 = vld [vmem:[%s172 + $0xfc0] sm:$0xff]
        %v722 = vld [vmem:[%s172 + $0xfc8] sm:$0xff]
        %v723 = vld [vmem:[%s172 + $0xfd0] sm:$0xff]
        %v724 = vld [vmem:[%s172 + $0xfd8] sm:$0xff]
        %v725 = vld [vmem:[%s172 + $0xfe0] sm:$0xff]
        %v726 = vld [vmem:[%s172 + $0xfe8] sm:$0xff]
        %v727 = vld [vmem:[%s172 + $0xff0] sm:$0xff]
        %v728 = vld [vmem:[%s172 + $0xff8] sm:$0xff]
        %v729 = vld [vmem:[%s181] sm:$0xff]
        %v730 = vld [vmem:[%s181 + $0x8] sm:$0xff]
        %v731 = vld [vmem:[%s181 + $0x10] sm:$0xff]
        %v732 = vld [vmem:[%s181 + $0x18] sm:$0xff]
        %v733 = vld [vmem:[%s181 + $0x20] sm:$0xff]
        %v734 = vld [vmem:[%s181 + $0x28] sm:$0xff]
        %v735 = vld [vmem:[%s181 + $0x30] sm:$0xff]
        %v736 = vld [vmem:[%s181 + $0x38] sm:$0xff]
        %v737 = vld [vmem:[%s181 + $0x40] sm:$0xff]
        %v738 = vld [vmem:[%s181 + $0x48] sm:$0xff]
        %v739 = vld [vmem:[%s181 + $0x50] sm:$0xff]
        %v740 = vld [vmem:[%s181 + $0x58] sm:$0xff]
        %v741 = vld [vmem:[%s181 + $0x60] sm:$0xff]
        %v742 = vld [vmem:[%s181 + $0x68] sm:$0xff]
        %v743 = vld [vmem:[%s181 + $0x70] sm:$0xff]
        %v744 = vld [vmem:[%s181 + $0x78] sm:$0xff]
        %v745 = vld [vmem:[%s181 + $0x80] sm:$0xff]
        %v746 = vld [vmem:[%s181 + $0x88] sm:$0xff]
        %v747 = vld [vmem:[%s181 + $0x90] sm:$0xff]
        %v748 = vld [vmem:[%s181 + $0x98] sm:$0xff]
        %v749 = vld [vmem:[%s181 + $0xa0] sm:$0xff]
        %v750 = vld [vmem:[%s181 + $0xa8] sm:$0xff]
        %v751 = vld [vmem:[%s181 + $0xb0] sm:$0xff]
        %v752 = vld [vmem:[%s181 + $0xb8] sm:$0xff]
        %v753 = vld [vmem:[%s181 + $0xc0] sm:$0xff]
        %v754 = vld [vmem:[%s181 + $0xc8] sm:$0xff]
        %v755 = vld [vmem:[%s181 + $0xd0] sm:$0xff]
        %v756 = vld [vmem:[%s181 + $0xd8] sm:$0xff]
        %v757 = vld [vmem:[%s181 + $0xe0] sm:$0xff]
        %v758 = vld [vmem:[%s181 + $0xe8] sm:$0xff]
        %v759 = vld [vmem:[%s181 + $0xf0] sm:$0xff]
        %v760 = vld [vmem:[%s181 + $0xf8] sm:$0xff]
        %v761 = vld [vmem:[%s181 + $0x100] sm:$0xff]
        %v762 = vld [vmem:[%s181 + $0x108] sm:$0xff]
        %v763 = vld [vmem:[%s181 + $0x110] sm:$0xff]
        %v764 = vld [vmem:[%s181 + $0x118] sm:$0xff]
        %v765 = vld [vmem:[%s181 + $0x120] sm:$0xff]
        %v766 = vld [vmem:[%s181 + $0x128] sm:$0xff]
        %v767 = vld [vmem:[%s181 + $0x130] sm:$0xff]
        %v768 = vld [vmem:[%s181 + $0x138] sm:$0xff]
        %v769 = vld [vmem:[%s181 + $0x140] sm:$0xff]
        %v770 = vld [vmem:[%s181 + $0x148] sm:$0xff]
        %v771 = vld [vmem:[%s181 + $0x150] sm:$0xff]
        %v772 = vld [vmem:[%s181 + $0x158] sm:$0xff]
        %v773 = vld [vmem:[%s181 + $0x160] sm:$0xff]
        %v774 = vld [vmem:[%s181 + $0x168] sm:$0xff]
        %v775 = vld [vmem:[%s181 + $0x170] sm:$0xff]
        %v776 = vld [vmem:[%s181 + $0x178] sm:$0xff]
        %v777 = vld [vmem:[%s181 + $0x180] sm:$0xff]
        %v778 = vld [vmem:[%s181 + $0x188] sm:$0xff]
        %v779 = vld [vmem:[%s181 + $0x190] sm:$0xff]
        %v780 = vld [vmem:[%s181 + $0x198] sm:$0xff]
        %v781 = vld [vmem:[%s181 + $0x1a0] sm:$0xff]
        %v782 = vld [vmem:[%s181 + $0x1a8] sm:$0xff]
        %v783 = vld [vmem:[%s181 + $0x1b0] sm:$0xff]
        %v784 = vld [vmem:[%s181 + $0x1b8] sm:$0xff]
        %v785 = vld [vmem:[%s181 + $0x1c0] sm:$0xff]
        %v786 = vld [vmem:[%s181 + $0x1c8] sm:$0xff]
        %v787 = vld [vmem:[%s181 + $0x1d0] sm:$0xff]
        %v788 = vld [vmem:[%s181 + $0x1d8] sm:$0xff]
        %v789 = vld [vmem:[%s181 + $0x1e0] sm:$0xff]
        %v790 = vld [vmem:[%s181 + $0x1e8] sm:$0xff]
        %v791 = vld [vmem:[%s181 + $0x1f0] sm:$0xff]
        %v792 = vld [vmem:[%s181 + $0x1f8] sm:$0xff]
        %v793 = vld [vmem:[%s181 + $0x200] sm:$0xff]
        %v794 = vld [vmem:[%s181 + $0x208] sm:$0xff]
        %v795 = vld [vmem:[%s181 + $0x210] sm:$0xff]
        %v796 = vld [vmem:[%s181 + $0x218] sm:$0xff]
        %v797 = vld [vmem:[%s181 + $0x220] sm:$0xff]
        %v798 = vld [vmem:[%s181 + $0x228] sm:$0xff]
        %v799 = vld [vmem:[%s181 + $0x230] sm:$0xff]
        %v800 = vld [vmem:[%s181 + $0x238] sm:$0xff]
        %v801 = vld [vmem:[%s181 + $0x240] sm:$0xff]
        %v802 = vld [vmem:[%s181 + $0x248] sm:$0xff]
        %v803 = vld [vmem:[%s181 + $0x250] sm:$0xff]
        %v804 = vld [vmem:[%s181 + $0x258] sm:$0xff]
        %v805 = vld [vmem:[%s181 + $0x260] sm:$0xff]
        %v806 = vld [vmem:[%s181 + $0x268] sm:$0xff]
        %v807 = vld [vmem:[%s181 + $0x270] sm:$0xff]
        %v808 = vld [vmem:[%s181 + $0x278] sm:$0xff]
        %v809 = vld [vmem:[%s181 + $0x280] sm:$0xff]
        %v810 = vld [vmem:[%s181 + $0x288] sm:$0xff]
        %v811 = vld [vmem:[%s181 + $0x290] sm:$0xff]
        %v812 = vld [vmem:[%s181 + $0x298] sm:$0xff]
        %v813 = vld [vmem:[%s181 + $0x2a0] sm:$0xff]
        %v814 = vld [vmem:[%s181 + $0x2a8] sm:$0xff]
        %v815 = vld [vmem:[%s181 + $0x2b0] sm:$0xff]
        %v816 = vld [vmem:[%s181 + $0x2b8] sm:$0xff]
        %v817 = vld [vmem:[%s181 + $0x2c0] sm:$0xff]
        %v818 = vld [vmem:[%s181 + $0x2c8] sm:$0xff]
        %v819 = vld [vmem:[%s181 + $0x2d0] sm:$0xff]
        %v820 = vld [vmem:[%s181 + $0x2d8] sm:$0xff]
        %v821 = vld [vmem:[%s181 + $0x2e0] sm:$0xff]
        %v822 = vld [vmem:[%s181 + $0x2e8] sm:$0xff]
        %v823 = vld [vmem:[%s181 + $0x2f0] sm:$0xff]
        %v824 = vld [vmem:[%s181 + $0x2f8] sm:$0xff]
        %v825 = vld [vmem:[%s181 + $0x300] sm:$0xff]
        %v826 = vld [vmem:[%s181 + $0x308] sm:$0xff]
        %v827 = vld [vmem:[%s181 + $0x310] sm:$0xff]
        %v828 = vld [vmem:[%s181 + $0x318] sm:$0xff]
        %v829 = vld [vmem:[%s181 + $0x320] sm:$0xff]
        %v830 = vld [vmem:[%s181 + $0x328] sm:$0xff]
        %v831 = vld [vmem:[%s181 + $0x330] sm:$0xff]
        %v832 = vld [vmem:[%s181 + $0x338] sm:$0xff]
        %v833 = vld [vmem:[%s181 + $0x340] sm:$0xff]
        %v834 = vld [vmem:[%s181 + $0x348] sm:$0xff]
        %v835 = vld [vmem:[%s181 + $0x350] sm:$0xff]
        %v836 = vld [vmem:[%s181 + $0x358] sm:$0xff]
        %v837 = vld [vmem:[%s181 + $0x360] sm:$0xff]
        %v838 = vld [vmem:[%s181 + $0x368] sm:$0xff]
        %v839 = vld [vmem:[%s181 + $0x370] sm:$0xff]
        %v840 = vld [vmem:[%s181 + $0x378] sm:$0xff]
        %v841 = vld [vmem:[%s181 + $0x380] sm:$0xff]
        %v842 = vld [vmem:[%s181 + $0x388] sm:$0xff]
        %v843 = vld [vmem:[%s181 + $0x390] sm:$0xff]
        %v844 = vld [vmem:[%s181 + $0x398] sm:$0xff]
        %v845 = vld [vmem:[%s181 + $0x3a0] sm:$0xff]
        %v846 = vld [vmem:[%s181 + $0x3a8] sm:$0xff]
        %v847 = vld [vmem:[%s181 + $0x3b0] sm:$0xff]
        %v848 = vld [vmem:[%s181 + $0x3b8] sm:$0xff]
        %v849 = vld [vmem:[%s181 + $0x3c0] sm:$0xff]
        %v850 = vld [vmem:[%s181 + $0x3c8] sm:$0xff]
        %v851 = vld [vmem:[%s181 + $0x3d0] sm:$0xff]
        %v852 = vld [vmem:[%s181 + $0x3d8] sm:$0xff]
        %v853 = vld [vmem:[%s181 + $0x3e0] sm:$0xff]
        %v854 = vld [vmem:[%s181 + $0x3e8] sm:$0xff]
        %v855 = vld [vmem:[%s181 + $0x3f0] sm:$0xff]
        %v856 = vld [vmem:[%s181 + $0x3f8] sm:$0xff]
        %v857 = vld [vmem:[%s181 + $0x400] sm:$0xff]
        %v858 = vld [vmem:[%s181 + $0x408] sm:$0xff]
        %v859 = vld [vmem:[%s181 + $0x410] sm:$0xff]
        %v860 = vld [vmem:[%s181 + $0x418] sm:$0xff]
        %v861 = vld [vmem:[%s181 + $0x420] sm:$0xff]
        %v862 = vld [vmem:[%s181 + $0x428] sm:$0xff]
        %v863 = vld [vmem:[%s181 + $0x430] sm:$0xff]
        %v864 = vld [vmem:[%s181 + $0x438] sm:$0xff]
        %v865 = vld [vmem:[%s181 + $0x440] sm:$0xff]
        %v866 = vld [vmem:[%s181 + $0x448] sm:$0xff]
        %v867 = vld [vmem:[%s181 + $0x450] sm:$0xff]
        %v868 = vld [vmem:[%s181 + $0x458] sm:$0xff]
        %v869 = vld [vmem:[%s181 + $0x460] sm:$0xff]
        %v870 = vld [vmem:[%s181 + $0x468] sm:$0xff]
        %v871 = vld [vmem:[%s181 + $0x470] sm:$0xff]
        %v872 = vld [vmem:[%s181 + $0x478] sm:$0xff]
        %v873 = vld [vmem:[%s181 + $0x480] sm:$0xff]
        %v874 = vld [vmem:[%s181 + $0x488] sm:$0xff]
        %v875 = vld [vmem:[%s181 + $0x490] sm:$0xff]
        %v876 = vld [vmem:[%s181 + $0x498] sm:$0xff]
        %v877 = vld [vmem:[%s181 + $0x4a0] sm:$0xff]
        %v878 = vld [vmem:[%s181 + $0x4a8] sm:$0xff]
        %v879 = vld [vmem:[%s181 + $0x4b0] sm:$0xff]
        %v880 = vld [vmem:[%s181 + $0x4b8] sm:$0xff]
        %v881 = vld [vmem:[%s181 + $0x4c0] sm:$0xff]
        %v882 = vld [vmem:[%s181 + $0x4c8] sm:$0xff]
        %v883 = vld [vmem:[%s181 + $0x4d0] sm:$0xff]
        %v884 = vld [vmem:[%s181 + $0x4d8] sm:$0xff]
        %v885 = vld [vmem:[%s181 + $0x4e0] sm:$0xff]
        %v886 = vld [vmem:[%s181 + $0x4e8] sm:$0xff]
        %v887 = vld [vmem:[%s181 + $0x4f0] sm:$0xff]
        %v888 = vld [vmem:[%s181 + $0x4f8] sm:$0xff]
        %v889 = vld [vmem:[%s181 + $0x500] sm:$0xff]
        %v890 = vld [vmem:[%s181 + $0x508] sm:$0xff]
        %v891 = vld [vmem:[%s181 + $0x510] sm:$0xff]
        %v892 = vld [vmem:[%s181 + $0x518] sm:$0xff]
        %v893 = vld [vmem:[%s181 + $0x520] sm:$0xff]
        %v894 = vld [vmem:[%s181 + $0x528] sm:$0xff]
        %v895 = vld [vmem:[%s181 + $0x530] sm:$0xff]
        %v896 = vld [vmem:[%s181 + $0x538] sm:$0xff]
        %v897 = vld [vmem:[%s181 + $0x540] sm:$0xff]
        %v898 = vld [vmem:[%s181 + $0x548] sm:$0xff]
        %v899 = vld [vmem:[%s181 + $0x550] sm:$0xff]
        %v900 = vld [vmem:[%s181 + $0x558] sm:$0xff]
        %v901 = vld [vmem:[%s181 + $0x560] sm:$0xff]
        %v902 = vld [vmem:[%s181 + $0x568] sm:$0xff]
        %v903 = vld [vmem:[%s181 + $0x570] sm:$0xff]
        %v904 = vld [vmem:[%s181 + $0x578] sm:$0xff]
        %v905 = vld [vmem:[%s181 + $0x580] sm:$0xff]
        %v906 = vld [vmem:[%s181 + $0x588] sm:$0xff]
        %v907 = vld [vmem:[%s181 + $0x590] sm:$0xff]
        %v908 = vld [vmem:[%s181 + $0x598] sm:$0xff]
        %v909 = vld [vmem:[%s181 + $0x5a0] sm:$0xff]
        %v910 = vld [vmem:[%s181 + $0x5a8] sm:$0xff]
        %v911 = vld [vmem:[%s181 + $0x5b0] sm:$0xff]
        %v912 = vld [vmem:[%s181 + $0x5b8] sm:$0xff]
        %v913 = vld [vmem:[%s181 + $0x5c0] sm:$0xff]
        %v914 = vld [vmem:[%s181 + $0x5c8] sm:$0xff]
        %v915 = vld [vmem:[%s181 + $0x5d0] sm:$0xff]
        %v916 = vld [vmem:[%s181 + $0x5d8] sm:$0xff]
        %v917 = vld [vmem:[%s181 + $0x5e0] sm:$0xff]
        %v918 = vld [vmem:[%s181 + $0x5e8] sm:$0xff]
        %v919 = vld [vmem:[%s181 + $0x5f0] sm:$0xff]
        %v920 = vld [vmem:[%s181 + $0x5f8] sm:$0xff]
        %v921 = vld [vmem:[%s181 + $0x600] sm:$0xff]
        %v922 = vld [vmem:[%s181 + $0x608] sm:$0xff]
        %v923 = vld [vmem:[%s181 + $0x610] sm:$0xff]
        %v924 = vld [vmem:[%s181 + $0x618] sm:$0xff]
        %v925 = vld [vmem:[%s181 + $0x620] sm:$0xff]
        %v926 = vld [vmem:[%s181 + $0x628] sm:$0xff]
        %v927 = vld [vmem:[%s181 + $0x630] sm:$0xff]
        %v928 = vld [vmem:[%s181 + $0x638] sm:$0xff]
        %v929 = vld [vmem:[%s181 + $0x640] sm:$0xff]
        %v930 = vld [vmem:[%s181 + $0x648] sm:$0xff]
        %v931 = vld [vmem:[%s181 + $0x650] sm:$0xff]
        %v932 = vld [vmem:[%s181 + $0x658] sm:$0xff]
        %v933 = vld [vmem:[%s181 + $0x660] sm:$0xff]
        %v934 = vld [vmem:[%s181 + $0x668] sm:$0xff]
        %v935 = vld [vmem:[%s181 + $0x670] sm:$0xff]
        %v936 = vld [vmem:[%s181 + $0x678] sm:$0xff]
        %v937 = vld [vmem:[%s181 + $0x680] sm:$0xff]
        %v938 = vld [vmem:[%s181 + $0x688] sm:$0xff]
        %v939 = vld [vmem:[%s181 + $0x690] sm:$0xff]
        %v940 = vld [vmem:[%s181 + $0x698] sm:$0xff]
        %v941 = vld [vmem:[%s181 + $0x6a0] sm:$0xff]
        %v942 = vld [vmem:[%s181 + $0x6a8] sm:$0xff]
        %v943 = vld [vmem:[%s181 + $0x6b0] sm:$0xff]
        %v944 = vld [vmem:[%s181 + $0x6b8] sm:$0xff]
        %v945 = vld [vmem:[%s181 + $0x6c0] sm:$0xff]
        %v946 = vld [vmem:[%s181 + $0x6c8] sm:$0xff]
        %v947 = vld [vmem:[%s181 + $0x6d0] sm:$0xff]
        %v948 = vld [vmem:[%s181 + $0x6d8] sm:$0xff]
        %v949 = vld [vmem:[%s181 + $0x6e0] sm:$0xff]
        %v950 = vld [vmem:[%s181 + $0x6e8] sm:$0xff]
        %v951 = vld [vmem:[%s181 + $0x6f0] sm:$0xff]
        %v952 = vld [vmem:[%s181 + $0x6f8] sm:$0xff]
        %v953 = vld [vmem:[%s181 + $0x700] sm:$0xff]
        %v954 = vld [vmem:[%s181 + $0x708] sm:$0xff]
        %v955 = vld [vmem:[%s181 + $0x710] sm:$0xff]
        %v956 = vld [vmem:[%s181 + $0x718] sm:$0xff]
        %v957 = vld [vmem:[%s181 + $0x720] sm:$0xff]
        %v958 = vld [vmem:[%s181 + $0x728] sm:$0xff]
        %v959 = vld [vmem:[%s181 + $0x730] sm:$0xff]
        %v960 = vld [vmem:[%s181 + $0x738] sm:$0xff]
        %v961 = vld [vmem:[%s181 + $0x740] sm:$0xff]
        %v962 = vld [vmem:[%s181 + $0x748] sm:$0xff]
        %v963 = vld [vmem:[%s181 + $0x750] sm:$0xff]
        %v964 = vld [vmem:[%s181 + $0x758] sm:$0xff]
        %v965 = vld [vmem:[%s181 + $0x760] sm:$0xff]
        %v966 = vld [vmem:[%s181 + $0x768] sm:$0xff]
        %v967 = vld [vmem:[%s181 + $0x770] sm:$0xff]
        %v968 = vld [vmem:[%s181 + $0x778] sm:$0xff]
        %v969 = vld [vmem:[%s181 + $0x780] sm:$0xff]
        %v970 = vld [vmem:[%s181 + $0x788] sm:$0xff]
        %v971 = vld [vmem:[%s181 + $0x790] sm:$0xff]
        %v972 = vld [vmem:[%s181 + $0x798] sm:$0xff]
        %v973 = vld [vmem:[%s181 + $0x7a0] sm:$0xff]
        %v974 = vld [vmem:[%s181 + $0x7a8] sm:$0xff]
        %v975 = vld [vmem:[%s181 + $0x7b0] sm:$0xff]
        %v976 = vld [vmem:[%s181 + $0x7b8] sm:$0xff]
        %v977 = vld [vmem:[%s181 + $0x7c0] sm:$0xff]
        %v978 = vld [vmem:[%s181 + $0x7c8] sm:$0xff]
        %v979 = vld [vmem:[%s181 + $0x7d0] sm:$0xff]
        %v980 = vld [vmem:[%s181 + $0x7d8] sm:$0xff]
        %v981 = vld [vmem:[%s181 + $0x7e0] sm:$0xff]
        %v982 = vld [vmem:[%s181 + $0x7e8] sm:$0xff]
        %v983 = vld [vmem:[%s181 + $0x7f0] sm:$0xff]
        %v984 = vld [vmem:[%s181 + $0x7f8] sm:$0xff]
        %v985 = vld [vmem:[%s181 + $0x800] sm:$0xff]
        %v986 = vld [vmem:[%s181 + $0x808] sm:$0xff]
        %v987 = vld [vmem:[%s181 + $0x810] sm:$0xff]
        %v988 = vld [vmem:[%s181 + $0x818] sm:$0xff]
        %v989 = vld [vmem:[%s181 + $0x820] sm:$0xff]
        %v990 = vld [vmem:[%s181 + $0x828] sm:$0xff]
        %v991 = vld [vmem:[%s181 + $0x830] sm:$0xff]
        %v992 = vld [vmem:[%s181 + $0x838] sm:$0xff]
        %v993 = vld [vmem:[%s181 + $0x840] sm:$0xff]
        %v994 = vld [vmem:[%s181 + $0x848] sm:$0xff]
        %v995 = vld [vmem:[%s181 + $0x850] sm:$0xff]
        %v996 = vld [vmem:[%s181 + $0x858] sm:$0xff]
        %v997 = vld [vmem:[%s181 + $0x860] sm:$0xff]
        %v998 = vld [vmem:[%s181 + $0x868] sm:$0xff]
        %v999 = vld [vmem:[%s181 + $0x870] sm:$0xff]
        %v1000 = vld [vmem:[%s181 + $0x878] sm:$0xff]
        %v1001 = vld [vmem:[%s181 + $0x880] sm:$0xff]
        %v1002 = vld [vmem:[%s181 + $0x888] sm:$0xff]
        %v1003 = vld [vmem:[%s181 + $0x890] sm:$0xff]
        %v1004 = vld [vmem:[%s181 + $0x898] sm:$0xff]
        %v1005 = vld [vmem:[%s181 + $0x8a0] sm:$0xff]
        %v1006 = vld [vmem:[%s181 + $0x8a8] sm:$0xff]
        %v1007 = vld [vmem:[%s181 + $0x8b0] sm:$0xff]
        %v1008 = vld [vmem:[%s181 + $0x8b8] sm:$0xff]
        %v1009 = vld [vmem:[%s181 + $0x8c0] sm:$0xff]
        %v1010 = vld [vmem:[%s181 + $0x8c8] sm:$0xff]
        %v1011 = vld [vmem:[%s181 + $0x8d0] sm:$0xff]
        %v1012 = vld [vmem:[%s181 + $0x8d8] sm:$0xff]
        %v1013 = vld [vmem:[%s181 + $0x8e0] sm:$0xff]
        %v1014 = vld [vmem:[%s181 + $0x8e8] sm:$0xff]
        %v1015 = vld [vmem:[%s181 + $0x8f0] sm:$0xff]
        %v1016 = vld [vmem:[%s181 + $0x8f8] sm:$0xff]
        %v1017 = vld [vmem:[%s181 + $0x900] sm:$0xff]
        %v1018 = vld [vmem:[%s181 + $0x908] sm:$0xff]
        %v1019 = vld [vmem:[%s181 + $0x910] sm:$0xff]
        %v1020 = vld [vmem:[%s181 + $0x918] sm:$0xff]
        %v1021 = vld [vmem:[%s181 + $0x920] sm:$0xff]
        %v1022 = vld [vmem:[%s181 + $0x928] sm:$0xff]
        %v1023 = vld [vmem:[%s181 + $0x930] sm:$0xff]
        %v1024 = vld [vmem:[%s181 + $0x938] sm:$0xff]
        %v1025 = vld [vmem:[%s181 + $0x940] sm:$0xff]
        %v1026 = vld [vmem:[%s181 + $0x948] sm:$0xff]
        %v1027 = vld [vmem:[%s181 + $0x950] sm:$0xff]
        %v1028 = vld [vmem:[%s181 + $0x958] sm:$0xff]
        %v1029 = vld [vmem:[%s181 + $0x960] sm:$0xff]
        %v1030 = vld [vmem:[%s181 + $0x968] sm:$0xff]
        %v1031 = vld [vmem:[%s181 + $0x970] sm:$0xff]
        %v1032 = vld [vmem:[%s181 + $0x978] sm:$0xff]
        %v1033 = vld [vmem:[%s181 + $0x980] sm:$0xff]
        %v1034 = vld [vmem:[%s181 + $0x988] sm:$0xff]
        %v1035 = vld [vmem:[%s181 + $0x990] sm:$0xff]
        %v1036 = vld [vmem:[%s181 + $0x998] sm:$0xff]
        %v1037 = vld [vmem:[%s181 + $0x9a0] sm:$0xff]
        %v1038 = vld [vmem:[%s181 + $0x9a8] sm:$0xff]
        %v1039 = vld [vmem:[%s181 + $0x9b0] sm:$0xff]
        %v1040 = vld [vmem:[%s181 + $0x9b8] sm:$0xff]
        %v1041 = vld [vmem:[%s181 + $0x9c0] sm:$0xff]
        %v1042 = vld [vmem:[%s181 + $0x9c8] sm:$0xff]
        %v1043 = vld [vmem:[%s181 + $0x9d0] sm:$0xff]
        %v1044 = vld [vmem:[%s181 + $0x9d8] sm:$0xff]
        %v1045 = vld [vmem:[%s181 + $0x9e0] sm:$0xff]
        %v1046 = vld [vmem:[%s181 + $0x9e8] sm:$0xff]
        %v1047 = vld [vmem:[%s181 + $0x9f0] sm:$0xff]
        %v1048 = vld [vmem:[%s181 + $0x9f8] sm:$0xff]
        %v1049 = vld [vmem:[%s181 + $0xa00] sm:$0xff]
        %v1050 = vld [vmem:[%s181 + $0xa08] sm:$0xff]
        %v1051 = vld [vmem:[%s181 + $0xa10] sm:$0xff]
        %v1052 = vld [vmem:[%s181 + $0xa18] sm:$0xff]
        %v1053 = vld [vmem:[%s181 + $0xa20] sm:$0xff]
        %v1054 = vld [vmem:[%s181 + $0xa28] sm:$0xff]
        %v1055 = vld [vmem:[%s181 + $0xa30] sm:$0xff]
        %v1056 = vld [vmem:[%s181 + $0xa38] sm:$0xff]
        %v1057 = vld [vmem:[%s181 + $0xa40] sm:$0xff]
        %v1058 = vld [vmem:[%s181 + $0xa48] sm:$0xff]
        %v1059 = vld [vmem:[%s181 + $0xa50] sm:$0xff]
        %v1060 = vld [vmem:[%s181 + $0xa58] sm:$0xff]
        %v1061 = vld [vmem:[%s181 + $0xa60] sm:$0xff]
        %v1062 = vld [vmem:[%s181 + $0xa68] sm:$0xff]
        %v1063 = vld [vmem:[%s181 + $0xa70] sm:$0xff]
        %v1064 = vld [vmem:[%s181 + $0xa78] sm:$0xff]
        %v1065 = vld [vmem:[%s181 + $0xa80] sm:$0xff]
        %v1066 = vld [vmem:[%s181 + $0xa88] sm:$0xff]
        %v1067 = vld [vmem:[%s181 + $0xa90] sm:$0xff]
        %v1068 = vld [vmem:[%s181 + $0xa98] sm:$0xff]
        %v1069 = vld [vmem:[%s181 + $0xaa0] sm:$0xff]
        %v1070 = vld [vmem:[%s181 + $0xaa8] sm:$0xff]
        %v1071 = vld [vmem:[%s181 + $0xab0] sm:$0xff]
        %v1072 = vld [vmem:[%s181 + $0xab8] sm:$0xff]
        %v1073 = vld [vmem:[%s181 + $0xac0] sm:$0xff]
        %v1074 = vld [vmem:[%s181 + $0xac8] sm:$0xff]
        %v1075 = vld [vmem:[%s181 + $0xad0] sm:$0xff]
        %v1076 = vld [vmem:[%s181 + $0xad8] sm:$0xff]
        %v1077 = vld [vmem:[%s181 + $0xae0] sm:$0xff]
        %v1078 = vld [vmem:[%s181 + $0xae8] sm:$0xff]
        %v1079 = vld [vmem:[%s181 + $0xaf0] sm:$0xff]
        %v1080 = vld [vmem:[%s181 + $0xaf8] sm:$0xff]
        %v1081 = vld [vmem:[%s181 + $0xb00] sm:$0xff]
        %v1082 = vld [vmem:[%s181 + $0xb08] sm:$0xff]
        %v1083 = vld [vmem:[%s181 + $0xb10] sm:$0xff]
        %v1084 = vld [vmem:[%s181 + $0xb18] sm:$0xff]
        %v1085 = vld [vmem:[%s181 + $0xb20] sm:$0xff]
        %v1086 = vld [vmem:[%s181 + $0xb28] sm:$0xff]
        %v1087 = vld [vmem:[%s181 + $0xb30] sm:$0xff]
        %v1088 = vld [vmem:[%s181 + $0xb38] sm:$0xff]
        %v1089 = vld [vmem:[%s181 + $0xb40] sm:$0xff]
        %v1090 = vld [vmem:[%s181 + $0xb48] sm:$0xff]
        %v1091 = vld [vmem:[%s181 + $0xb50] sm:$0xff]
        %v1092 = vld [vmem:[%s181 + $0xb58] sm:$0xff]
        %v1093 = vld [vmem:[%s181 + $0xb60] sm:$0xff]
        %v1094 = vld [vmem:[%s181 + $0xb68] sm:$0xff]
        %v1095 = vld [vmem:[%s181 + $0xb70] sm:$0xff]
        %v1096 = vld [vmem:[%s181 + $0xb78] sm:$0xff]
        %v1097 = vld [vmem:[%s181 + $0xb80] sm:$0xff]
        %v1098 = vld [vmem:[%s181 + $0xb88] sm:$0xff]
        %v1099 = vld [vmem:[%s181 + $0xb90] sm:$0xff]
        %v1100 = vld [vmem:[%s181 + $0xb98] sm:$0xff]
        %v1101 = vld [vmem:[%s181 + $0xba0] sm:$0xff]
        %v1102 = vld [vmem:[%s181 + $0xba8] sm:$0xff]
        %v1103 = vld [vmem:[%s181 + $0xbb0] sm:$0xff]
        %v1104 = vld [vmem:[%s181 + $0xbb8] sm:$0xff]
        %v1105 = vld [vmem:[%s181 + $0xbc0] sm:$0xff]
        %v1106 = vld [vmem:[%s181 + $0xbc8] sm:$0xff]
        %v1107 = vld [vmem:[%s181 + $0xbd0] sm:$0xff]
        %v1108 = vld [vmem:[%s181 + $0xbd8] sm:$0xff]
        %v1109 = vld [vmem:[%s181 + $0xbe0] sm:$0xff]
        %v1110 = vld [vmem:[%s181 + $0xbe8] sm:$0xff]
        %v1111 = vld [vmem:[%s181 + $0xbf0] sm:$0xff]
        %v1112 = vld [vmem:[%s181 + $0xbf8] sm:$0xff]
        %v1113 = vld [vmem:[%s181 + $0xc00] sm:$0xff]
        %v1114 = vld [vmem:[%s181 + $0xc08] sm:$0xff]
        %v1115 = vld [vmem:[%s181 + $0xc10] sm:$0xff]
        %v1116 = vld [vmem:[%s181 + $0xc18] sm:$0xff]
        %v1117 = vld [vmem:[%s181 + $0xc20] sm:$0xff]
        %v1118 = vld [vmem:[%s181 + $0xc28] sm:$0xff]
        %v1119 = vld [vmem:[%s181 + $0xc30] sm:$0xff]
        %v1120 = vld [vmem:[%s181 + $0xc38] sm:$0xff]
        %v1121 = vld [vmem:[%s181 + $0xc40] sm:$0xff]
        %v1122 = vld [vmem:[%s181 + $0xc48] sm:$0xff]
        %v1123 = vld [vmem:[%s181 + $0xc50] sm:$0xff]
        %v1124 = vld [vmem:[%s181 + $0xc58] sm:$0xff]
        %v1125 = vld [vmem:[%s181 + $0xc60] sm:$0xff]
        %v1126 = vld [vmem:[%s181 + $0xc68] sm:$0xff]
        %v1127 = vld [vmem:[%s181 + $0xc70] sm:$0xff]
        %v1128 = vld [vmem:[%s181 + $0xc78] sm:$0xff]
        %v1129 = vld [vmem:[%s181 + $0xc80] sm:$0xff]
        %v1130 = vld [vmem:[%s181 + $0xc88] sm:$0xff]
        %v1131 = vld [vmem:[%s181 + $0xc90] sm:$0xff]
        %v1132 = vld [vmem:[%s181 + $0xc98] sm:$0xff]
        %v1133 = vld [vmem:[%s181 + $0xca0] sm:$0xff]
        %v1134 = vld [vmem:[%s181 + $0xca8] sm:$0xff]
        %v1135 = vld [vmem:[%s181 + $0xcb0] sm:$0xff]
        %v1136 = vld [vmem:[%s181 + $0xcb8] sm:$0xff]
        %v1137 = vld [vmem:[%s181 + $0xcc0] sm:$0xff]
        %v1138 = vld [vmem:[%s181 + $0xcc8] sm:$0xff]
        %v1139 = vld [vmem:[%s181 + $0xcd0] sm:$0xff]
        %v1140 = vld [vmem:[%s181 + $0xcd8] sm:$0xff]
        %v1141 = vld [vmem:[%s181 + $0xce0] sm:$0xff]
        %v1142 = vld [vmem:[%s181 + $0xce8] sm:$0xff]
        %v1143 = vld [vmem:[%s181 + $0xcf0] sm:$0xff]
        %v1144 = vld [vmem:[%s181 + $0xcf8] sm:$0xff]
        %v1145 = vld [vmem:[%s181 + $0xd00] sm:$0xff]
        %v1146 = vld [vmem:[%s181 + $0xd08] sm:$0xff]
        %v1147 = vld [vmem:[%s181 + $0xd10] sm:$0xff]
        %v1148 = vld [vmem:[%s181 + $0xd18] sm:$0xff]
        %v1149 = vld [vmem:[%s181 + $0xd20] sm:$0xff]
        %v1150 = vld [vmem:[%s181 + $0xd28] sm:$0xff]
        %v1151 = vld [vmem:[%s181 + $0xd30] sm:$0xff]
        %v1152 = vld [vmem:[%s181 + $0xd38] sm:$0xff]
        %v1153 = vld [vmem:[%s181 + $0xd40] sm:$0xff]
        %v1154 = vld [vmem:[%s181 + $0xd48] sm:$0xff]
        %v1155 = vld [vmem:[%s181 + $0xd50] sm:$0xff]
        %v1156 = vld [vmem:[%s181 + $0xd58] sm:$0xff]
        %v1157 = vld [vmem:[%s181 + $0xd60] sm:$0xff]
        %v1158 = vld [vmem:[%s181 + $0xd68] sm:$0xff]
        %v1159 = vld [vmem:[%s181 + $0xd70] sm:$0xff]
        %v1160 = vld [vmem:[%s181 + $0xd78] sm:$0xff]
        %v1161 = vld [vmem:[%s181 + $0xd80] sm:$0xff]
        %v1162 = vld [vmem:[%s181 + $0xd88] sm:$0xff]
        %v1163 = vld [vmem:[%s181 + $0xd90] sm:$0xff]
        %v1164 = vld [vmem:[%s181 + $0xd98] sm:$0xff]
        %v1165 = vld [vmem:[%s181 + $0xda0] sm:$0xff]
        %v1166 = vld [vmem:[%s181 + $0xda8] sm:$0xff]
        %v1167 = vld [vmem:[%s181 + $0xdb0] sm:$0xff]
        %v1168 = vld [vmem:[%s181 + $0xdb8] sm:$0xff]
        %v1169 = vld [vmem:[%s181 + $0xdc0] sm:$0xff]
        %v1170 = vld [vmem:[%s181 + $0xdc8] sm:$0xff]
        %v1171 = vld [vmem:[%s181 + $0xdd0] sm:$0xff]
        %v1172 = vld [vmem:[%s181 + $0xdd8] sm:$0xff]
        %v1173 = vld [vmem:[%s181 + $0xde0] sm:$0xff]
        %v1174 = vld [vmem:[%s181 + $0xde8] sm:$0xff]
        %v1175 = vld [vmem:[%s181 + $0xdf0] sm:$0xff]
        %v1176 = vld [vmem:[%s181 + $0xdf8] sm:$0xff]
        %v1177 = vld [vmem:[%s181 + $0xe00] sm:$0xff]
        %v1178 = vld [vmem:[%s181 + $0xe08] sm:$0xff]
        %v1179 = vld [vmem:[%s181 + $0xe10] sm:$0xff]
        %v1180 = vld [vmem:[%s181 + $0xe18] sm:$0xff]
        %v1181 = vld [vmem:[%s181 + $0xe20] sm:$0xff]
        %v1182 = vld [vmem:[%s181 + $0xe28] sm:$0xff]
        %v1183 = vld [vmem:[%s181 + $0xe30] sm:$0xff]
        %v1184 = vld [vmem:[%s181 + $0xe38] sm:$0xff]
        %v1185 = vld [vmem:[%s181 + $0xe40] sm:$0xff]
        %v1186 = vld [vmem:[%s181 + $0xe48] sm:$0xff]
        %v1187 = vld [vmem:[%s181 + $0xe50] sm:$0xff]
        %v1188 = vld [vmem:[%s181 + $0xe58] sm:$0xff]
        %v1189 = vld [vmem:[%s181 + $0xe60] sm:$0xff]
        %v1190 = vld [vmem:[%s181 + $0xe68] sm:$0xff]
        %v1191 = vld [vmem:[%s181 + $0xe70] sm:$0xff]
        %v1192 = vld [vmem:[%s181 + $0xe78] sm:$0xff]
        %v1193 = vld [vmem:[%s181 + $0xe80] sm:$0xff]
        %v1194 = vld [vmem:[%s181 + $0xe88] sm:$0xff]
        %v1195 = vld [vmem:[%s181 + $0xe90] sm:$0xff]
        %v1196 = vld [vmem:[%s181 + $0xe98] sm:$0xff]
        %v1197 = vld [vmem:[%s181 + $0xea0] sm:$0xff]
        %v1198 = vld [vmem:[%s181 + $0xea8] sm:$0xff]
        %v1199 = vld [vmem:[%s181 + $0xeb0] sm:$0xff]
        %v1200 = vld [vmem:[%s181 + $0xeb8] sm:$0xff]
        %v1201 = vld [vmem:[%s181 + $0xec0] sm:$0xff]
        %v1202 = vld [vmem:[%s181 + $0xec8] sm:$0xff]
        %v1203 = vld [vmem:[%s181 + $0xed0] sm:$0xff]
        %v1204 = vld [vmem:[%s181 + $0xed8] sm:$0xff]
        %v1205 = vld [vmem:[%s181 + $0xee0] sm:$0xff]
        %v1206 = vld [vmem:[%s181 + $0xee8] sm:$0xff]
        %v1207 = vld [vmem:[%s181 + $0xef0] sm:$0xff]
        %v1208 = vld [vmem:[%s181 + $0xef8] sm:$0xff]
        %v1209 = vld [vmem:[%s181 + $0xf00] sm:$0xff]
        %v1210 = vld [vmem:[%s181 + $0xf08] sm:$0xff]
        %v1211 = vld [vmem:[%s181 + $0xf10] sm:$0xff]
        %v1212 = vld [vmem:[%s181 + $0xf18] sm:$0xff]
        %v1213 = vld [vmem:[%s181 + $0xf20] sm:$0xff]
        %v1214 = vld [vmem:[%s181 + $0xf28] sm:$0xff]
        %v1215 = vld [vmem:[%s181 + $0xf30] sm:$0xff]
        %v1216 = vld [vmem:[%s181 + $0xf38] sm:$0xff]
        %v1217 = vld [vmem:[%s181 + $0xf40] sm:$0xff]
        %v1218 = vld [vmem:[%s181 + $0xf48] sm:$0xff]
        %v1219 = vld [vmem:[%s181 + $0xf50] sm:$0xff]
        %v1220 = vld [vmem:[%s181 + $0xf58] sm:$0xff]
        %v1221 = vld [vmem:[%s181 + $0xf60] sm:$0xff]
        %v1222 = vld [vmem:[%s181 + $0xf68] sm:$0xff]
        %v1223 = vld [vmem:[%s181 + $0xf70] sm:$0xff]
        %v1224 = vld [vmem:[%s181 + $0xf78] sm:$0xff]
        %v1225 = vld [vmem:[%s181 + $0xf80] sm:$0xff]
        %v1226 = vld [vmem:[%s181 + $0xf88] sm:$0xff]
        %v1227 = vld [vmem:[%s181 + $0xf90] sm:$0xff]
        %v1228 = vld [vmem:[%s181 + $0xf98] sm:$0xff]
        %v1229 = vld [vmem:[%s181 + $0xfa0] sm:$0xff]
        %v1230 = vld [vmem:[%s181 + $0xfa8] sm:$0xff]
        %v1231 = vld [vmem:[%s181 + $0xfb0] sm:$0xff]
        %v1232 = vld [vmem:[%s181 + $0xfb8] sm:$0xff]
        %v1233 = vld [vmem:[%s181 + $0xfc0] sm:$0xff]
        %v1234 = vld [vmem:[%s181 + $0xfc8] sm:$0xff]
        %v1235 = vld [vmem:[%s181 + $0xfd0] sm:$0xff]
        %v1236 = vld [vmem:[%s181 + $0xfd8] sm:$0xff]
        %v1237 = vld [vmem:[%s181 + $0xfe0] sm:$0xff]
        %v1238 = vld [vmem:[%s181 + $0xfe8] sm:$0xff]
        %v1239 = vld [vmem:[%s181 + $0xff0] sm:$0xff]
        %v1240 = vld [vmem:[%s181 + $0xff8] sm:$0xff]
        %v1241 = vsub.f32 %v217, %v729
        %v1242 = vsub.f32 %v218, %v730
        %v1243 = vsub.f32 %v219, %v731
        %v1244 = vsub.f32 %v220, %v732
        %v1245 = vsub.f32 %v221, %v733
        %v1246 = vsub.f32 %v222, %v734
        %v1247 = vsub.f32 %v223, %v735
        %v1248 = vsub.f32 %v224, %v736
        %v1249 = vsub.f32 %v225, %v737
        %v1250 = vsub.f32 %v226, %v738
        %v1251 = vsub.f32 %v227, %v739
        %v1252 = vsub.f32 %v228, %v740
        %v1253 = vsub.f32 %v229, %v741
        %v1254 = vsub.f32 %v230, %v742
        %v1255 = vsub.f32 %v231, %v743
        %v1256 = vsub.f32 %v232, %v744
        %v1257 = vsub.f32 %v233, %v745
        %v1258 = vsub.f32 %v234, %v746
        %v1259 = vsub.f32 %v235, %v747
        %v1260 = vsub.f32 %v236, %v748
        %v1261 = vsub.f32 %v237, %v749
        %v1262 = vsub.f32 %v238, %v750
        %v1263 = vsub.f32 %v239, %v751
        %v1264 = vsub.f32 %v240, %v752
        %v1265 = vsub.f32 %v241, %v753
        %v1266 = vsub.f32 %v242, %v754
        %v1267 = vsub.f32 %v243, %v755
        %v1268 = vsub.f32 %v244, %v756
        %v1269 = vsub.f32 %v245, %v757
        %v1270 = vsub.f32 %v246, %v758
        %v1271 = vsub.f32 %v247, %v759
        %v1272 = vsub.f32 %v248, %v760
        %v1273 = vsub.f32 %v249, %v761
        %v1274 = vsub.f32 %v250, %v762
        %v1275 = vsub.f32 %v251, %v763
        %v1276 = vsub.f32 %v252, %v764
        %v1277 = vsub.f32 %v253, %v765
        %v1278 = vsub.f32 %v254, %v766
        %v1279 = vsub.f32 %v255, %v767
        %v1280 = vsub.f32 %v256, %v768
        %v1281 = vsub.f32 %v257, %v769
        %v1282 = vsub.f32 %v258, %v770
        %v1283 = vsub.f32 %v259, %v771
        %v1284 = vsub.f32 %v260, %v772
        %v1285 = vsub.f32 %v261, %v773
        %v1286 = vsub.f32 %v262, %v774
        %v1287 = vsub.f32 %v263, %v775
        %v1288 = vsub.f32 %v264, %v776
        %v1289 = vsub.f32 %v265, %v777
        %v1290 = vsub.f32 %v266, %v778
        %v1291 = vsub.f32 %v267, %v779
        %v1292 = vsub.f32 %v268, %v780
        %v1293 = vsub.f32 %v269, %v781
        %v1294 = vsub.f32 %v270, %v782
        %v1295 = vsub.f32 %v271, %v783
        %v1296 = vsub.f32 %v272, %v784
        %v1297 = vsub.f32 %v273, %v785
        %v1298 = vsub.f32 %v274, %v786
        %v1299 = vsub.f32 %v275, %v787
        %v1300 = vsub.f32 %v276, %v788
        %v1301 = vsub.f32 %v277, %v789
        %v1302 = vsub.f32 %v278, %v790
        %v1303 = vsub.f32 %v279, %v791
        %v1304 = vsub.f32 %v280, %v792
        %v1305 = vsub.f32 %v281, %v793
        %v1306 = vsub.f32 %v282, %v794
        %v1307 = vsub.f32 %v283, %v795
        %v1308 = vsub.f32 %v284, %v796
        %v1309 = vsub.f32 %v285, %v797
        %v1310 = vsub.f32 %v286, %v798
        %v1311 = vsub.f32 %v287, %v799
        %v1312 = vsub.f32 %v288, %v800
        %v1313 = vsub.f32 %v289, %v801
        %v1314 = vsub.f32 %v290, %v802
        %v1315 = vsub.f32 %v291, %v803
        %v1316 = vsub.f32 %v292, %v804
        %v1317 = vsub.f32 %v293, %v805
        %v1318 = vsub.f32 %v294, %v806
        %v1319 = vsub.f32 %v295, %v807
        %v1320 = vsub.f32 %v296, %v808
        %v1321 = vsub.f32 %v297, %v809
        %v1322 = vsub.f32 %v298, %v810
        %v1323 = vsub.f32 %v299, %v811
        %v1324 = vsub.f32 %v300, %v812
        %v1325 = vsub.f32 %v301, %v813
        %v1326 = vsub.f32 %v302, %v814
        %v1327 = vsub.f32 %v303, %v815
        %v1328 = vsub.f32 %v304, %v816
        %v1329 = vsub.f32 %v305, %v817
        %v1330 = vsub.f32 %v306, %v818
        %v1331 = vsub.f32 %v307, %v819
        %v1332 = vsub.f32 %v308, %v820
        %v1333 = vsub.f32 %v309, %v821
        %v1334 = vsub.f32 %v310, %v822
        %v1335 = vsub.f32 %v311, %v823
        %v1336 = vsub.f32 %v312, %v824
        %v1337 = vsub.f32 %v313, %v825
        %v1338 = vsub.f32 %v314, %v826
        %v1339 = vsub.f32 %v315, %v827
        %v1340 = vsub.f32 %v316, %v828
        %v1341 = vsub.f32 %v317, %v829
        %v1342 = vsub.f32 %v318, %v830
        %v1343 = vsub.f32 %v319, %v831
        %v1344 = vsub.f32 %v320, %v832
        %v1345 = vsub.f32 %v321, %v833
        %v1346 = vsub.f32 %v322, %v834
        %v1347 = vsub.f32 %v323, %v835
        %v1348 = vsub.f32 %v324, %v836
        %v1349 = vsub.f32 %v325, %v837
        %v1350 = vsub.f32 %v326, %v838
        %v1351 = vsub.f32 %v327, %v839
        %v1352 = vsub.f32 %v328, %v840
        %v1353 = vsub.f32 %v329, %v841
        %v1354 = vsub.f32 %v330, %v842
        %v1355 = vsub.f32 %v331, %v843
        %v1356 = vsub.f32 %v332, %v844
        %v1357 = vsub.f32 %v333, %v845
        %v1358 = vsub.f32 %v334, %v846
        %v1359 = vsub.f32 %v335, %v847
        %v1360 = vsub.f32 %v336, %v848
        %v1361 = vsub.f32 %v337, %v849
        %v1362 = vsub.f32 %v338, %v850
        %v1363 = vsub.f32 %v339, %v851
        %v1364 = vsub.f32 %v340, %v852
        %v1365 = vsub.f32 %v341, %v853
        %v1366 = vsub.f32 %v342, %v854
        %v1367 = vsub.f32 %v343, %v855
        %v1368 = vsub.f32 %v344, %v856
        %v1369 = vsub.f32 %v345, %v857
        %v1370 = vsub.f32 %v346, %v858
        %v1371 = vsub.f32 %v347, %v859
        %v1372 = vsub.f32 %v348, %v860
        %v1373 = vsub.f32 %v349, %v861
        %v1374 = vsub.f32 %v350, %v862
        %v1375 = vsub.f32 %v351, %v863
        %v1376 = vsub.f32 %v352, %v864
        %v1377 = vsub.f32 %v353, %v865
        %v1378 = vsub.f32 %v354, %v866
        %v1379 = vsub.f32 %v355, %v867
        %v1380 = vsub.f32 %v356, %v868
        %v1381 = vsub.f32 %v357, %v869
        %v1382 = vsub.f32 %v358, %v870
        %v1383 = vsub.f32 %v359, %v871
        %v1384 = vsub.f32 %v360, %v872
        %v1385 = vsub.f32 %v361, %v873
        %v1386 = vsub.f32 %v362, %v874
        %v1387 = vsub.f32 %v363, %v875
        %v1388 = vsub.f32 %v364, %v876
        %v1389 = vsub.f32 %v365, %v877
        %v1390 = vsub.f32 %v366, %v878
        %v1391 = vsub.f32 %v367, %v879
        %v1392 = vsub.f32 %v368, %v880
        %v1393 = vsub.f32 %v369, %v881
        %v1394 = vsub.f32 %v370, %v882
        %v1395 = vsub.f32 %v371, %v883
        %v1396 = vsub.f32 %v372, %v884
        %v1397 = vsub.f32 %v373, %v885
        %v1398 = vsub.f32 %v374, %v886
        %v1399 = vsub.f32 %v375, %v887
        %v1400 = vsub.f32 %v376, %v888
        %v1401 = vsub.f32 %v377, %v889
        %v1402 = vsub.f32 %v378, %v890
        %v1403 = vsub.f32 %v379, %v891
        %v1404 = vsub.f32 %v380, %v892
        %v1405 = vsub.f32 %v381, %v893
        %v1406 = vsub.f32 %v382, %v894
        %v1407 = vsub.f32 %v383, %v895
        %v1408 = vsub.f32 %v384, %v896
        %v1409 = vsub.f32 %v385, %v897
        %v1410 = vsub.f32 %v386, %v898
        %v1411 = vsub.f32 %v387, %v899
        %v1412 = vsub.f32 %v388, %v900
        %v1413 = vsub.f32 %v389, %v901
        %v1414 = vsub.f32 %v390, %v902
        %v1415 = vsub.f32 %v391, %v903
        %v1416 = vsub.f32 %v392, %v904
        %v1417 = vsub.f32 %v393, %v905
        %v1418 = vsub.f32 %v394, %v906
        %v1419 = vsub.f32 %v395, %v907
        %v1420 = vsub.f32 %v396, %v908
        %v1421 = vsub.f32 %v397, %v909
        %v1422 = vsub.f32 %v398, %v910
        %v1423 = vsub.f32 %v399, %v911
        %v1424 = vsub.f32 %v400, %v912
        %v1425 = vsub.f32 %v401, %v913
        %v1426 = vsub.f32 %v402, %v914
        %v1427 = vsub.f32 %v403, %v915
        %v1428 = vsub.f32 %v404, %v916
        %v1429 = vsub.f32 %v405, %v917
        %v1430 = vsub.f32 %v406, %v918
        %v1431 = vsub.f32 %v407, %v919
        %v1432 = vsub.f32 %v408, %v920
        %v1433 = vsub.f32 %v409, %v921
        %v1434 = vsub.f32 %v410, %v922
        %v1435 = vsub.f32 %v411, %v923
        %v1436 = vsub.f32 %v412, %v924
        %v1437 = vsub.f32 %v413, %v925
        %v1438 = vsub.f32 %v414, %v926
        %v1439 = vsub.f32 %v415, %v927
        %v1440 = vsub.f32 %v416, %v928
        %v1441 = vsub.f32 %v417, %v929
        %v1442 = vsub.f32 %v418, %v930
        %v1443 = vsub.f32 %v419, %v931
        %v1444 = vsub.f32 %v420, %v932
        %v1445 = vsub.f32 %v421, %v933
        %v1446 = vsub.f32 %v422, %v934
        %v1447 = vsub.f32 %v423, %v935
        %v1448 = vsub.f32 %v424, %v936
        %v1449 = vsub.f32 %v425, %v937
        %v1450 = vsub.f32 %v426, %v938
        %v1451 = vsub.f32 %v427, %v939
        %v1452 = vsub.f32 %v428, %v940
        %v1453 = vsub.f32 %v429, %v941
        %v1454 = vsub.f32 %v430, %v942
        %v1455 = vsub.f32 %v431, %v943
        %v1456 = vsub.f32 %v432, %v944
        %v1457 = vsub.f32 %v433, %v945
        %v1458 = vsub.f32 %v434, %v946
        %v1459 = vsub.f32 %v435, %v947
        %v1460 = vsub.f32 %v436, %v948
        %v1461 = vsub.f32 %v437, %v949
        %v1462 = vsub.f32 %v438, %v950
        %v1463 = vsub.f32 %v439, %v951
        %v1464 = vsub.f32 %v440, %v952
        %v1465 = vsub.f32 %v441, %v953
        %v1466 = vsub.f32 %v442, %v954
        %v1467 = vsub.f32 %v443, %v955
        %v1468 = vsub.f32 %v444, %v956
        %v1469 = vsub.f32 %v445, %v957
        %v1470 = vsub.f32 %v446, %v958
        %v1471 = vsub.f32 %v447, %v959
        %v1472 = vsub.f32 %v448, %v960
        %v1473 = vsub.f32 %v449, %v961
        %v1474 = vsub.f32 %v450, %v962
        %v1475 = vsub.f32 %v451, %v963
        %v1476 = vsub.f32 %v452, %v964
        %v1477 = vsub.f32 %v453, %v965
        %v1478 = vsub.f32 %v454, %v966
        %v1479 = vsub.f32 %v455, %v967
        %v1480 = vsub.f32 %v456, %v968
        %v1481 = vsub.f32 %v457, %v969
        %v1482 = vsub.f32 %v458, %v970
        %v1483 = vsub.f32 %v459, %v971
        %v1484 = vsub.f32 %v460, %v972
        %v1485 = vsub.f32 %v461, %v973
        %v1486 = vsub.f32 %v462, %v974
        %v1487 = vsub.f32 %v463, %v975
        %v1488 = vsub.f32 %v464, %v976
        %v1489 = vsub.f32 %v465, %v977
        %v1490 = vsub.f32 %v466, %v978
        %v1491 = vsub.f32 %v467, %v979
        %v1492 = vsub.f32 %v468, %v980
        %v1493 = vsub.f32 %v469, %v981
        %v1494 = vsub.f32 %v470, %v982
        %v1495 = vsub.f32 %v471, %v983
        %v1496 = vsub.f32 %v472, %v984
        %v1497 = vsub.f32 %v473, %v985
        %v1498 = vsub.f32 %v474, %v986
        %v1499 = vsub.f32 %v475, %v987
        %v1500 = vsub.f32 %v476, %v988
        %v1501 = vsub.f32 %v477, %v989
        %v1502 = vsub.f32 %v478, %v990
        %v1503 = vsub.f32 %v479, %v991
        %v1504 = vsub.f32 %v480, %v992
        %v1505 = vsub.f32 %v481, %v993
        %v1506 = vsub.f32 %v482, %v994
        %v1507 = vsub.f32 %v483, %v995
        %v1508 = vsub.f32 %v484, %v996
        %v1509 = vsub.f32 %v485, %v997
        %v1510 = vsub.f32 %v486, %v998
        %v1511 = vsub.f32 %v487, %v999
        %v1512 = vsub.f32 %v488, %v1000
        %v1513 = vsub.f32 %v489, %v1001
        %v1514 = vsub.f32 %v490, %v1002
        %v1515 = vsub.f32 %v491, %v1003
        %v1516 = vsub.f32 %v492, %v1004
        %v1517 = vsub.f32 %v493, %v1005
        %v1518 = vsub.f32 %v494, %v1006
        %v1519 = vsub.f32 %v495, %v1007
        %v1520 = vsub.f32 %v496, %v1008
        %v1521 = vsub.f32 %v497, %v1009
        %v1522 = vsub.f32 %v498, %v1010
        %v1523 = vsub.f32 %v499, %v1011
        %v1524 = vsub.f32 %v500, %v1012
        %v1525 = vsub.f32 %v501, %v1013
        %v1526 = vsub.f32 %v502, %v1014
        %v1527 = vsub.f32 %v503, %v1015
        %v1528 = vsub.f32 %v504, %v1016
        %v1529 = vsub.f32 %v505, %v1017
        %v1530 = vsub.f32 %v506, %v1018
        %v1531 = vsub.f32 %v507, %v1019
        %v1532 = vsub.f32 %v508, %v1020
        %v1533 = vsub.f32 %v509, %v1021
        %v1534 = vsub.f32 %v510, %v1022
        %v1535 = vsub.f32 %v511, %v1023
        %v1536 = vsub.f32 %v512, %v1024
        %v1537 = vsub.f32 %v513, %v1025
        %v1538 = vsub.f32 %v514, %v1026
        %v1539 = vsub.f32 %v515, %v1027
        %v1540 = vsub.f32 %v516, %v1028
        %v1541 = vsub.f32 %v517, %v1029
        %v1542 = vsub.f32 %v518, %v1030
        %v1543 = vsub.f32 %v519, %v1031
        %v1544 = vsub.f32 %v520, %v1032
        %v1545 = vsub.f32 %v521, %v1033
        %v1546 = vsub.f32 %v522, %v1034
        %v1547 = vsub.f32 %v523, %v1035
        %v1548 = vsub.f32 %v524, %v1036
        %v1549 = vsub.f32 %v525, %v1037
        %v1550 = vsub.f32 %v526, %v1038
        %v1551 = vsub.f32 %v527, %v1039
        %v1552 = vsub.f32 %v528, %v1040
        %v1553 = vsub.f32 %v529, %v1041
        %v1554 = vsub.f32 %v530, %v1042
        %v1555 = vsub.f32 %v531, %v1043
        %v1556 = vsub.f32 %v532, %v1044
        %v1557 = vsub.f32 %v533, %v1045
        %v1558 = vsub.f32 %v534, %v1046
        %v1559 = vsub.f32 %v535, %v1047
        %v1560 = vsub.f32 %v536, %v1048
        %v1561 = vsub.f32 %v537, %v1049
        %v1562 = vsub.f32 %v538, %v1050
        %v1563 = vsub.f32 %v539, %v1051
        %v1564 = vsub.f32 %v540, %v1052
        %v1565 = vsub.f32 %v541, %v1053
        %v1566 = vsub.f32 %v542, %v1054
        %v1567 = vsub.f32 %v543, %v1055
        %v1568 = vsub.f32 %v544, %v1056
        %v1569 = vsub.f32 %v545, %v1057
        %v1570 = vsub.f32 %v546, %v1058
        %v1571 = vsub.f32 %v547, %v1059
        %v1572 = vsub.f32 %v548, %v1060
        %v1573 = vsub.f32 %v549, %v1061
        %v1574 = vsub.f32 %v550, %v1062
        %v1575 = vsub.f32 %v551, %v1063
        %v1576 = vsub.f32 %v552, %v1064
        %v1577 = vsub.f32 %v553, %v1065
        %v1578 = vsub.f32 %v554, %v1066
        %v1579 = vsub.f32 %v555, %v1067
        %v1580 = vsub.f32 %v556, %v1068
        %v1581 = vsub.f32 %v557, %v1069
        %v1582 = vsub.f32 %v558, %v1070
        %v1583 = vsub.f32 %v559, %v1071
        %v1584 = vsub.f32 %v560, %v1072
        %v1585 = vsub.f32 %v561, %v1073
        %v1586 = vsub.f32 %v562, %v1074
        %v1587 = vsub.f32 %v563, %v1075
        %v1588 = vsub.f32 %v564, %v1076
        %v1589 = vsub.f32 %v565, %v1077
        %v1590 = vsub.f32 %v566, %v1078
        %v1591 = vsub.f32 %v567, %v1079
        %v1592 = vsub.f32 %v568, %v1080
        %v1593 = vsub.f32 %v569, %v1081
        %v1594 = vsub.f32 %v570, %v1082
        %v1595 = vsub.f32 %v571, %v1083
        %v1596 = vsub.f32 %v572, %v1084
        %v1597 = vsub.f32 %v573, %v1085
        %v1598 = vsub.f32 %v574, %v1086
        %v1599 = vsub.f32 %v575, %v1087
        %v1600 = vsub.f32 %v576, %v1088
        %v1601 = vsub.f32 %v577, %v1089
        %v1602 = vsub.f32 %v578, %v1090
        %v1603 = vsub.f32 %v579, %v1091
        %v1604 = vsub.f32 %v580, %v1092
        %v1605 = vsub.f32 %v581, %v1093
        %v1606 = vsub.f32 %v582, %v1094
        %v1607 = vsub.f32 %v583, %v1095
        %v1608 = vsub.f32 %v584, %v1096
        %v1609 = vsub.f32 %v585, %v1097
        %v1610 = vsub.f32 %v586, %v1098
        %v1611 = vsub.f32 %v587, %v1099
        %v1612 = vsub.f32 %v588, %v1100
        %v1613 = vsub.f32 %v589, %v1101
        %v1614 = vsub.f32 %v590, %v1102
        %v1615 = vsub.f32 %v591, %v1103
        %v1616 = vsub.f32 %v592, %v1104
        %v1617 = vsub.f32 %v593, %v1105
        %v1618 = vsub.f32 %v594, %v1106
        %v1619 = vsub.f32 %v595, %v1107
        %v1620 = vsub.f32 %v596, %v1108
        %v1621 = vsub.f32 %v597, %v1109
        %v1622 = vsub.f32 %v598, %v1110
        %v1623 = vsub.f32 %v599, %v1111
        %v1624 = vsub.f32 %v600, %v1112
        %v1625 = vsub.f32 %v601, %v1113
        %v1626 = vsub.f32 %v602, %v1114
        %v1627 = vsub.f32 %v603, %v1115
        %v1628 = vsub.f32 %v604, %v1116
        %v1629 = vsub.f32 %v605, %v1117
        %v1630 = vsub.f32 %v606, %v1118
        %v1631 = vsub.f32 %v607, %v1119
        %v1632 = vsub.f32 %v608, %v1120
        %v1633 = vsub.f32 %v609, %v1121
        %v1634 = vsub.f32 %v610, %v1122
        %v1635 = vsub.f32 %v611, %v1123
        %v1636 = vsub.f32 %v612, %v1124
        %v1637 = vsub.f32 %v613, %v1125
        %v1638 = vsub.f32 %v614, %v1126
        %v1639 = vsub.f32 %v615, %v1127
        %v1640 = vsub.f32 %v616, %v1128
        %v1641 = vsub.f32 %v617, %v1129
        %v1642 = vsub.f32 %v618, %v1130
        %v1643 = vsub.f32 %v619, %v1131
        %v1644 = vsub.f32 %v620, %v1132
        %v1645 = vsub.f32 %v621, %v1133
        %v1646 = vsub.f32 %v622, %v1134
        %v1647 = vsub.f32 %v623, %v1135
        %v1648 = vsub.f32 %v624, %v1136
        %v1649 = vsub.f32 %v625, %v1137
        %v1650 = vsub.f32 %v626, %v1138
        %v1651 = vsub.f32 %v627, %v1139
        %v1652 = vsub.f32 %v628, %v1140
        %v1653 = vsub.f32 %v629, %v1141
        %v1654 = vsub.f32 %v630, %v1142
        %v1655 = vsub.f32 %v631, %v1143
        %v1656 = vsub.f32 %v632, %v1144
        %v1657 = vsub.f32 %v633, %v1145
        %v1658 = vsub.f32 %v634, %v1146
        %v1659 = vsub.f32 %v635, %v1147
        %v1660 = vsub.f32 %v636, %v1148
        %v1661 = vsub.f32 %v637, %v1149
        %v1662 = vsub.f32 %v638, %v1150
        %v1663 = vsub.f32 %v639, %v1151
        %v1664 = vsub.f32 %v640, %v1152
        %v1665 = vsub.f32 %v641, %v1153
        %v1666 = vsub.f32 %v642, %v1154
        %v1667 = vsub.f32 %v643, %v1155
        %v1668 = vsub.f32 %v644, %v1156
        %v1669 = vsub.f32 %v645, %v1157
        %v1670 = vsub.f32 %v646, %v1158
        %v1671 = vsub.f32 %v647, %v1159
        %v1672 = vsub.f32 %v648, %v1160
        %v1673 = vsub.f32 %v649, %v1161
        %v1674 = vsub.f32 %v650, %v1162
        %v1675 = vsub.f32 %v651, %v1163
        %v1676 = vsub.f32 %v652, %v1164
        %v1677 = vsub.f32 %v653, %v1165
        %v1678 = vsub.f32 %v654, %v1166
        %v1679 = vsub.f32 %v655, %v1167
        %v1680 = vsub.f32 %v656, %v1168
        %v1681 = vsub.f32 %v657, %v1169
        %v1682 = vsub.f32 %v658, %v1170
        %v1683 = vsub.f32 %v659, %v1171
        %v1684 = vsub.f32 %v660, %v1172
        %v1685 = vsub.f32 %v661, %v1173
        %v1686 = vsub.f32 %v662, %v1174
        %v1687 = vsub.f32 %v663, %v1175
        %v1688 = vsub.f32 %v664, %v1176
        %v1689 = vsub.f32 %v665, %v1177
        %v1690 = vsub.f32 %v666, %v1178
        %v1691 = vsub.f32 %v667, %v1179
        %v1692 = vsub.f32 %v668, %v1180
        %v1693 = vsub.f32 %v669, %v1181
        %v1694 = vsub.f32 %v670, %v1182
        %v1695 = vsub.f32 %v671, %v1183
        %v1696 = vsub.f32 %v672, %v1184
        %v1697 = vsub.f32 %v673, %v1185
        %v1698 = vsub.f32 %v674, %v1186
        %v1699 = vsub.f32 %v675, %v1187
        %v1700 = vsub.f32 %v676, %v1188
        %v1701 = vsub.f32 %v677, %v1189
        %v1702 = vsub.f32 %v678, %v1190
        %v1703 = vsub.f32 %v679, %v1191
        %v1704 = vsub.f32 %v680, %v1192
        %v1705 = vsub.f32 %v681, %v1193
        %v1706 = vsub.f32 %v682, %v1194
        %v1707 = vsub.f32 %v683, %v1195
        %v1708 = vsub.f32 %v684, %v1196
        %v1709 = vsub.f32 %v685, %v1197
        %v1710 = vsub.f32 %v686, %v1198
        %v1711 = vsub.f32 %v687, %v1199
        %v1712 = vsub.f32 %v688, %v1200
        %v1713 = vsub.f32 %v689, %v1201
        %v1714 = vsub.f32 %v690, %v1202
        %v1715 = vsub.f32 %v691, %v1203
        %v1716 = vsub.f32 %v692, %v1204
        %v1717 = vsub.f32 %v693, %v1205
        %v1718 = vsub.f32 %v694, %v1206
        %v1719 = vsub.f32 %v695, %v1207
        %v1720 = vsub.f32 %v696, %v1208
        %v1721 = vsub.f32 %v697, %v1209
        %v1722 = vsub.f32 %v698, %v1210
        %v1723 = vsub.f32 %v699, %v1211
        %v1724 = vsub.f32 %v700, %v1212
        %v1725 = vsub.f32 %v701, %v1213
        %v1726 = vsub.f32 %v702, %v1214
        %v1727 = vsub.f32 %v703, %v1215
        %v1728 = vsub.f32 %v704, %v1216
        %v1729 = vsub.f32 %v705, %v1217
        %v1730 = vsub.f32 %v706, %v1218
        %v1731 = vsub.f32 %v707, %v1219
        %v1732 = vsub.f32 %v708, %v1220
        %v1733 = vsub.f32 %v709, %v1221
        %v1734 = vsub.f32 %v710, %v1222
        %v1735 = vsub.f32 %v711, %v1223
        %v1736 = vsub.f32 %v712, %v1224
        %v1737 = vsub.f32 %v713, %v1225
        %v1738 = vsub.f32 %v714, %v1226
        %v1739 = vsub.f32 %v715, %v1227
        %v1740 = vsub.f32 %v716, %v1228
        %v1741 = vsub.f32 %v717, %v1229
        %v1742 = vsub.f32 %v718, %v1230
        %v1743 = vsub.f32 %v719, %v1231
        %v1744 = vsub.f32 %v720, %v1232
        %v1745 = vsub.f32 %v721, %v1233
        %v1746 = vsub.f32 %v722, %v1234
        %v1747 = vsub.f32 %v723, %v1235
        %v1748 = vsub.f32 %v724, %v1236
        %v1749 = vsub.f32 %v725, %v1237
        %v1750 = vsub.f32 %v726, %v1238
        %v1751 = vsub.f32 %v727, %v1239
        %v1752 = vsub.f32 %v728, %v1240
        %p1753 = scmp.eq.s32.totalorder %s20, 1
        // Predicated region
        $region41: #{tpu_custom_call.1} parent=27 // pred_check
          %p1754 = pneg %p1753
        $region42: #{tpu_custom_call.1} parent=27 // pred_check_branch
          %1756 = sbr.rel (%p1754) target = $region44
        $region43: #{tpu_custom_call.1} parent=27 // pred_region
          %s1757 = smul.u32 %s20, 4096
          %v1758 = vlaneseq
          %v1759 = vshrl.u32 %v1758, 7
          %v1760 = vadd.s32 %v1759, 8
          %v1761 = vadd.s32 %v1759, 16
          %v1762 = vadd.s32 %v1759, 24
          %v1763 = vadd.s32 %v1759, 32
          %v1764 = vadd.s32 %v1759, 40
          %v1765 = vadd.s32 %v1759, 48
          %v1766 = vadd.s32 %v1759, 56
          %v1767 = vadd.s32 %v1759, 64
          %v1768 = vadd.s32 %v1759, 72
          %v1769 = vadd.s32 %v1759, 80
          %v1770 = vadd.s32 %v1759, 88
          %v1771 = vadd.s32 %v1759, 96
          %v1772 = vadd.s32 %v1759, 104
          %v1773 = vadd.s32 %v1759, 112
          %v1774 = vadd.s32 %v1759, 120
          %v1775 = vadd.s32 %v1759, 128
          %v1776 = vadd.s32 %v1759, 136
          %v1777 = vadd.s32 %v1759, 144
          %v1778 = vadd.s32 %v1759, 152
          %v1779 = vadd.s32 %v1759, 160
          %v1780 = vadd.s32 %v1759, 168
          %v1781 = vadd.s32 %v1759, 176
          %v1782 = vadd.s32 %v1759, 184
          %v1783 = vadd.s32 %v1759, 192
          %v1784 = vadd.s32 %v1759, 200
          %v1785 = vadd.s32 %v1759, 208
          %v1786 = vadd.s32 %v1759, 216
          %v1787 = vadd.s32 %v1759, 224
          %v1788 = vadd.s32 %v1759, 232
          %v1789 = vadd.s32 %v1759, 240
          %v1790 = vadd.s32 %v1759, 248
          %v1791 = vadd.s32 %v1759, 256
          %v1792 = vadd.s32 %v1759, 264
          %v1793 = vadd.s32 %v1759, 272
          %v1794 = vadd.s32 %v1759, 280
          %v1795 = vadd.s32 %v1759, 288
          %v1796 = vadd.s32 %v1759, 296
          %v1797 = vadd.s32 %v1759, 304
          %v1798 = vadd.s32 %v1759, 312
          %v1799 = vadd.s32 %v1759, 320
          %v1800 = vadd.s32 %v1759, 328
          %v1801 = vadd.s32 %v1759, 336
          %v1802 = vadd.s32 %v1759, 344
          %v1803 = vadd.s32 %v1759, 352
          %v1804 = vadd.s32 %v1759, 360
          %v1805 = vadd.s32 %v1759, 368
          %v1806 = vadd.s32 %v1759, 376
          %v1807 = vadd.s32 %v1759, 384
          %v1808 = vadd.s32 %v1759, 392
          %v1809 = vadd.s32 %v1759, 400
          %v1810 = vadd.s32 %v1759, 408
          %v1811 = vadd.s32 %v1759, 416
          %v1812 = vadd.s32 %v1759, 424
          %v1813 = vadd.s32 %v1759, 432
          %v1814 = vadd.s32 %v1759, 440
          %v1815 = vadd.s32 %v1759, 448
          %v1816 = vadd.s32 %v1759, 456
          %v1817 = vadd.s32 %v1759, 464
          %v1818 = vadd.s32 %v1759, 472
          %v1819 = vadd.s32 %v1759, 480
          %v1820 = vadd.s32 %v1759, 488
          %v1821 = vadd.s32 %v1759, 496
          %v1822 = vadd.s32 %v1759, 504
          %v1823 = vadd.s32 %v1759, 512
          %v1824 = vadd.s32 %v1759, 520
          %v1825 = vadd.s32 %v1759, 528
          %v1826 = vadd.s32 %v1759, 536
          %v1827 = vadd.s32 %v1759, 544
          %v1828 = vadd.s32 %v1759, 552
          %v1829 = vadd.s32 %v1759, 560
          %v1830 = vadd.s32 %v1759, 568
          %v1831 = vadd.s32 %v1759, 576
          %v1832 = vadd.s32 %v1759, 584
          %v1833 = vadd.s32 %v1759, 592
          %v1834 = vadd.s32 %v1759, 600
          %v1835 = vadd.s32 %v1759, 608
          %v1836 = vadd.s32 %v1759, 616
          %v1837 = vadd.s32 %v1759, 624
          %v1838 = vadd.s32 %v1759, 632
          %v1839 = vadd.s32 %v1759, 640
          %v1840 = vadd.s32 %v1759, 648
          %v1841 = vadd.s32 %v1759, 656
          %v1842 = vadd.s32 %v1759, 664
          %v1843 = vadd.s32 %v1759, 672
          %v1844 = vadd.s32 %v1759, 680
          %v1845 = vadd.s32 %v1759, 688
          %v1846 = vadd.s32 %v1759, 696
          %v1847 = vadd.s32 %v1759, 704
          %v1848 = vadd.s32 %v1759, 712
          %v1849 = vadd.s32 %v1759, 720
          %v1850 = vadd.s32 %v1759, 728
          %v1851 = vadd.s32 %v1759, 736
          %v1852 = vadd.s32 %v1759, 744
          %v1853 = vadd.s32 %v1759, 752
          %v1854 = vadd.s32 %v1759, 760
          %v1855 = vadd.s32 %v1759, 768
          %v1856 = vadd.s32 %v1759, 776
          %v1857 = vadd.s32 %v1759, 784
          %v1858 = vadd.s32 %v1759, 792
          %v1859 = vadd.s32 %v1759, 800
          %v1860 = vadd.s32 %v1759, 808
          %v1861 = vadd.s32 %v1759, 816
          %v1862 = vadd.s32 %v1759, 824
          %v1863 = vadd.s32 %v1759, 832
          %v1864 = vadd.s32 %v1759, 840
          %v1865 = vadd.s32 %v1759, 848
          %v1866 = vadd.s32 %v1759, 856
          %v1867 = vadd.s32 %v1759, 864
          %v1868 = vadd.s32 %v1759, 872
          %v1869 = vadd.s32 %v1759, 880
          %v1870 = vadd.s32 %v1759, 888
          %v1871 = vadd.s32 %v1759, 896
          %v1872 = vadd.s32 %v1759, 904
          %v1873 = vadd.s32 %v1759, 912
          %v1874 = vadd.s32 %v1759, 920
          %v1875 = vadd.s32 %v1759, 928
          %v1876 = vadd.s32 %v1759, 936
          %v1877 = vadd.s32 %v1759, 944
          %v1878 = vadd.s32 %v1759, 952
          %v1879 = vadd.s32 %v1759, 960
          %v1880 = vadd.s32 %v1759, 968
          %v1881 = vadd.s32 %v1759, 976
          %v1882 = vadd.s32 %v1759, 984
          %v1883 = vadd.s32 %v1759, 992
          %v1884 = vadd.s32 %v1759, 1000
          %v1885 = vadd.s32 %v1759, 1008
          %v1886 = vadd.s32 %v1759, 1016
          %v1887 = vadd.s32 %v1759, 1024
          %v1888 = vadd.s32 %v1759, 1032
          %v1889 = vadd.s32 %v1759, 1040
          %v1890 = vadd.s32 %v1759, 1048
          %v1891 = vadd.s32 %v1759, 1056
          %v1892 = vadd.s32 %v1759, 1064
          %v1893 = vadd.s32 %v1759, 1072
          %v1894 = vadd.s32 %v1759, 1080
          %v1895 = vadd.s32 %v1759, 1088
          %v1896 = vadd.s32 %v1759, 1096
          %v1897 = vadd.s32 %v1759, 1104
          %v1898 = vadd.s32 %v1759, 1112
          %v1899 = vadd.s32 %v1759, 1120
          %v1900 = vadd.s32 %v1759, 1128
          %v1901 = vadd.s32 %v1759, 1136
          %v1902 = vadd.s32 %v1759, 1144
          %v1903 = vadd.s32 %v1759, 1152
          %v1904 = vadd.s32 %v1759, 1160
          %v1905 = vadd.s32 %v1759, 1168
          %v1906 = vadd.s32 %v1759, 1176
          %v1907 = vadd.s32 %v1759, 1184
          %v1908 = vadd.s32 %v1759, 1192
          %v1909 = vadd.s32 %v1759, 1200
          %v1910 = vadd.s32 %v1759, 1208
          %v1911 = vadd.s32 %v1759, 1216
          %v1912 = vadd.s32 %v1759, 1224
          %v1913 = vadd.s32 %v1759, 1232
          %v1914 = vadd.s32 %v1759, 1240
          %v1915 = vadd.s32 %v1759, 1248
          %v1916 = vadd.s32 %v1759, 1256
          %v1917 = vadd.s32 %v1759, 1264
          %v1918 = vadd.s32 %v1759, 1272
          %v1919 = vadd.s32 %v1759, 1280
          %v1920 = vadd.s32 %v1759, 1288
          %v1921 = vadd.s32 %v1759, 1296
          %v1922 = vadd.s32 %v1759, 1304
          %v1923 = vadd.s32 %v1759, 1312
          %v1924 = vadd.s32 %v1759, 1320
          %v1925 = vadd.s32 %v1759, 1328
          %v1926 = vadd.s32 %v1759, 1336
          %v1927 = vadd.s32 %v1759, 1344
          %v1928 = vadd.s32 %v1759, 1352
          %v1929 = vadd.s32 %v1759, 1360
          %v1930 = vadd.s32 %v1759, 1368
          %v1931 = vadd.s32 %v1759, 1376
          %v1932 = vadd.s32 %v1759, 1384
          %v1933 = vadd.s32 %v1759, 1392
          %v1934 = vadd.s32 %v1759, 1400
          %v1935 = vadd.s32 %v1759, 1408
          %v1936 = vadd.s32 %v1759, 1416
          %v1937 = vadd.s32 %v1759, 1424
          %v1938 = vadd.s32 %v1759, 1432
          %v1939 = vadd.s32 %v1759, 1440
          %v1940 = vadd.s32 %v1759, 1448
          %v1941 = vadd.s32 %v1759, 1456
          %v1942 = vadd.s32 %v1759, 1464
          %v1943 = vadd.s32 %v1759, 1472
          %v1944 = vadd.s32 %v1759, 1480
          %v1945 = vadd.s32 %v1759, 1488
          %v1946 = vadd.s32 %v1759, 1496
          %v1947 = vadd.s32 %v1759, 1504
          %v1948 = vadd.s32 %v1759, 1512
          %v1949 = vadd.s32 %v1759, 1520
          %v1950 = vadd.s32 %v1759, 1528
          %v1951 = vadd.s32 %v1759, 1536
          %v1952 = vadd.s32 %v1759, 1544
          %v1953 = vadd.s32 %v1759, 1552
          %v1954 = vadd.s32 %v1759, 1560
          %v1955 = vadd.s32 %v1759, 1568
          %v1956 = vadd.s32 %v1759, 1576
          %v1957 = vadd.s32 %v1759, 1584
          %v1958 = vadd.s32 %v1759, 1592
          %v1959 = vadd.s32 %v1759, 1600
          %v1960 = vadd.s32 %v1759, 1608
          %v1961 = vadd.s32 %v1759, 1616
          %v1962 = vadd.s32 %v1759, 1624
          %v1963 = vadd.s32 %v1759, 1632
          %v1964 = vadd.s32 %v1759, 1640
          %v1965 = vadd.s32 %v1759, 1648
          %v1966 = vadd.s32 %v1759, 1656
          %v1967 = vadd.s32 %v1759, 1664
          %v1968 = vadd.s32 %v1759, 1672
          %v1969 = vadd.s32 %v1759, 1680
          %v1970 = vadd.s32 %v1759, 1688
          %v1971 = vadd.s32 %v1759, 1696
          %v1972 = vadd.s32 %v1759, 1704
          %v1973 = vadd.s32 %v1759, 1712
          %v1974 = vadd.s32 %v1759, 1720
          %v1975 = vadd.s32 %v1759, 1728
          %v1976 = vadd.s32 %v1759, 1736
          %v1977 = vadd.s32 %v1759, 1744
          %v1978 = vadd.s32 %v1759, 1752
          %v1979 = vadd.s32 %v1759, 1760
          %v1980 = vadd.s32 %v1759, 1768
          %v1981 = vadd.s32 %v1759, 1776
          %v1982 = vadd.s32 %v1759, 1784
          %v1983 = vadd.s32 %v1759, 1792
          %v1984 = vadd.s32 %v1759, 1800
          %v1985 = vadd.s32 %v1759, 1808
          %v1986 = vadd.s32 %v1759, 1816
          %v1987 = vadd.s32 %v1759, 1824
          %v1988 = vadd.s32 %v1759, 1832
          %v1989 = vadd.s32 %v1759, 1840
          %v1990 = vadd.s32 %v1759, 1848
          %v1991 = vadd.s32 %v1759, 1856
          %v1992 = vadd.s32 %v1759, 1864
          %v1993 = vadd.s32 %v1759, 1872
          %v1994 = vadd.s32 %v1759, 1880
          %v1995 = vadd.s32 %v1759, 1888
          %v1996 = vadd.s32 %v1759, 1896
          %v1997 = vadd.s32 %v1759, 1904
          %v1998 = vadd.s32 %v1759, 1912
          %v1999 = vadd.s32 %v1759, 1920
          %v2000 = vadd.s32 %v1759, 1928
          %v2001 = vadd.s32 %v1759, 1936
          %v2002 = vadd.s32 %v1759, 1944
          %v2003 = vadd.s32 %v1759, 1952
          %v2004 = vadd.s32 %v1759, 1960
          %v2005 = vadd.s32 %v1759, 1968
          %v2006 = vadd.s32 %v1759, 1976
          %v2007 = vadd.s32 %v1759, 1984
          %v2008 = vadd.s32 %v1759, 1992
          %v2009 = vadd.s32 %v1759, 2000
          %v2010 = vadd.s32 %v1759, 2008
          %v2011 = vadd.s32 %v1759, 2016
          %v2012 = vadd.s32 %v1759, 2024
          %v2013 = vadd.s32 %v1759, 2032
          %v2014 = vadd.s32 %v1759, 2040
          %v2015 = vadd.s32 %v1759, 2048
          %v2016 = vadd.s32 %v1759, 2056
          %v2017 = vadd.s32 %v1759, 2064
          %v2018 = vadd.s32 %v1759, 2072
          %v2019 = vadd.s32 %v1759, 2080
          %v2020 = vadd.s32 %v1759, 2088
          %v2021 = vadd.s32 %v1759, 2096
          %v2022 = vadd.s32 %v1759, 2104
          %v2023 = vadd.s32 %v1759, 2112
          %v2024 = vadd.s32 %v1759, 2120
          %v2025 = vadd.s32 %v1759, 2128
          %v2026 = vadd.s32 %v1759, 2136
          %v2027 = vadd.s32 %v1759, 2144
          %v2028 = vadd.s32 %v1759, 2152
          %v2029 = vadd.s32 %v1759, 2160
          %v2030 = vadd.s32 %v1759, 2168
          %v2031 = vadd.s32 %v1759, 2176
          %v2032 = vadd.s32 %v1759, 2184
          %v2033 = vadd.s32 %v1759, 2192
          %v2034 = vadd.s32 %v1759, 2200
          %v2035 = vadd.s32 %v1759, 2208
          %v2036 = vadd.s32 %v1759, 2216
          %v2037 = vadd.s32 %v1759, 2224
          %v2038 = vadd.s32 %v1759, 2232
          %v2039 = vadd.s32 %v1759, 2240
          %v2040 = vadd.s32 %v1759, 2248
          %v2041 = vadd.s32 %v1759, 2256
          %v2042 = vadd.s32 %v1759, 2264
          %v2043 = vadd.s32 %v1759, 2272
          %v2044 = vadd.s32 %v1759, 2280
          %v2045 = vadd.s32 %v1759, 2288
          %v2046 = vadd.s32 %v1759, 2296
          %v2047 = vadd.s32 %v1759, 2304
          %v2048 = vadd.s32 %v1759, 2312
          %v2049 = vadd.s32 %v1759, 2320
          %v2050 = vadd.s32 %v1759, 2328
          %v2051 = vadd.s32 %v1759, 2336
          %v2052 = vadd.s32 %v1759, 2344
          %v2053 = vadd.s32 %v1759, 2352
          %v2054 = vadd.s32 %v1759, 2360
          %v2055 = vadd.s32 %v1759, 2368
          %v2056 = vadd.s32 %v1759, 2376
          %v2057 = vadd.s32 %v1759, 2384
          %v2058 = vadd.s32 %v1759, 2392
          %v2059 = vadd.s32 %v1759, 2400
          %v2060 = vadd.s32 %v1759, 2408
          %v2061 = vadd.s32 %v1759, 2416
          %v2062 = vadd.s32 %v1759, 2424
          %v2063 = vadd.s32 %v1759, 2432
          %v2064 = vadd.s32 %v1759, 2440
          %v2065 = vadd.s32 %v1759, 2448
          %v2066 = vadd.s32 %v1759, 2456
          %v2067 = vadd.s32 %v1759, 2464
          %v2068 = vadd.s32 %v1759, 2472
          %v2069 = vadd.s32 %v1759, 2480
          %v2070 = vadd.s32 %v1759, 2488
          %v2071 = vadd.s32 %v1759, 2496
          %v2072 = vadd.s32 %v1759, 2504
          %v2073 = vadd.s32 %v1759, 2512
          %v2074 = vadd.s32 %v1759, 2520
          %v2075 = vadd.s32 %v1759, 2528
          %v2076 = vadd.s32 %v1759, 2536
          %v2077 = vadd.s32 %v1759, 2544
          %v2078 = vadd.s32 %v1759, 2552
          %v2079 = vadd.s32 %v1759, 2560
          %v2080 = vadd.s32 %v1759, 2568
          %v2081 = vadd.s32 %v1759, 2576
          %v2082 = vadd.s32 %v1759, 2584
          %v2083 = vadd.s32 %v1759, 2592
          %v2084 = vadd.s32 %v1759, 2600
          %v2085 = vadd.s32 %v1759, 2608
          %v2086 = vadd.s32 %v1759, 2616
          %v2087 = vadd.s32 %v1759, 2624
          %v2088 = vadd.s32 %v1759, 2632
          %v2089 = vadd.s32 %v1759, 2640
          %v2090 = vadd.s32 %v1759, 2648
          %v2091 = vadd.s32 %v1759, 2656
          %v2092 = vadd.s32 %v1759, 2664
          %v2093 = vadd.s32 %v1759, 2672
          %v2094 = vadd.s32 %v1759, 2680
          %v2095 = vadd.s32 %v1759, 2688
          %v2096 = vadd.s32 %v1759, 2696
          %v2097 = vadd.s32 %v1759, 2704
          %v2098 = vadd.s32 %v1759, 2712
          %v2099 = vadd.s32 %v1759, 2720
          %v2100 = vadd.s32 %v1759, 2728
          %v2101 = vadd.s32 %v1759, 2736
          %v2102 = vadd.s32 %v1759, 2744
          %v2103 = vadd.s32 %v1759, 2752
          %v2104 = vadd.s32 %v1759, 2760
          %v2105 = vadd.s32 %v1759, 2768
          %v2106 = vadd.s32 %v1759, 2776
          %v2107 = vadd.s32 %v1759, 2784
          %v2108 = vadd.s32 %v1759, 2792
          %v2109 = vadd.s32 %v1759, 2800
          %v2110 = vadd.s32 %v1759, 2808
          %v2111 = vadd.s32 %v1759, 2816
          %v2112 = vadd.s32 %v1759, 2824
          %v2113 = vadd.s32 %v1759, 2832
          %v2114 = vadd.s32 %v1759, 2840
          %v2115 = vadd.s32 %v1759, 2848
          %v2116 = vadd.s32 %v1759, 2856
          %v2117 = vadd.s32 %v1759, 2864
          %v2118 = vadd.s32 %v1759, 2872
          %v2119 = vadd.s32 %v1759, 2880
          %v2120 = vadd.s32 %v1759, 2888
          %v2121 = vadd.s32 %v1759, 2896
          %v2122 = vadd.s32 %v1759, 2904
          %v2123 = vadd.s32 %v1759, 2912
          %v2124 = vadd.s32 %v1759, 2920
          %v2125 = vadd.s32 %v1759, 2928
          %v2126 = vadd.s32 %v1759, 2936
          %v2127 = vadd.s32 %v1759, 2944
          %v2128 = vadd.s32 %v1759, 2952
          %v2129 = vadd.s32 %v1759, 2960
          %v2130 = vadd.s32 %v1759, 2968
          %v2131 = vadd.s32 %v1759, 2976
          %v2132 = vadd.s32 %v1759, 2984
          %v2133 = vadd.s32 %v1759, 2992
          %v2134 = vadd.s32 %v1759, 3000
          %v2135 = vadd.s32 %v1759, 3008
          %v2136 = vadd.s32 %v1759, 3016
          %v2137 = vadd.s32 %v1759, 3024
          %v2138 = vadd.s32 %v1759, 3032
          %v2139 = vadd.s32 %v1759, 3040
          %v2140 = vadd.s32 %v1759, 3048
          %v2141 = vadd.s32 %v1759, 3056
          %v2142 = vadd.s32 %v1759, 3064
          %v2143 = vadd.s32 %v1759, 3072
          %v2144 = vadd.s32 %v1759, 3080
          %v2145 = vadd.s32 %v1759, 3088
          %v2146 = vadd.s32 %v1759, 3096
          %v2147 = vadd.s32 %v1759, 3104
          %v2148 = vadd.s32 %v1759, 3112
          %v2149 = vadd.s32 %v1759, 3120
          %v2150 = vadd.s32 %v1759, 3128
          %v2151 = vadd.s32 %v1759, 3136
          %v2152 = vadd.s32 %v1759, 3144
          %v2153 = vadd.s32 %v1759, 3152
          %v2154 = vadd.s32 %v1759, 3160
          %v2155 = vadd.s32 %v1759, 3168
          %v2156 = vadd.s32 %v1759, 3176
          %v2157 = vadd.s32 %v1759, 3184
          %v2158 = vadd.s32 %v1759, 3192
          %v2159 = vadd.s32 %v1759, 3200
          %v2160 = vadd.s32 %v1759, 3208
          %v2161 = vadd.s32 %v1759, 3216
          %v2162 = vadd.s32 %v1759, 3224
          %v2163 = vadd.s32 %v1759, 3232
          %v2164 = vadd.s32 %v1759, 3240
          %v2165 = vadd.s32 %v1759, 3248
          %v2166 = vadd.s32 %v1759, 3256
          %v2167 = vadd.s32 %v1759, 3264
          %v2168 = vadd.s32 %v1759, 3272
          %v2169 = vadd.s32 %v1759, 3280
          %v2170 = vadd.s32 %v1759, 3288
          %v2171 = vadd.s32 %v1759, 3296
          %v2172 = vadd.s32 %v1759, 3304
          %v2173 = vadd.s32 %v1759, 3312
          %v2174 = vadd.s32 %v1759, 3320
          %v2175 = vadd.s32 %v1759, 3328
          %v2176 = vadd.s32 %v1759, 3336
          %v2177 = vadd.s32 %v1759, 3344
          %v2178 = vadd.s32 %v1759, 3352
          %v2179 = vadd.s32 %v1759, 3360
          %v2180 = vadd.s32 %v1759, 3368
          %v2181 = vadd.s32 %v1759, 3376
          %v2182 = vadd.s32 %v1759, 3384
          %v2183 = vadd.s32 %v1759, 3392
          %v2184 = vadd.s32 %v1759, 3400
          %v2185 = vadd.s32 %v1759, 3408
          %v2186 = vadd.s32 %v1759, 3416
          %v2187 = vadd.s32 %v1759, 3424
          %v2188 = vadd.s32 %v1759, 3432
          %v2189 = vadd.s32 %v1759, 3440
          %v2190 = vadd.s32 %v1759, 3448
          %v2191 = vadd.s32 %v1759, 3456
          %v2192 = vadd.s32 %v1759, 3464
          %v2193 = vadd.s32 %v1759, 3472
          %v2194 = vadd.s32 %v1759, 3480
          %v2195 = vadd.s32 %v1759, 3488
          %v2196 = vadd.s32 %v1759, 3496
          %v2197 = vadd.s32 %v1759, 3504
          %v2198 = vadd.s32 %v1759, 3512
          %v2199 = vadd.s32 %v1759, 3520
          %v2200 = vadd.s32 %v1759, 3528
          %v2201 = vadd.s32 %v1759, 3536
          %v2202 = vadd.s32 %v1759, 3544
          %v2203 = vadd.s32 %v1759, 3552
          %v2204 = vadd.s32 %v1759, 3560
          %v2205 = vadd.s32 %v1759, 3568
          %v2206 = vadd.s32 %v1759, 3576
          %v2207 = vadd.s32 %v1759, 3584
          %v2208 = vadd.s32 %v1759, 3592
          %v2209 = vadd.s32 %v1759, 3600
          %v2210 = vadd.s32 %v1759, 3608
          %v2211 = vadd.s32 %v1759, 3616
          %v2212 = vadd.s32 %v1759, 3624
          %v2213 = vadd.s32 %v1759, 3632
          %v2214 = vadd.s32 %v1759, 3640
          %v2215 = vadd.s32 %v1759, 3648
          %v2216 = vadd.s32 %v1759, 3656
          %v2217 = vadd.s32 %v1759, 3664
          %v2218 = vadd.s32 %v1759, 3672
          %v2219 = vadd.s32 %v1759, 3680
          %v2220 = vadd.s32 %v1759, 3688
          %v2221 = vadd.s32 %v1759, 3696
          %v2222 = vadd.s32 %v1759, 3704
          %v2223 = vadd.s32 %v1759, 3712
          %v2224 = vadd.s32 %v1759, 3720
          %v2225 = vadd.s32 %v1759, 3728
          %v2226 = vadd.s32 %v1759, 3736
          %v2227 = vadd.s32 %v1759, 3744
          %v2228 = vadd.s32 %v1759, 3752
          %v2229 = vadd.s32 %v1759, 3760
          %v2230 = vadd.s32 %v1759, 3768
          %v2231 = vadd.s32 %v1759, 3776
          %v2232 = vadd.s32 %v1759, 3784
          %v2233 = vadd.s32 %v1759, 3792
          %v2234 = vadd.s32 %v1759, 3800
          %v2235 = vadd.s32 %v1759, 3808
          %v2236 = vadd.s32 %v1759, 3816
          %v2237 = vadd.s32 %v1759, 3824
          %v2238 = vadd.s32 %v1759, 3832
          %v2239 = vadd.s32 %v1759, 3840
          %v2240 = vadd.s32 %v1759, 3848
          %v2241 = vadd.s32 %v1759, 3856
          %v2242 = vadd.s32 %v1759, 3864
          %v2243 = vadd.s32 %v1759, 3872
          %v2244 = vadd.s32 %v1759, 3880
          %v2245 = vadd.s32 %v1759, 3888
          %v2246 = vadd.s32 %v1759, 3896
          %v2247 = vadd.s32 %v1759, 3904
          %v2248 = vadd.s32 %v1759, 3912
          %v2249 = vadd.s32 %v1759, 3920
          %v2250 = vadd.s32 %v1759, 3928
          %v2251 = vadd.s32 %v1759, 3936
          %v2252 = vadd.s32 %v1759, 3944
          %v2253 = vadd.s32 %v1759, 3952
          %v2254 = vadd.s32 %v1759, 3960
          %v2255 = vadd.s32 %v1759, 3968
          %v2256 = vadd.s32 %v1759, 3976
          %v2257 = vadd.s32 %v1759, 3984
          %v2258 = vadd.s32 %v1759, 3992
          %v2259 = vadd.s32 %v1759, 4000
          %v2260 = vadd.s32 %v1759, 4008
          %v2261 = vadd.s32 %v1759, 4016
          %v2262 = vadd.s32 %v1759, 4024
          %v2263 = vadd.s32 %v1759, 4032
          %v2264 = vadd.s32 %v1759, 4040
          %v2265 = vadd.s32 %v1759, 4048
          %v2266 = vadd.s32 %v1759, 4056
          %v2267 = vadd.s32 %v1759, 4064
          %v2268 = vadd.s32 %v1759, 4072
          %v2269 = vadd.s32 %v1759, 4080
          %v2270 = vadd.s32 %v1759, 4088
          %v2271 = vstv %s1757
          %v2272 = vadd.s32 %v2271, %v1759
          %v2273 = vadd.s32 %v2271, %v1760
          %v2274 = vadd.s32 %v2271, %v1761
          %v2275 = vadd.s32 %v2271, %v1762
          %v2276 = vadd.s32 %v2271, %v1763
          %v2277 = vadd.s32 %v2271, %v1764
          %v2278 = vadd.s32 %v2271, %v1765
          %v2279 = vadd.s32 %v2271, %v1766
          %v2280 = vadd.s32 %v2271, %v1767
          %v2281 = vadd.s32 %v2271, %v1768
          %v2282 = vadd.s32 %v2271, %v1769
          %v2283 = vadd.s32 %v2271, %v1770
          %v2284 = vadd.s32 %v2271, %v1771
          %v2285 = vadd.s32 %v2271, %v1772
          %v2286 = vadd.s32 %v2271, %v1773
          %v2287 = vadd.s32 %v2271, %v1774
          %v2288 = vadd.s32 %v2271, %v1775
          %v2289 = vadd.s32 %v2271, %v1776
          %v2290 = vadd.s32 %v2271, %v1777
          %v2291 = vadd.s32 %v2271, %v1778
          %v2292 = vadd.s32 %v2271, %v1779
          %v2293 = vadd.s32 %v2271, %v1780
          %v2294 = vadd.s32 %v2271, %v1781
          %v2295 = vadd.s32 %v2271, %v1782
          %v2296 = vadd.s32 %v2271, %v1783
          %v2297 = vadd.s32 %v2271, %v1784
          %v2298 = vadd.s32 %v2271, %v1785
          %v2299 = vadd.s32 %v2271, %v1786
          %v2300 = vadd.s32 %v2271, %v1787
          %v2301 = vadd.s32 %v2271, %v1788
          %v2302 = vadd.s32 %v2271, %v1789
          %v2303 = vadd.s32 %v2271, %v1790
          %v2304 = vadd.s32 %v2271, %v1791
          %v2305 = vadd.s32 %v2271, %v1792
          %v2306 = vadd.s32 %v2271, %v1793
          %v2307 = vadd.s32 %v2271, %v1794
          %v2308 = vadd.s32 %v2271, %v1795
          %v2309 = vadd.s32 %v2271, %v1796
          %v2310 = vadd.s32 %v2271, %v1797
          %v2311 = vadd.s32 %v2271, %v1798
          %v2312 = vadd.s32 %v2271, %v1799
          %v2313 = vadd.s32 %v2271, %v1800
          %v2314 = vadd.s32 %v2271, %v1801
          %v2315 = vadd.s32 %v2271, %v1802
          %v2316 = vadd.s32 %v2271, %v1803
          %v2317 = vadd.s32 %v2271, %v1804
          %v2318 = vadd.s32 %v2271, %v1805
          %v2319 = vadd.s32 %v2271, %v1806
          %v2320 = vadd.s32 %v2271, %v1807
          %v2321 = vadd.s32 %v2271, %v1808
          %v2322 = vadd.s32 %v2271, %v1809
          %v2323 = vadd.s32 %v2271, %v1810
          %v2324 = vadd.s32 %v2271, %v1811
          %v2325 = vadd.s32 %v2271, %v1812
          %v2326 = vadd.s32 %v2271, %v1813
          %v2327 = vadd.s32 %v2271, %v1814
          %v2328 = vadd.s32 %v2271, %v1815
          %v2329 = vadd.s32 %v2271, %v1816
          %v2330 = vadd.s32 %v2271, %v1817
          %v2331 = vadd.s32 %v2271, %v1818
          %v2332 = vadd.s32 %v2271, %v1819
          %v2333 = vadd.s32 %v2271, %v1820
          %v2334 = vadd.s32 %v2271, %v1821
          %v2335 = vadd.s32 %v2271, %v1822
          %v2336 = vadd.s32 %v2271, %v1823
          %v2337 = vadd.s32 %v2271, %v1824
          %v2338 = vadd.s32 %v2271, %v1825
          %v2339 = vadd.s32 %v2271, %v1826
          %v2340 = vadd.s32 %v2271, %v1827
          %v2341 = vadd.s32 %v2271, %v1828
          %v2342 = vadd.s32 %v2271, %v1829
          %v2343 = vadd.s32 %v2271, %v1830
          %v2344 = vadd.s32 %v2271, %v1831
          %v2345 = vadd.s32 %v2271, %v1832
          %v2346 = vadd.s32 %v2271, %v1833
          %v2347 = vadd.s32 %v2271, %v1834
          %v2348 = vadd.s32 %v2271, %v1835
          %v2349 = vadd.s32 %v2271, %v1836
          %v2350 = vadd.s32 %v2271, %v1837
          %v2351 = vadd.s32 %v2271, %v1838
          %v2352 = vadd.s32 %v2271, %v1839
          %v2353 = vadd.s32 %v2271, %v1840
          %v2354 = vadd.s32 %v2271, %v1841
          %v2355 = vadd.s32 %v2271, %v1842
          %v2356 = vadd.s32 %v2271, %v1843
          %v2357 = vadd.s32 %v2271, %v1844
          %v2358 = vadd.s32 %v2271, %v1845
          %v2359 = vadd.s32 %v2271, %v1846
          %v2360 = vadd.s32 %v2271, %v1847
          %v2361 = vadd.s32 %v2271, %v1848
          %v2362 = vadd.s32 %v2271, %v1849
          %v2363 = vadd.s32 %v2271, %v1850
          %v2364 = vadd.s32 %v2271, %v1851
          %v2365 = vadd.s32 %v2271, %v1852
          %v2366 = vadd.s32 %v2271, %v1853
          %v2367 = vadd.s32 %v2271, %v1854
          %v2368 = vadd.s32 %v2271, %v1855
          %v2369 = vadd.s32 %v2271, %v1856
          %v2370 = vadd.s32 %v2271, %v1857
          %v2371 = vadd.s32 %v2271, %v1858
          %v2372 = vadd.s32 %v2271, %v1859
          %v2373 = vadd.s32 %v2271, %v1860
          %v2374 = vadd.s32 %v2271, %v1861
          %v2375 = vadd.s32 %v2271, %v1862
          %v2376 = vadd.s32 %v2271, %v1863
          %v2377 = vadd.s32 %v2271, %v1864
          %v2378 = vadd.s32 %v2271, %v1865
          %v2379 = vadd.s32 %v2271, %v1866
          %v2380 = vadd.s32 %v2271, %v1867
          %v2381 = vadd.s32 %v2271, %v1868
          %v2382 = vadd.s32 %v2271, %v1869
          %v2383 = vadd.s32 %v2271, %v1870
          %v2384 = vadd.s32 %v2271, %v1871
          %v2385 = vadd.s32 %v2271, %v1872
          %v2386 = vadd.s32 %v2271, %v1873
          %v2387 = vadd.s32 %v2271, %v1874
          %v2388 = vadd.s32 %v2271, %v1875
          %v2389 = vadd.s32 %v2271, %v1876
          %v2390 = vadd.s32 %v2271, %v1877
          %v2391 = vadd.s32 %v2271, %v1878
          %v2392 = vadd.s32 %v2271, %v1879
          %v2393 = vadd.s32 %v2271, %v1880
          %v2394 = vadd.s32 %v2271, %v1881
          %v2395 = vadd.s32 %v2271, %v1882
          %v2396 = vadd.s32 %v2271, %v1883
          %v2397 = vadd.s32 %v2271, %v1884
          %v2398 = vadd.s32 %v2271, %v1885
          %v2399 = vadd.s32 %v2271, %v1886
          %v2400 = vadd.s32 %v2271, %v1887
          %v2401 = vadd.s32 %v2271, %v1888
          %v2402 = vadd.s32 %v2271, %v1889
          %v2403 = vadd.s32 %v2271, %v1890
          %v2404 = vadd.s32 %v2271, %v1891
          %v2405 = vadd.s32 %v2271, %v1892
          %v2406 = vadd.s32 %v2271, %v1893
          %v2407 = vadd.s32 %v2271, %v1894
          %v2408 = vadd.s32 %v2271, %v1895
          %v2409 = vadd.s32 %v2271, %v1896
          %v2410 = vadd.s32 %v2271, %v1897
          %v2411 = vadd.s32 %v2271, %v1898
          %v2412 = vadd.s32 %v2271, %v1899
          %v2413 = vadd.s32 %v2271, %v1900
          %v2414 = vadd.s32 %v2271, %v1901
          %v2415 = vadd.s32 %v2271, %v1902
          %v2416 = vadd.s32 %v2271, %v1903
          %v2417 = vadd.s32 %v2271, %v1904
          %v2418 = vadd.s32 %v2271, %v1905
          %v2419 = vadd.s32 %v2271, %v1906
          %v2420 = vadd.s32 %v2271, %v1907
          %v2421 = vadd.s32 %v2271, %v1908
          %v2422 = vadd.s32 %v2271, %v1909
          %v2423 = vadd.s32 %v2271, %v1910
          %v2424 = vadd.s32 %v2271, %v1911
          %v2425 = vadd.s32 %v2271, %v1912
          %v2426 = vadd.s32 %v2271, %v1913
          %v2427 = vadd.s32 %v2271, %v1914
          %v2428 = vadd.s32 %v2271, %v1915
          %v2429 = vadd.s32 %v2271, %v1916
          %v2430 = vadd.s32 %v2271, %v1917
          %v2431 = vadd.s32 %v2271, %v1918
          %v2432 = vadd.s32 %v2271, %v1919
          %v2433 = vadd.s32 %v2271, %v1920
          %v2434 = vadd.s32 %v2271, %v1921
          %v2435 = vadd.s32 %v2271, %v1922
          %v2436 = vadd.s32 %v2271, %v1923
          %v2437 = vadd.s32 %v2271, %v1924
          %v2438 = vadd.s32 %v2271, %v1925
          %v2439 = vadd.s32 %v2271, %v1926
          %v2440 = vadd.s32 %v2271, %v1927
          %v2441 = vadd.s32 %v2271, %v1928
          %v2442 = vadd.s32 %v2271, %v1929
          %v2443 = vadd.s32 %v2271, %v1930
          %v2444 = vadd.s32 %v2271, %v1931
          %v2445 = vadd.s32 %v2271, %v1932
          %v2446 = vadd.s32 %v2271, %v1933
          %v2447 = vadd.s32 %v2271, %v1934
          %v2448 = vadd.s32 %v2271, %v1935
          %v2449 = vadd.s32 %v2271, %v1936
          %v2450 = vadd.s32 %v2271, %v1937
          %v2451 = vadd.s32 %v2271, %v1938
          %v2452 = vadd.s32 %v2271, %v1939
          %v2453 = vadd.s32 %v2271, %v1940
          %v2454 = vadd.s32 %v2271, %v1941
          %v2455 = vadd.s32 %v2271, %v1942
          %v2456 = vadd.s32 %v2271, %v1943
          %v2457 = vadd.s32 %v2271, %v1944
          %v2458 = vadd.s32 %v2271, %v1945
          %v2459 = vadd.s32 %v2271, %v1946
          %v2460 = vadd.s32 %v2271, %v1947
          %v2461 = vadd.s32 %v2271, %v1948
          %v2462 = vadd.s32 %v2271, %v1949
          %v2463 = vadd.s32 %v2271, %v1950
          %v2464 = vadd.s32 %v2271, %v1951
          %v2465 = vadd.s32 %v2271, %v1952
          %v2466 = vadd.s32 %v2271, %v1953
          %v2467 = vadd.s32 %v2271, %v1954
          %v2468 = vadd.s32 %v2271, %v1955
          %v2469 = vadd.s32 %v2271, %v1956
          %v2470 = vadd.s32 %v2271, %v1957
          %v2471 = vadd.s32 %v2271, %v1958
          %v2472 = vadd.s32 %v2271, %v1959
          %v2473 = vadd.s32 %v2271, %v1960
          %v2474 = vadd.s32 %v2271, %v1961
          %v2475 = vadd.s32 %v2271, %v1962
          %v2476 = vadd.s32 %v2271, %v1963
          %v2477 = vadd.s32 %v2271, %v1964
          %v2478 = vadd.s32 %v2271, %v1965
          %v2479 = vadd.s32 %v2271, %v1966
          %v2480 = vadd.s32 %v2271, %v1967
          %v2481 = vadd.s32 %v2271, %v1968
          %v2482 = vadd.s32 %v2271, %v1969
          %v2483 = vadd.s32 %v2271, %v1970
          %v2484 = vadd.s32 %v2271, %v1971
          %v2485 = vadd.s32 %v2271, %v1972
          %v2486 = vadd.s32 %v2271, %v1973
          %v2487 = vadd.s32 %v2271, %v1974
          %v2488 = vadd.s32 %v2271, %v1975
          %v2489 = vadd.s32 %v2271, %v1976
          %v2490 = vadd.s32 %v2271, %v1977
          %v2491 = vadd.s32 %v2271, %v1978
          %v2492 = vadd.s32 %v2271, %v1979
          %v2493 = vadd.s32 %v2271, %v1980
          %v2494 = vadd.s32 %v2271, %v1981
          %v2495 = vadd.s32 %v2271, %v1982
          %v2496 = vadd.s32 %v2271, %v1983
          %v2497 = vadd.s32 %v2271, %v1984
          %v2498 = vadd.s32 %v2271, %v1985
          %v2499 = vadd.s32 %v2271, %v1986
          %v2500 = vadd.s32 %v2271, %v1987
          %v2501 = vadd.s32 %v2271, %v1988
          %v2502 = vadd.s32 %v2271, %v1989
          %v2503 = vadd.s32 %v2271, %v1990
          %v2504 = vadd.s32 %v2271, %v1991
          %v2505 = vadd.s32 %v2271, %v1992
          %v2506 = vadd.s32 %v2271, %v1993
          %v2507 = vadd.s32 %v2271, %v1994
          %v2508 = vadd.s32 %v2271, %v1995
          %v2509 = vadd.s32 %v2271, %v1996
          %v2510 = vadd.s32 %v2271, %v1997
          %v2511 = vadd.s32 %v2271, %v1998
          %v2512 = vadd.s32 %v2271, %v1999
          %v2513 = vadd.s32 %v2271, %v2000
          %v2514 = vadd.s32 %v2271, %v2001
          %v2515 = vadd.s32 %v2271, %v2002
          %v2516 = vadd.s32 %v2271, %v2003
          %v2517 = vadd.s32 %v2271, %v2004
          %v2518 = vadd.s32 %v2271, %v2005
          %v2519 = vadd.s32 %v2271, %v2006
          %v2520 = vadd.s32 %v2271, %v2007
          %v2521 = vadd.s32 %v2271, %v2008
          %v2522 = vadd.s32 %v2271, %v2009
          %v2523 = vadd.s32 %v2271, %v2010
          %v2524 = vadd.s32 %v2271, %v2011
          %v2525 = vadd.s32 %v2271, %v2012
          %v2526 = vadd.s32 %v2271, %v2013
          %v2527 = vadd.s32 %v2271, %v2014
          %v2528 = vadd.s32 %v2271, %v2015
          %v2529 = vadd.s32 %v2271, %v2016
          %v2530 = vadd.s32 %v2271, %v2017
          %v2531 = vadd.s32 %v2271, %v2018
          %v2532 = vadd.s32 %v2271, %v2019
          %v2533 = vadd.s32 %v2271, %v2020
          %v2534 = vadd.s32 %v2271, %v2021
          %v2535 = vadd.s32 %v2271, %v2022
          %v2536 = vadd.s32 %v2271, %v2023
          %v2537 = vadd.s32 %v2271, %v2024
          %v2538 = vadd.s32 %v2271, %v2025
          %v2539 = vadd.s32 %v2271, %v2026
          %v2540 = vadd.s32 %v2271, %v2027
          %v2541 = vadd.s32 %v2271, %v2028
          %v2542 = vadd.s32 %v2271, %v2029
          %v2543 = vadd.s32 %v2271, %v2030
          %v2544 = vadd.s32 %v2271, %v2031
          %v2545 = vadd.s32 %v2271, %v2032
          %v2546 = vadd.s32 %v2271, %v2033
          %v2547 = vadd.s32 %v2271, %v2034
          %v2548 = vadd.s32 %v2271, %v2035
          %v2549 = vadd.s32 %v2271, %v2036
          %v2550 = vadd.s32 %v2271, %v2037
          %v2551 = vadd.s32 %v2271, %v2038
          %v2552 = vadd.s32 %v2271, %v2039
          %v2553 = vadd.s32 %v2271, %v2040
          %v2554 = vadd.s32 %v2271, %v2041
          %v2555 = vadd.s32 %v2271, %v2042
          %v2556 = vadd.s32 %v2271, %v2043
          %v2557 = vadd.s32 %v2271, %v2044
          %v2558 = vadd.s32 %v2271, %v2045
          %v2559 = vadd.s32 %v2271, %v2046
          %v2560 = vadd.s32 %v2271, %v2047
          %v2561 = vadd.s32 %v2271, %v2048
          %v2562 = vadd.s32 %v2271, %v2049
          %v2563 = vadd.s32 %v2271, %v2050
          %v2564 = vadd.s32 %v2271, %v2051
          %v2565 = vadd.s32 %v2271, %v2052
          %v2566 = vadd.s32 %v2271, %v2053
          %v2567 = vadd.s32 %v2271, %v2054
          %v2568 = vadd.s32 %v2271, %v2055
          %v2569 = vadd.s32 %v2271, %v2056
          %v2570 = vadd.s32 %v2271, %v2057
          %v2571 = vadd.s32 %v2271, %v2058
          %v2572 = vadd.s32 %v2271, %v2059
          %v2573 = vadd.s32 %v2271, %v2060
          %v2574 = vadd.s32 %v2271, %v2061
          %v2575 = vadd.s32 %v2271, %v2062
          %v2576 = vadd.s32 %v2271, %v2063
          %v2577 = vadd.s32 %v2271, %v2064
          %v2578 = vadd.s32 %v2271, %v2065
          %v2579 = vadd.s32 %v2271, %v2066
          %v2580 = vadd.s32 %v2271, %v2067
          %v2581 = vadd.s32 %v2271, %v2068
          %v2582 = vadd.s32 %v2271, %v2069
          %v2583 = vadd.s32 %v2271, %v2070
          %v2584 = vadd.s32 %v2271, %v2071
          %v2585 = vadd.s32 %v2271, %v2072
          %v2586 = vadd.s32 %v2271, %v2073
          %v2587 = vadd.s32 %v2271, %v2074
          %v2588 = vadd.s32 %v2271, %v2075
          %v2589 = vadd.s32 %v2271, %v2076
          %v2590 = vadd.s32 %v2271, %v2077
          %v2591 = vadd.s32 %v2271, %v2078
          %v2592 = vadd.s32 %v2271, %v2079
          %v2593 = vadd.s32 %v2271, %v2080
          %v2594 = vadd.s32 %v2271, %v2081
          %v2595 = vadd.s32 %v2271, %v2082
          %v2596 = vadd.s32 %v2271, %v2083
          %v2597 = vadd.s32 %v2271, %v2084
          %v2598 = vadd.s32 %v2271, %v2085
          %v2599 = vadd.s32 %v2271, %v2086
          %v2600 = vadd.s32 %v2271, %v2087
          %v2601 = vadd.s32 %v2271, %v2088
          %v2602 = vadd.s32 %v2271, %v2089
          %v2603 = vadd.s32 %v2271, %v2090
          %v2604 = vadd.s32 %v2271, %v2091
          %v2605 = vadd.s32 %v2271, %v2092
          %v2606 = vadd.s32 %v2271, %v2093
          %v2607 = vadd.s32 %v2271, %v2094
          %v2608 = vadd.s32 %v2271, %v2095
          %v2609 = vadd.s32 %v2271, %v2096
          %v2610 = vadd.s32 %v2271, %v2097
          %v2611 = vadd.s32 %v2271, %v2098
          %v2612 = vadd.s32 %v2271, %v2099
          %v2613 = vadd.s32 %v2271, %v2100
          %v2614 = vadd.s32 %v2271, %v2101
          %v2615 = vadd.s32 %v2271, %v2102
          %v2616 = vadd.s32 %v2271, %v2103
          %v2617 = vadd.s32 %v2271, %v2104
          %v2618 = vadd.s32 %v2271, %v2105
          %v2619 = vadd.s32 %v2271, %v2106
          %v2620 = vadd.s32 %v2271, %v2107
          %v2621 = vadd.s32 %v2271, %v2108
          %v2622 = vadd.s32 %v2271, %v2109
          %v2623 = vadd.s32 %v2271, %v2110
          %v2624 = vadd.s32 %v2271, %v2111
          %v2625 = vadd.s32 %v2271, %v2112
          %v2626 = vadd.s32 %v2271, %v2113
          %v2627 = vadd.s32 %v2271, %v2114
          %v2628 = vadd.s32 %v2271, %v2115
          %v2629 = vadd.s32 %v2271, %v2116
          %v2630 = vadd.s32 %v2271, %v2117
          %v2631 = vadd.s32 %v2271, %v2118
          %v2632 = vadd.s32 %v2271, %v2119
          %v2633 = vadd.s32 %v2271, %v2120
          %v2634 = vadd.s32 %v2271, %v2121
          %v2635 = vadd.s32 %v2271, %v2122
          %v2636 = vadd.s32 %v2271, %v2123
          %v2637 = vadd.s32 %v2271, %v2124
          %v2638 = vadd.s32 %v2271, %v2125
          %v2639 = vadd.s32 %v2271, %v2126
          %v2640 = vadd.s32 %v2271, %v2127
          %v2641 = vadd.s32 %v2271, %v2128
          %v2642 = vadd.s32 %v2271, %v2129
          %v2643 = vadd.s32 %v2271, %v2130
          %v2644 = vadd.s32 %v2271, %v2131
          %v2645 = vadd.s32 %v2271, %v2132
          %v2646 = vadd.s32 %v2271, %v2133
          %v2647 = vadd.s32 %v2271, %v2134
          %v2648 = vadd.s32 %v2271, %v2135
          %v2649 = vadd.s32 %v2271, %v2136
          %v2650 = vadd.s32 %v2271, %v2137
          %v2651 = vadd.s32 %v2271, %v2138
          %v2652 = vadd.s32 %v2271, %v2139
          %v2653 = vadd.s32 %v2271, %v2140
          %v2654 = vadd.s32 %v2271, %v2141
          %v2655 = vadd.s32 %v2271, %v2142
          %v2656 = vadd.s32 %v2271, %v2143
          %v2657 = vadd.s32 %v2271, %v2144
          %v2658 = vadd.s32 %v2271, %v2145
          %v2659 = vadd.s32 %v2271, %v2146
          %v2660 = vadd.s32 %v2271, %v2147
          %v2661 = vadd.s32 %v2271, %v2148
          %v2662 = vadd.s32 %v2271, %v2149
          %v2663 = vadd.s32 %v2271, %v2150
          %v2664 = vadd.s32 %v2271, %v2151
          %v2665 = vadd.s32 %v2271, %v2152
          %v2666 = vadd.s32 %v2271, %v2153
          %v2667 = vadd.s32 %v2271, %v2154
          %v2668 = vadd.s32 %v2271, %v2155
          %v2669 = vadd.s32 %v2271, %v2156
          %v2670 = vadd.s32 %v2271, %v2157
          %v2671 = vadd.s32 %v2271, %v2158
          %v2672 = vadd.s32 %v2271, %v2159
          %v2673 = vadd.s32 %v2271, %v2160
          %v2674 = vadd.s32 %v2271, %v2161
          %v2675 = vadd.s32 %v2271, %v2162
          %v2676 = vadd.s32 %v2271, %v2163
          %v2677 = vadd.s32 %v2271, %v2164
          %v2678 = vadd.s32 %v2271, %v2165
          %v2679 = vadd.s32 %v2271, %v2166
          %v2680 = vadd.s32 %v2271, %v2167
          %v2681 = vadd.s32 %v2271, %v2168
          %v2682 = vadd.s32 %v2271, %v2169
          %v2683 = vadd.s32 %v2271, %v2170
          %v2684 = vadd.s32 %v2271, %v2171
          %v2685 = vadd.s32 %v2271, %v2172
          %v2686 = vadd.s32 %v2271, %v2173
          %v2687 = vadd.s32 %v2271, %v2174
          %v2688 = vadd.s32 %v2271, %v2175
          %v2689 = vadd.s32 %v2271, %v2176
          %v2690 = vadd.s32 %v2271, %v2177
          %v2691 = vadd.s32 %v2271, %v2178
          %v2692 = vadd.s32 %v2271, %v2179
          %v2693 = vadd.s32 %v2271, %v2180
          %v2694 = vadd.s32 %v2271, %v2181
          %v2695 = vadd.s32 %v2271, %v2182
          %v2696 = vadd.s32 %v2271, %v2183
          %v2697 = vadd.s32 %v2271, %v2184
          %v2698 = vadd.s32 %v2271, %v2185
          %v2699 = vadd.s32 %v2271, %v2186
          %v2700 = vadd.s32 %v2271, %v2187
          %v2701 = vadd.s32 %v2271, %v2188
          %v2702 = vadd.s32 %v2271, %v2189
          %v2703 = vadd.s32 %v2271, %v2190
          %v2704 = vadd.s32 %v2271, %v2191
          %v2705 = vadd.s32 %v2271, %v2192
          %v2706 = vadd.s32 %v2271, %v2193
          %v2707 = vadd.s32 %v2271, %v2194
          %v2708 = vadd.s32 %v2271, %v2195
          %v2709 = vadd.s32 %v2271, %v2196
          %v2710 = vadd.s32 %v2271, %v2197
          %v2711 = vadd.s32 %v2271, %v2198
          %v2712 = vadd.s32 %v2271, %v2199
          %v2713 = vadd.s32 %v2271, %v2200
          %v2714 = vadd.s32 %v2271, %v2201
          %v2715 = vadd.s32 %v2271, %v2202
          %v2716 = vadd.s32 %v2271, %v2203
          %v2717 = vadd.s32 %v2271, %v2204
          %v2718 = vadd.s32 %v2271, %v2205
          %v2719 = vadd.s32 %v2271, %v2206
          %v2720 = vadd.s32 %v2271, %v2207
          %v2721 = vadd.s32 %v2271, %v2208
          %v2722 = vadd.s32 %v2271, %v2209
          %v2723 = vadd.s32 %v2271, %v2210
          %v2724 = vadd.s32 %v2271, %v2211
          %v2725 = vadd.s32 %v2271, %v2212
          %v2726 = vadd.s32 %v2271, %v2213
          %v2727 = vadd.s32 %v2271, %v2214
          %v2728 = vadd.s32 %v2271, %v2215
          %v2729 = vadd.s32 %v2271, %v2216
          %v2730 = vadd.s32 %v2271, %v2217
          %v2731 = vadd.s32 %v2271, %v2218
          %v2732 = vadd.s32 %v2271, %v2219
          %v2733 = vadd.s32 %v2271, %v2220
          %v2734 = vadd.s32 %v2271, %v2221
          %v2735 = vadd.s32 %v2271, %v2222
          %v2736 = vadd.s32 %v2271, %v2223
          %v2737 = vadd.s32 %v2271, %v2224
          %v2738 = vadd.s32 %v2271, %v2225
          %v2739 = vadd.s32 %v2271, %v2226
          %v2740 = vadd.s32 %v2271, %v2227
          %v2741 = vadd.s32 %v2271, %v2228
          %v2742 = vadd.s32 %v2271, %v2229
          %v2743 = vadd.s32 %v2271, %v2230
          %v2744 = vadd.s32 %v2271, %v2231
          %v2745 = vadd.s32 %v2271, %v2232
          %v2746 = vadd.s32 %v2271, %v2233
          %v2747 = vadd.s32 %v2271, %v2234
          %v2748 = vadd.s32 %v2271, %v2235
          %v2749 = vadd.s32 %v2271, %v2236
          %v2750 = vadd.s32 %v2271, %v2237
          %v2751 = vadd.s32 %v2271, %v2238
          %v2752 = vadd.s32 %v2271, %v2239
          %v2753 = vadd.s32 %v2271, %v2240
          %v2754 = vadd.s32 %v2271, %v2241
          %v2755 = vadd.s32 %v2271, %v2242
          %v2756 = vadd.s32 %v2271, %v2243
          %v2757 = vadd.s32 %v2271, %v2244
          %v2758 = vadd.s32 %v2271, %v2245
          %v2759 = vadd.s32 %v2271, %v2246
          %v2760 = vadd.s32 %v2271, %v2247
          %v2761 = vadd.s32 %v2271, %v2248
          %v2762 = vadd.s32 %v2271, %v2249
          %v2763 = vadd.s32 %v2271, %v2250
          %v2764 = vadd.s32 %v2271, %v2251
          %v2765 = vadd.s32 %v2271, %v2252
          %v2766 = vadd.s32 %v2271, %v2253
          %v2767 = vadd.s32 %v2271, %v2254
          %v2768 = vadd.s32 %v2271, %v2255
          %v2769 = vadd.s32 %v2271, %v2256
          %v2770 = vadd.s32 %v2271, %v2257
          %v2771 = vadd.s32 %v2271, %v2258
          %v2772 = vadd.s32 %v2271, %v2259
          %v2773 = vadd.s32 %v2271, %v2260
          %v2774 = vadd.s32 %v2271, %v2261
          %v2775 = vadd.s32 %v2271, %v2262
          %v2776 = vadd.s32 %v2271, %v2263
          %v2777 = vadd.s32 %v2271, %v2264
          %v2778 = vadd.s32 %v2271, %v2265
          %v2779 = vadd.s32 %v2271, %v2266
          %v2780 = vadd.s32 %v2271, %v2267
          %v2781 = vadd.s32 %v2271, %v2268
          %v2782 = vadd.s32 %v2271, %v2269
          %v2783 = vadd.s32 %v2271, %v2270
          %vm2784 = vcmp.lt.s32.totalorder %v2272, 5120
          %vm2785 = vcmp.lt.s32.totalorder %v2273, 5120
          %vm2786 = vcmp.lt.s32.totalorder %v2274, 5120
          %vm2787 = vcmp.lt.s32.totalorder %v2275, 5120
          %vm2788 = vcmp.lt.s32.totalorder %v2276, 5120
          %vm2789 = vcmp.lt.s32.totalorder %v2277, 5120
          %vm2790 = vcmp.lt.s32.totalorder %v2278, 5120
          %vm2791 = vcmp.lt.s32.totalorder %v2279, 5120
          %vm2792 = vcmp.lt.s32.totalorder %v2280, 5120
          %vm2793 = vcmp.lt.s32.totalorder %v2281, 5120
          %vm2794 = vcmp.lt.s32.totalorder %v2282, 5120
          %vm2795 = vcmp.lt.s32.totalorder %v2283, 5120
          %vm2796 = vcmp.lt.s32.totalorder %v2284, 5120
          %vm2797 = vcmp.lt.s32.totalorder %v2285, 5120
          %vm2798 = vcmp.lt.s32.totalorder %v2286, 5120
          %vm2799 = vcmp.lt.s32.totalorder %v2287, 5120
          %vm2800 = vcmp.lt.s32.totalorder %v2288, 5120
          %vm2801 = vcmp.lt.s32.totalorder %v2289, 5120
          %vm2802 = vcmp.lt.s32.totalorder %v2290, 5120
          %vm2803 = vcmp.lt.s32.totalorder %v2291, 5120
          %vm2804 = vcmp.lt.s32.totalorder %v2292, 5120
          %vm2805 = vcmp.lt.s32.totalorder %v2293, 5120
          %vm2806 = vcmp.lt.s32.totalorder %v2294, 5120
          %vm2807 = vcmp.lt.s32.totalorder %v2295, 5120
          %vm2808 = vcmp.lt.s32.totalorder %v2296, 5120
          %vm2809 = vcmp.lt.s32.totalorder %v2297, 5120
          %vm2810 = vcmp.lt.s32.totalorder %v2298, 5120
          %vm2811 = vcmp.lt.s32.totalorder %v2299, 5120
          %vm2812 = vcmp.lt.s32.totalorder %v2300, 5120
          %vm2813 = vcmp.lt.s32.totalorder %v2301, 5120
          %vm2814 = vcmp.lt.s32.totalorder %v2302, 5120
          %vm2815 = vcmp.lt.s32.totalorder %v2303, 5120
          %vm2816 = vcmp.lt.s32.totalorder %v2304, 5120
          %vm2817 = vcmp.lt.s32.totalorder %v2305, 5120
          %vm2818 = vcmp.lt.s32.totalorder %v2306, 5120
          %vm2819 = vcmp.lt.s32.totalorder %v2307, 5120
          %vm2820 = vcmp.lt.s32.totalorder %v2308, 5120
          %vm2821 = vcmp.lt.s32.totalorder %v2309, 5120
          %vm2822 = vcmp.lt.s32.totalorder %v2310, 5120
          %vm2823 = vcmp.lt.s32.totalorder %v2311, 5120
          %vm2824 = vcmp.lt.s32.totalorder %v2312, 5120
          %vm2825 = vcmp.lt.s32.totalorder %v2313, 5120
          %vm2826 = vcmp.lt.s32.totalorder %v2314, 5120
          %vm2827 = vcmp.lt.s32.totalorder %v2315, 5120
          %vm2828 = vcmp.lt.s32.totalorder %v2316, 5120
          %vm2829 = vcmp.lt.s32.totalorder %v2317, 5120
          %vm2830 = vcmp.lt.s32.totalorder %v2318, 5120
          %vm2831 = vcmp.lt.s32.totalorder %v2319, 5120
          %vm2832 = vcmp.lt.s32.totalorder %v2320, 5120
          %vm2833 = vcmp.lt.s32.totalorder %v2321, 5120
          %vm2834 = vcmp.lt.s32.totalorder %v2322, 5120
          %vm2835 = vcmp.lt.s32.totalorder %v2323, 5120
          %vm2836 = vcmp.lt.s32.totalorder %v2324, 5120
          %vm2837 = vcmp.lt.s32.totalorder %v2325, 5120
          %vm2838 = vcmp.lt.s32.totalorder %v2326, 5120
          %vm2839 = vcmp.lt.s32.totalorder %v2327, 5120
          %vm2840 = vcmp.lt.s32.totalorder %v2328, 5120
          %vm2841 = vcmp.lt.s32.totalorder %v2329, 5120
          %vm2842 = vcmp.lt.s32.totalorder %v2330, 5120
          %vm2843 = vcmp.lt.s32.totalorder %v2331, 5120
          %vm2844 = vcmp.lt.s32.totalorder %v2332, 5120
          %vm2845 = vcmp.lt.s32.totalorder %v2333, 5120
          %vm2846 = vcmp.lt.s32.totalorder %v2334, 5120
          %vm2847 = vcmp.lt.s32.totalorder %v2335, 5120
          %vm2848 = vcmp.lt.s32.totalorder %v2336, 5120
          %vm2849 = vcmp.lt.s32.totalorder %v2337, 5120
          %vm2850 = vcmp.lt.s32.totalorder %v2338, 5120
          %vm2851 = vcmp.lt.s32.totalorder %v2339, 5120
          %vm2852 = vcmp.lt.s32.totalorder %v2340, 5120
          %vm2853 = vcmp.lt.s32.totalorder %v2341, 5120
          %vm2854 = vcmp.lt.s32.totalorder %v2342, 5120
          %vm2855 = vcmp.lt.s32.totalorder %v2343, 5120
          %vm2856 = vcmp.lt.s32.totalorder %v2344, 5120
          %vm2857 = vcmp.lt.s32.totalorder %v2345, 5120
          %vm2858 = vcmp.lt.s32.totalorder %v2346, 5120
          %vm2859 = vcmp.lt.s32.totalorder %v2347, 5120
          %vm2860 = vcmp.lt.s32.totalorder %v2348, 5120
          %vm2861 = vcmp.lt.s32.totalorder %v2349, 5120
          %vm2862 = vcmp.lt.s32.totalorder %v2350, 5120
          %vm2863 = vcmp.lt.s32.totalorder %v2351, 5120
          %vm2864 = vcmp.lt.s32.totalorder %v2352, 5120
          %vm2865 = vcmp.lt.s32.totalorder %v2353, 5120
          %vm2866 = vcmp.lt.s32.totalorder %v2354, 5120
          %vm2867 = vcmp.lt.s32.totalorder %v2355, 5120
          %vm2868 = vcmp.lt.s32.totalorder %v2356, 5120
          %vm2869 = vcmp.lt.s32.totalorder %v2357, 5120
          %vm2870 = vcmp.lt.s32.totalorder %v2358, 5120
          %vm2871 = vcmp.lt.s32.totalorder %v2359, 5120
          %vm2872 = vcmp.lt.s32.totalorder %v2360, 5120
          %vm2873 = vcmp.lt.s32.totalorder %v2361, 5120
          %vm2874 = vcmp.lt.s32.totalorder %v2362, 5120
          %vm2875 = vcmp.lt.s32.totalorder %v2363, 5120
          %vm2876 = vcmp.lt.s32.totalorder %v2364, 5120
          %vm2877 = vcmp.lt.s32.totalorder %v2365, 5120
          %vm2878 = vcmp.lt.s32.totalorder %v2366, 5120
          %vm2879 = vcmp.lt.s32.totalorder %v2367, 5120
          %vm2880 = vcmp.lt.s32.totalorder %v2368, 5120
          %vm2881 = vcmp.lt.s32.totalorder %v2369, 5120
          %vm2882 = vcmp.lt.s32.totalorder %v2370, 5120
          %vm2883 = vcmp.lt.s32.totalorder %v2371, 5120
          %vm2884 = vcmp.lt.s32.totalorder %v2372, 5120
          %vm2885 = vcmp.lt.s32.totalorder %v2373, 5120
          %vm2886 = vcmp.lt.s32.totalorder %v2374, 5120
          %vm2887 = vcmp.lt.s32.totalorder %v2375, 5120
          %vm2888 = vcmp.lt.s32.totalorder %v2376, 5120
          %vm2889 = vcmp.lt.s32.totalorder %v2377, 5120
          %vm2890 = vcmp.lt.s32.totalorder %v2378, 5120
          %vm2891 = vcmp.lt.s32.totalorder %v2379, 5120
          %vm2892 = vcmp.lt.s32.totalorder %v2380, 5120
          %vm2893 = vcmp.lt.s32.totalorder %v2381, 5120
          %vm2894 = vcmp.lt.s32.totalorder %v2382, 5120
          %vm2895 = vcmp.lt.s32.totalorder %v2383, 5120
          %vm2896 = vcmp.lt.s32.totalorder %v2384, 5120
          %vm2897 = vcmp.lt.s32.totalorder %v2385, 5120
          %vm2898 = vcmp.lt.s32.totalorder %v2386, 5120
          %vm2899 = vcmp.lt.s32.totalorder %v2387, 5120
          %vm2900 = vcmp.lt.s32.totalorder %v2388, 5120
          %vm2901 = vcmp.lt.s32.totalorder %v2389, 5120
          %vm2902 = vcmp.lt.s32.totalorder %v2390, 5120
          %vm2903 = vcmp.lt.s32.totalorder %v2391, 5120
          %vm2904 = vcmp.lt.s32.totalorder %v2392, 5120
          %vm2905 = vcmp.lt.s32.totalorder %v2393, 5120
          %vm2906 = vcmp.lt.s32.totalorder %v2394, 5120
          %vm2907 = vcmp.lt.s32.totalorder %v2395, 5120
          %vm2908 = vcmp.lt.s32.totalorder %v2396, 5120
          %vm2909 = vcmp.lt.s32.totalorder %v2397, 5120
          %vm2910 = vcmp.lt.s32.totalorder %v2398, 5120
          %vm2911 = vcmp.lt.s32.totalorder %v2399, 5120
          %vm2912 = vcmp.lt.s32.totalorder %v2400, 5120
          %vm2913 = vcmp.lt.s32.totalorder %v2401, 5120
          %vm2914 = vcmp.lt.s32.totalorder %v2402, 5120
          %vm2915 = vcmp.lt.s32.totalorder %v2403, 5120
          %vm2916 = vcmp.lt.s32.totalorder %v2404, 5120
          %vm2917 = vcmp.lt.s32.totalorder %v2405, 5120
          %vm2918 = vcmp.lt.s32.totalorder %v2406, 5120
          %vm2919 = vcmp.lt.s32.totalorder %v2407, 5120
          %vm2920 = vcmp.lt.s32.totalorder %v2408, 5120
          %vm2921 = vcmp.lt.s32.totalorder %v2409, 5120
          %vm2922 = vcmp.lt.s32.totalorder %v2410, 5120
          %vm2923 = vcmp.lt.s32.totalorder %v2411, 5120
          %vm2924 = vcmp.lt.s32.totalorder %v2412, 5120
          %vm2925 = vcmp.lt.s32.totalorder %v2413, 5120
          %vm2926 = vcmp.lt.s32.totalorder %v2414, 5120
          %vm2927 = vcmp.lt.s32.totalorder %v2415, 5120
          %vm2928 = vcmp.lt.s32.totalorder %v2416, 5120
          %vm2929 = vcmp.lt.s32.totalorder %v2417, 5120
          %vm2930 = vcmp.lt.s32.totalorder %v2418, 5120
          %vm2931 = vcmp.lt.s32.totalorder %v2419, 5120
          %vm2932 = vcmp.lt.s32.totalorder %v2420, 5120
          %vm2933 = vcmp.lt.s32.totalorder %v2421, 5120
          %vm2934 = vcmp.lt.s32.totalorder %v2422, 5120
          %vm2935 = vcmp.lt.s32.totalorder %v2423, 5120
          %vm2936 = vcmp.lt.s32.totalorder %v2424, 5120
          %vm2937 = vcmp.lt.s32.totalorder %v2425, 5120
          %vm2938 = vcmp.lt.s32.totalorder %v2426, 5120
          %vm2939 = vcmp.lt.s32.totalorder %v2427, 5120
          %vm2940 = vcmp.lt.s32.totalorder %v2428, 5120
          %vm2941 = vcmp.lt.s32.totalorder %v2429, 5120
          %vm2942 = vcmp.lt.s32.totalorder %v2430, 5120
          %vm2943 = vcmp.lt.s32.totalorder %v2431, 5120
          %vm2944 = vcmp.lt.s32.totalorder %v2432, 5120
          %vm2945 = vcmp.lt.s32.totalorder %v2433, 5120
          %vm2946 = vcmp.lt.s32.totalorder %v2434, 5120
          %vm2947 = vcmp.lt.s32.totalorder %v2435, 5120
          %vm2948 = vcmp.lt.s32.totalorder %v2436, 5120
          %vm2949 = vcmp.lt.s32.totalorder %v2437, 5120
          %vm2950 = vcmp.lt.s32.totalorder %v2438, 5120
          %vm2951 = vcmp.lt.s32.totalorder %v2439, 5120
          %vm2952 = vcmp.lt.s32.totalorder %v2440, 5120
          %vm2953 = vcmp.lt.s32.totalorder %v2441, 5120
          %vm2954 = vcmp.lt.s32.totalorder %v2442, 5120
          %vm2955 = vcmp.lt.s32.totalorder %v2443, 5120
          %vm2956 = vcmp.lt.s32.totalorder %v2444, 5120
          %vm2957 = vcmp.lt.s32.totalorder %v2445, 5120
          %vm2958 = vcmp.lt.s32.totalorder %v2446, 5120
          %vm2959 = vcmp.lt.s32.totalorder %v2447, 5120
          %vm2960 = vcmp.lt.s32.totalorder %v2448, 5120
          %vm2961 = vcmp.lt.s32.totalorder %v2449, 5120
          %vm2962 = vcmp.lt.s32.totalorder %v2450, 5120
          %vm2963 = vcmp.lt.s32.totalorder %v2451, 5120
          %vm2964 = vcmp.lt.s32.totalorder %v2452, 5120
          %vm2965 = vcmp.lt.s32.totalorder %v2453, 5120
          %vm2966 = vcmp.lt.s32.totalorder %v2454, 5120
          %vm2967 = vcmp.lt.s32.totalorder %v2455, 5120
          %vm2968 = vcmp.lt.s32.totalorder %v2456, 5120
          %vm2969 = vcmp.lt.s32.totalorder %v2457, 5120
          %vm2970 = vcmp.lt.s32.totalorder %v2458, 5120
          %vm2971 = vcmp.lt.s32.totalorder %v2459, 5120
          %vm2972 = vcmp.lt.s32.totalorder %v2460, 5120
          %vm2973 = vcmp.lt.s32.totalorder %v2461, 5120
          %vm2974 = vcmp.lt.s32.totalorder %v2462, 5120
          %vm2975 = vcmp.lt.s32.totalorder %v2463, 5120
          %vm2976 = vcmp.lt.s32.totalorder %v2464, 5120
          %vm2977 = vcmp.lt.s32.totalorder %v2465, 5120
          %vm2978 = vcmp.lt.s32.totalorder %v2466, 5120
          %vm2979 = vcmp.lt.s32.totalorder %v2467, 5120
          %vm2980 = vcmp.lt.s32.totalorder %v2468, 5120
          %vm2981 = vcmp.lt.s32.totalorder %v2469, 5120
          %vm2982 = vcmp.lt.s32.totalorder %v2470, 5120
          %vm2983 = vcmp.lt.s32.totalorder %v2471, 5120
          %vm2984 = vcmp.lt.s32.totalorder %v2472, 5120
          %vm2985 = vcmp.lt.s32.totalorder %v2473, 5120
          %vm2986 = vcmp.lt.s32.totalorder %v2474, 5120
          %vm2987 = vcmp.lt.s32.totalorder %v2475, 5120
          %vm2988 = vcmp.lt.s32.totalorder %v2476, 5120
          %vm2989 = vcmp.lt.s32.totalorder %v2477, 5120
          %vm2990 = vcmp.lt.s32.totalorder %v2478, 5120
          %vm2991 = vcmp.lt.s32.totalorder %v2479, 5120
          %vm2992 = vcmp.lt.s32.totalorder %v2480, 5120
          %vm2993 = vcmp.lt.s32.totalorder %v2481, 5120
          %vm2994 = vcmp.lt.s32.totalorder %v2482, 5120
          %vm2995 = vcmp.lt.s32.totalorder %v2483, 5120
          %vm2996 = vcmp.lt.s32.totalorder %v2484, 5120
          %vm2997 = vcmp.lt.s32.totalorder %v2485, 5120
          %vm2998 = vcmp.lt.s32.totalorder %v2486, 5120
          %vm2999 = vcmp.lt.s32.totalorder %v2487, 5120
          %vm3000 = vcmp.lt.s32.totalorder %v2488, 5120
          %vm3001 = vcmp.lt.s32.totalorder %v2489, 5120
          %vm3002 = vcmp.lt.s32.totalorder %v2490, 5120
          %vm3003 = vcmp.lt.s32.totalorder %v2491, 5120
          %vm3004 = vcmp.lt.s32.totalorder %v2492, 5120
          %vm3005 = vcmp.lt.s32.totalorder %v2493, 5120
          %vm3006 = vcmp.lt.s32.totalorder %v2494, 5120
          %vm3007 = vcmp.lt.s32.totalorder %v2495, 5120
          %vm3008 = vcmp.lt.s32.totalorder %v2496, 5120
          %vm3009 = vcmp.lt.s32.totalorder %v2497, 5120
          %vm3010 = vcmp.lt.s32.totalorder %v2498, 5120
          %vm3011 = vcmp.lt.s32.totalorder %v2499, 5120
          %vm3012 = vcmp.lt.s32.totalorder %v2500, 5120
          %vm3013 = vcmp.lt.s32.totalorder %v2501, 5120
          %vm3014 = vcmp.lt.s32.totalorder %v2502, 5120
          %vm3015 = vcmp.lt.s32.totalorder %v2503, 5120
          %vm3016 = vcmp.lt.s32.totalorder %v2504, 5120
          %vm3017 = vcmp.lt.s32.totalorder %v2505, 5120
          %vm3018 = vcmp.lt.s32.totalorder %v2506, 5120
          %vm3019 = vcmp.lt.s32.totalorder %v2507, 5120
          %vm3020 = vcmp.lt.s32.totalorder %v2508, 5120
          %vm3021 = vcmp.lt.s32.totalorder %v2509, 5120
          %vm3022 = vcmp.lt.s32.totalorder %v2510, 5120
          %vm3023 = vcmp.lt.s32.totalorder %v2511, 5120
          %vm3024 = vcmp.lt.s32.totalorder %v2512, 5120
          %vm3025 = vcmp.lt.s32.totalorder %v2513, 5120
          %vm3026 = vcmp.lt.s32.totalorder %v2514, 5120
          %vm3027 = vcmp.lt.s32.totalorder %v2515, 5120
          %vm3028 = vcmp.lt.s32.totalorder %v2516, 5120
          %vm3029 = vcmp.lt.s32.totalorder %v2517, 5120
          %vm3030 = vcmp.lt.s32.totalorder %v2518, 5120
          %vm3031 = vcmp.lt.s32.totalorder %v2519, 5120
          %vm3032 = vcmp.lt.s32.totalorder %v2520, 5120
          %vm3033 = vcmp.lt.s32.totalorder %v2521, 5120
          %vm3034 = vcmp.lt.s32.totalorder %v2522, 5120
          %vm3035 = vcmp.lt.s32.totalorder %v2523, 5120
          %vm3036 = vcmp.lt.s32.totalorder %v2524, 5120
          %vm3037 = vcmp.lt.s32.totalorder %v2525, 5120
          %vm3038 = vcmp.lt.s32.totalorder %v2526, 5120
          %vm3039 = vcmp.lt.s32.totalorder %v2527, 5120
          %vm3040 = vcmp.lt.s32.totalorder %v2528, 5120
          %vm3041 = vcmp.lt.s32.totalorder %v2529, 5120
          %vm3042 = vcmp.lt.s32.totalorder %v2530, 5120
          %vm3043 = vcmp.lt.s32.totalorder %v2531, 5120
          %vm3044 = vcmp.lt.s32.totalorder %v2532, 5120
          %vm3045 = vcmp.lt.s32.totalorder %v2533, 5120
          %vm3046 = vcmp.lt.s32.totalorder %v2534, 5120
          %vm3047 = vcmp.lt.s32.totalorder %v2535, 5120
          %vm3048 = vcmp.lt.s32.totalorder %v2536, 5120
          %vm3049 = vcmp.lt.s32.totalorder %v2537, 5120
          %vm3050 = vcmp.lt.s32.totalorder %v2538, 5120
          %vm3051 = vcmp.lt.s32.totalorder %v2539, 5120
          %vm3052 = vcmp.lt.s32.totalorder %v2540, 5120
          %vm3053 = vcmp.lt.s32.totalorder %v2541, 5120
          %vm3054 = vcmp.lt.s32.totalorder %v2542, 5120
          %vm3055 = vcmp.lt.s32.totalorder %v2543, 5120
          %vm3056 = vcmp.lt.s32.totalorder %v2544, 5120
          %vm3057 = vcmp.lt.s32.totalorder %v2545, 5120
          %vm3058 = vcmp.lt.s32.totalorder %v2546, 5120
          %vm3059 = vcmp.lt.s32.totalorder %v2547, 5120
          %vm3060 = vcmp.lt.s32.totalorder %v2548, 5120
          %vm3061 = vcmp.lt.s32.totalorder %v2549, 5120
          %vm3062 = vcmp.lt.s32.totalorder %v2550, 5120
          %vm3063 = vcmp.lt.s32.totalorder %v2551, 5120
          %vm3064 = vcmp.lt.s32.totalorder %v2552, 5120
          %vm3065 = vcmp.lt.s32.totalorder %v2553, 5120
          %vm3066 = vcmp.lt.s32.totalorder %v2554, 5120
          %vm3067 = vcmp.lt.s32.totalorder %v2555, 5120
          %vm3068 = vcmp.lt.s32.totalorder %v2556, 5120
          %vm3069 = vcmp.lt.s32.totalorder %v2557, 5120
          %vm3070 = vcmp.lt.s32.totalorder %v2558, 5120
          %vm3071 = vcmp.lt.s32.totalorder %v2559, 5120
          %vm3072 = vcmp.lt.s32.totalorder %v2560, 5120
          %vm3073 = vcmp.lt.s32.totalorder %v2561, 5120
          %vm3074 = vcmp.lt.s32.totalorder %v2562, 5120
          %vm3075 = vcmp.lt.s32.totalorder %v2563, 5120
          %vm3076 = vcmp.lt.s32.totalorder %v2564, 5120
          %vm3077 = vcmp.lt.s32.totalorder %v2565, 5120
          %vm3078 = vcmp.lt.s32.totalorder %v2566, 5120
          %vm3079 = vcmp.lt.s32.totalorder %v2567, 5120
          %vm3080 = vcmp.lt.s32.totalorder %v2568, 5120
          %vm3081 = vcmp.lt.s32.totalorder %v2569, 5120
          %vm3082 = vcmp.lt.s32.totalorder %v2570, 5120
          %vm3083 = vcmp.lt.s32.totalorder %v2571, 5120
          %vm3084 = vcmp.lt.s32.totalorder %v2572, 5120
          %vm3085 = vcmp.lt.s32.totalorder %v2573, 5120
          %vm3086 = vcmp.lt.s32.totalorder %v2574, 5120
          %vm3087 = vcmp.lt.s32.totalorder %v2575, 5120
          %vm3088 = vcmp.lt.s32.totalorder %v2576, 5120
          %vm3089 = vcmp.lt.s32.totalorder %v2577, 5120
          %vm3090 = vcmp.lt.s32.totalorder %v2578, 5120
          %vm3091 = vcmp.lt.s32.totalorder %v2579, 5120
          %vm3092 = vcmp.lt.s32.totalorder %v2580, 5120
          %vm3093 = vcmp.lt.s32.totalorder %v2581, 5120
          %vm3094 = vcmp.lt.s32.totalorder %v2582, 5120
          %vm3095 = vcmp.lt.s32.totalorder %v2583, 5120
          %vm3096 = vcmp.lt.s32.totalorder %v2584, 5120
          %vm3097 = vcmp.lt.s32.totalorder %v2585, 5120
          %vm3098 = vcmp.lt.s32.totalorder %v2586, 5120
          %vm3099 = vcmp.lt.s32.totalorder %v2587, 5120
          %vm3100 = vcmp.lt.s32.totalorder %v2588, 5120
          %vm3101 = vcmp.lt.s32.totalorder %v2589, 5120
          %vm3102 = vcmp.lt.s32.totalorder %v2590, 5120
          %vm3103 = vcmp.lt.s32.totalorder %v2591, 5120
          %vm3104 = vcmp.lt.s32.totalorder %v2592, 5120
          %vm3105 = vcmp.lt.s32.totalorder %v2593, 5120
          %vm3106 = vcmp.lt.s32.totalorder %v2594, 5120
          %vm3107 = vcmp.lt.s32.totalorder %v2595, 5120
          %vm3108 = vcmp.lt.s32.totalorder %v2596, 5120
          %vm3109 = vcmp.lt.s32.totalorder %v2597, 5120
          %vm3110 = vcmp.lt.s32.totalorder %v2598, 5120
          %vm3111 = vcmp.lt.s32.totalorder %v2599, 5120
          %vm3112 = vcmp.lt.s32.totalorder %v2600, 5120
          %vm3113 = vcmp.lt.s32.totalorder %v2601, 5120
          %vm3114 = vcmp.lt.s32.totalorder %v2602, 5120
          %vm3115 = vcmp.lt.s32.totalorder %v2603, 5120
          %vm3116 = vcmp.lt.s32.totalorder %v2604, 5120
          %vm3117 = vcmp.lt.s32.totalorder %v2605, 5120
          %vm3118 = vcmp.lt.s32.totalorder %v2606, 5120
          %vm3119 = vcmp.lt.s32.totalorder %v2607, 5120
          %vm3120 = vcmp.lt.s32.totalorder %v2608, 5120
          %vm3121 = vcmp.lt.s32.totalorder %v2609, 5120
          %vm3122 = vcmp.lt.s32.totalorder %v2610, 5120
          %vm3123 = vcmp.lt.s32.totalorder %v2611, 5120
          %vm3124 = vcmp.lt.s32.totalorder %v2612, 5120
          %vm3125 = vcmp.lt.s32.totalorder %v2613, 5120
          %vm3126 = vcmp.lt.s32.totalorder %v2614, 5120
          %vm3127 = vcmp.lt.s32.totalorder %v2615, 5120
          %vm3128 = vcmp.lt.s32.totalorder %v2616, 5120
          %vm3129 = vcmp.lt.s32.totalorder %v2617, 5120
          %vm3130 = vcmp.lt.s32.totalorder %v2618, 5120
          %vm3131 = vcmp.lt.s32.totalorder %v2619, 5120
          %vm3132 = vcmp.lt.s32.totalorder %v2620, 5120
          %vm3133 = vcmp.lt.s32.totalorder %v2621, 5120
          %vm3134 = vcmp.lt.s32.totalorder %v2622, 5120
          %vm3135 = vcmp.lt.s32.totalorder %v2623, 5120
          %vm3136 = vcmp.lt.s32.totalorder %v2624, 5120
          %vm3137 = vcmp.lt.s32.totalorder %v2625, 5120
          %vm3138 = vcmp.lt.s32.totalorder %v2626, 5120
          %vm3139 = vcmp.lt.s32.totalorder %v2627, 5120
          %vm3140 = vcmp.lt.s32.totalorder %v2628, 5120
          %vm3141 = vcmp.lt.s32.totalorder %v2629, 5120
          %vm3142 = vcmp.lt.s32.totalorder %v2630, 5120
          %vm3143 = vcmp.lt.s32.totalorder %v2631, 5120
          %vm3144 = vcmp.lt.s32.totalorder %v2632, 5120
          %vm3145 = vcmp.lt.s32.totalorder %v2633, 5120
          %vm3146 = vcmp.lt.s32.totalorder %v2634, 5120
          %vm3147 = vcmp.lt.s32.totalorder %v2635, 5120
          %vm3148 = vcmp.lt.s32.totalorder %v2636, 5120
          %vm3149 = vcmp.lt.s32.totalorder %v2637, 5120
          %vm3150 = vcmp.lt.s32.totalorder %v2638, 5120
          %vm3151 = vcmp.lt.s32.totalorder %v2639, 5120
          %vm3152 = vcmp.lt.s32.totalorder %v2640, 5120
          %vm3153 = vcmp.lt.s32.totalorder %v2641, 5120
          %vm3154 = vcmp.lt.s32.totalorder %v2642, 5120
          %vm3155 = vcmp.lt.s32.totalorder %v2643, 5120
          %vm3156 = vcmp.lt.s32.totalorder %v2644, 5120
          %vm3157 = vcmp.lt.s32.totalorder %v2645, 5120
          %vm3158 = vcmp.lt.s32.totalorder %v2646, 5120
          %vm3159 = vcmp.lt.s32.totalorder %v2647, 5120
          %vm3160 = vcmp.lt.s32.totalorder %v2648, 5120
          %vm3161 = vcmp.lt.s32.totalorder %v2649, 5120
          %vm3162 = vcmp.lt.s32.totalorder %v2650, 5120
          %vm3163 = vcmp.lt.s32.totalorder %v2651, 5120
          %vm3164 = vcmp.lt.s32.totalorder %v2652, 5120
          %vm3165 = vcmp.lt.s32.totalorder %v2653, 5120
          %vm3166 = vcmp.lt.s32.totalorder %v2654, 5120
          %vm3167 = vcmp.lt.s32.totalorder %v2655, 5120
          %vm3168 = vcmp.lt.s32.totalorder %v2656, 5120
          %vm3169 = vcmp.lt.s32.totalorder %v2657, 5120
          %vm3170 = vcmp.lt.s32.totalorder %v2658, 5120
          %vm3171 = vcmp.lt.s32.totalorder %v2659, 5120
          %vm3172 = vcmp.lt.s32.totalorder %v2660, 5120
          %vm3173 = vcmp.lt.s32.totalorder %v2661, 5120
          %vm3174 = vcmp.lt.s32.totalorder %v2662, 5120
          %vm3175 = vcmp.lt.s32.totalorder %v2663, 5120
          %vm3176 = vcmp.lt.s32.totalorder %v2664, 5120
          %vm3177 = vcmp.lt.s32.totalorder %v2665, 5120
          %vm3178 = vcmp.lt.s32.totalorder %v2666, 5120
          %vm3179 = vcmp.lt.s32.totalorder %v2667, 5120
          %vm3180 = vcmp.lt.s32.totalorder %v2668, 5120
          %vm3181 = vcmp.lt.s32.totalorder %v2669, 5120
          %vm3182 = vcmp.lt.s32.totalorder %v2670, 5120
          %vm3183 = vcmp.lt.s32.totalorder %v2671, 5120
          %vm3184 = vcmp.lt.s32.totalorder %v2672, 5120
          %vm3185 = vcmp.lt.s32.totalorder %v2673, 5120
          %vm3186 = vcmp.lt.s32.totalorder %v2674, 5120
          %vm3187 = vcmp.lt.s32.totalorder %v2675, 5120
          %vm3188 = vcmp.lt.s32.totalorder %v2676, 5120
          %vm3189 = vcmp.lt.s32.totalorder %v2677, 5120
          %vm3190 = vcmp.lt.s32.totalorder %v2678, 5120
          %vm3191 = vcmp.lt.s32.totalorder %v2679, 5120
          %vm3192 = vcmp.lt.s32.totalorder %v2680, 5120
          %vm3193 = vcmp.lt.s32.totalorder %v2681, 5120
          %vm3194 = vcmp.lt.s32.totalorder %v2682, 5120
          %vm3195 = vcmp.lt.s32.totalorder %v2683, 5120
          %vm3196 = vcmp.lt.s32.totalorder %v2684, 5120
          %vm3197 = vcmp.lt.s32.totalorder %v2685, 5120
          %vm3198 = vcmp.lt.s32.totalorder %v2686, 5120
          %vm3199 = vcmp.lt.s32.totalorder %v2687, 5120
          %vm3200 = vcmp.lt.s32.totalorder %v2688, 5120
          %vm3201 = vcmp.lt.s32.totalorder %v2689, 5120
          %vm3202 = vcmp.lt.s32.totalorder %v2690, 5120
          %vm3203 = vcmp.lt.s32.totalorder %v2691, 5120
          %vm3204 = vcmp.lt.s32.totalorder %v2692, 5120
          %vm3205 = vcmp.lt.s32.totalorder %v2693, 5120
          %vm3206 = vcmp.lt.s32.totalorder %v2694, 5120
          %vm3207 = vcmp.lt.s32.totalorder %v2695, 5120
          %vm3208 = vcmp.lt.s32.totalorder %v2696, 5120
          %vm3209 = vcmp.lt.s32.totalorder %v2697, 5120
          %vm3210 = vcmp.lt.s32.totalorder %v2698, 5120
          %vm3211 = vcmp.lt.s32.totalorder %v2699, 5120
          %vm3212 = vcmp.lt.s32.totalorder %v2700, 5120
          %vm3213 = vcmp.lt.s32.totalorder %v2701, 5120
          %vm3214 = vcmp.lt.s32.totalorder %v2702, 5120
          %vm3215 = vcmp.lt.s32.totalorder %v2703, 5120
          %vm3216 = vcmp.lt.s32.totalorder %v2704, 5120
          %vm3217 = vcmp.lt.s32.totalorder %v2705, 5120
          %vm3218 = vcmp.lt.s32.totalorder %v2706, 5120
          %vm3219 = vcmp.lt.s32.totalorder %v2707, 5120
          %vm3220 = vcmp.lt.s32.totalorder %v2708, 5120
          %vm3221 = vcmp.lt.s32.totalorder %v2709, 5120
          %vm3222 = vcmp.lt.s32.totalorder %v2710, 5120
          %vm3223 = vcmp.lt.s32.totalorder %v2711, 5120
          %vm3224 = vcmp.lt.s32.totalorder %v2712, 5120
          %vm3225 = vcmp.lt.s32.totalorder %v2713, 5120
          %vm3226 = vcmp.lt.s32.totalorder %v2714, 5120
          %vm3227 = vcmp.lt.s32.totalorder %v2715, 5120
          %vm3228 = vcmp.lt.s32.totalorder %v2716, 5120
          %vm3229 = vcmp.lt.s32.totalorder %v2717, 5120
          %vm3230 = vcmp.lt.s32.totalorder %v2718, 5120
          %vm3231 = vcmp.lt.s32.totalorder %v2719, 5120
          %vm3232 = vcmp.lt.s32.totalorder %v2720, 5120
          %vm3233 = vcmp.lt.s32.totalorder %v2721, 5120
          %vm3234 = vcmp.lt.s32.totalorder %v2722, 5120
          %vm3235 = vcmp.lt.s32.totalorder %v2723, 5120
          %vm3236 = vcmp.lt.s32.totalorder %v2724, 5120
          %vm3237 = vcmp.lt.s32.totalorder %v2725, 5120
          %vm3238 = vcmp.lt.s32.totalorder %v2726, 5120
          %vm3239 = vcmp.lt.s32.totalorder %v2727, 5120
          %vm3240 = vcmp.lt.s32.totalorder %v2728, 5120
          %vm3241 = vcmp.lt.s32.totalorder %v2729, 5120
          %vm3242 = vcmp.lt.s32.totalorder %v2730, 5120
          %vm3243 = vcmp.lt.s32.totalorder %v2731, 5120
          %vm3244 = vcmp.lt.s32.totalorder %v2732, 5120
          %vm3245 = vcmp.lt.s32.totalorder %v2733, 5120
          %vm3246 = vcmp.lt.s32.totalorder %v2734, 5120
          %vm3247 = vcmp.lt.s32.totalorder %v2735, 5120
          %vm3248 = vcmp.lt.s32.totalorder %v2736, 5120
          %vm3249 = vcmp.lt.s32.totalorder %v2737, 5120
          %vm3250 = vcmp.lt.s32.totalorder %v2738, 5120
          %vm3251 = vcmp.lt.s32.totalorder %v2739, 5120
          %vm3252 = vcmp.lt.s32.totalorder %v2740, 5120
          %vm3253 = vcmp.lt.s32.totalorder %v2741, 5120
          %vm3254 = vcmp.lt.s32.totalorder %v2742, 5120
          %vm3255 = vcmp.lt.s32.totalorder %v2743, 5120
          %vm3256 = vcmp.lt.s32.totalorder %v2744, 5120
          %vm3257 = vcmp.lt.s32.totalorder %v2745, 5120
          %vm3258 = vcmp.lt.s32.totalorder %v2746, 5120
          %vm3259 = vcmp.lt.s32.totalorder %v2747, 5120
          %vm3260 = vcmp.lt.s32.totalorder %v2748, 5120
          %vm3261 = vcmp.lt.s32.totalorder %v2749, 5120
          %vm3262 = vcmp.lt.s32.totalorder %v2750, 5120
          %vm3263 = vcmp.lt.s32.totalorder %v2751, 5120
          %vm3264 = vcmp.lt.s32.totalorder %v2752, 5120
          %vm3265 = vcmp.lt.s32.totalorder %v2753, 5120
          %vm3266 = vcmp.lt.s32.totalorder %v2754, 5120
          %vm3267 = vcmp.lt.s32.totalorder %v2755, 5120
          %vm3268 = vcmp.lt.s32.totalorder %v2756, 5120
          %vm3269 = vcmp.lt.s32.totalorder %v2757, 5120
          %vm3270 = vcmp.lt.s32.totalorder %v2758, 5120
          %vm3271 = vcmp.lt.s32.totalorder %v2759, 5120
          %vm3272 = vcmp.lt.s32.totalorder %v2760, 5120
          %vm3273 = vcmp.lt.s32.totalorder %v2761, 5120
          %vm3274 = vcmp.lt.s32.totalorder %v2762, 5120
          %vm3275 = vcmp.lt.s32.totalorder %v2763, 5120
          %vm3276 = vcmp.lt.s32.totalorder %v2764, 5120
          %vm3277 = vcmp.lt.s32.totalorder %v2765, 5120
          %vm3278 = vcmp.lt.s32.totalorder %v2766, 5120
          %vm3279 = vcmp.lt.s32.totalorder %v2767, 5120
          %vm3280 = vcmp.lt.s32.totalorder %v2768, 5120
          %vm3281 = vcmp.lt.s32.totalorder %v2769, 5120
          %vm3282 = vcmp.lt.s32.totalorder %v2770, 5120
          %vm3283 = vcmp.lt.s32.totalorder %v2771, 5120
          %vm3284 = vcmp.lt.s32.totalorder %v2772, 5120
          %vm3285 = vcmp.lt.s32.totalorder %v2773, 5120
          %vm3286 = vcmp.lt.s32.totalorder %v2774, 5120
          %vm3287 = vcmp.lt.s32.totalorder %v2775, 5120
          %vm3288 = vcmp.lt.s32.totalorder %v2776, 5120
          %vm3289 = vcmp.lt.s32.totalorder %v2777, 5120
          %vm3290 = vcmp.lt.s32.totalorder %v2778, 5120
          %vm3291 = vcmp.lt.s32.totalorder %v2779, 5120
          %vm3292 = vcmp.lt.s32.totalorder %v2780, 5120
          %vm3293 = vcmp.lt.s32.totalorder %v2781, 5120
          %vm3294 = vcmp.lt.s32.totalorder %v2782, 5120
          %vm3295 = vcmp.lt.s32.totalorder %v2783, 5120
          %v3296 = vsel %vm2784, %v1241, 0.0
          %v3297 = vsel %vm2785, %v1242, 0.0
          %v3298 = vsel %vm2786, %v1243, 0.0
          %v3299 = vsel %vm2787, %v1244, 0.0
          %v3300 = vsel %vm2788, %v1245, 0.0
          %v3301 = vsel %vm2789, %v1246, 0.0
          %v3302 = vsel %vm2790, %v1247, 0.0
          %v3303 = vsel %vm2791, %v1248, 0.0
          %v3304 = vsel %vm2792, %v1249, 0.0
          %v3305 = vsel %vm2793, %v1250, 0.0
          %v3306 = vsel %vm2794, %v1251, 0.0
          %v3307 = vsel %vm2795, %v1252, 0.0
          %v3308 = vsel %vm2796, %v1253, 0.0
          %v3309 = vsel %vm2797, %v1254, 0.0
          %v3310 = vsel %vm2798, %v1255, 0.0
          %v3311 = vsel %vm2799, %v1256, 0.0
          %v3312 = vsel %vm2800, %v1257, 0.0
          %v3313 = vsel %vm2801, %v1258, 0.0
          %v3314 = vsel %vm2802, %v1259, 0.0
          %v3315 = vsel %vm2803, %v1260, 0.0
          %v3316 = vsel %vm2804, %v1261, 0.0
          %v3317 = vsel %vm2805, %v1262, 0.0
          %v3318 = vsel %vm2806, %v1263, 0.0
          %v3319 = vsel %vm2807, %v1264, 0.0
          %v3320 = vsel %vm2808, %v1265, 0.0
          %v3321 = vsel %vm2809, %v1266, 0.0
          %v3322 = vsel %vm2810, %v1267, 0.0
          %v3323 = vsel %vm2811, %v1268, 0.0
          %v3324 = vsel %vm2812, %v1269, 0.0
          %v3325 = vsel %vm2813, %v1270, 0.0
          %v3326 = vsel %vm2814, %v1271, 0.0
          %v3327 = vsel %vm2815, %v1272, 0.0
          %v3328 = vsel %vm2816, %v1273, 0.0
          %v3329 = vsel %vm2817, %v1274, 0.0
          %v3330 = vsel %vm2818, %v1275, 0.0
          %v3331 = vsel %vm2819, %v1276, 0.0
          %v3332 = vsel %vm2820, %v1277, 0.0
          %v3333 = vsel %vm2821, %v1278, 0.0
          %v3334 = vsel %vm2822, %v1279, 0.0
          %v3335 = vsel %vm2823, %v1280, 0.0
          %v3336 = vsel %vm2824, %v1281, 0.0
          %v3337 = vsel %vm2825, %v1282, 0.0
          %v3338 = vsel %vm2826, %v1283, 0.0
          %v3339 = vsel %vm2827, %v1284, 0.0
          %v3340 = vsel %vm2828, %v1285, 0.0
          %v3341 = vsel %vm2829, %v1286, 0.0
          %v3342 = vsel %vm2830, %v1287, 0.0
          %v3343 = vsel %vm2831, %v1288, 0.0
          %v3344 = vsel %vm2832, %v1289, 0.0
          %v3345 = vsel %vm2833, %v1290, 0.0
          %v3346 = vsel %vm2834, %v1291, 0.0
          %v3347 = vsel %vm2835, %v1292, 0.0
          %v3348 = vsel %vm2836, %v1293, 0.0
          %v3349 = vsel %vm2837, %v1294, 0.0
          %v3350 = vsel %vm2838, %v1295, 0.0
          %v3351 = vsel %vm2839, %v1296, 0.0
          %v3352 = vsel %vm2840, %v1297, 0.0
          %v3353 = vsel %vm2841, %v1298, 0.0
          %v3354 = vsel %vm2842, %v1299, 0.0
          %v3355 = vsel %vm2843, %v1300, 0.0
          %v3356 = vsel %vm2844, %v1301, 0.0
          %v3357 = vsel %vm2845, %v1302, 0.0
          %v3358 = vsel %vm2846, %v1303, 0.0
          %v3359 = vsel %vm2847, %v1304, 0.0
          %v3360 = vsel %vm2848, %v1305, 0.0
          %v3361 = vsel %vm2849, %v1306, 0.0
          %v3362 = vsel %vm2850, %v1307, 0.0
          %v3363 = vsel %vm2851, %v1308, 0.0
          %v3364 = vsel %vm2852, %v1309, 0.0
          %v3365 = vsel %vm2853, %v1310, 0.0
          %v3366 = vsel %vm2854, %v1311, 0.0
          %v3367 = vsel %vm2855, %v1312, 0.0
          %v3368 = vsel %vm2856, %v1313, 0.0
          %v3369 = vsel %vm2857, %v1314, 0.0
          %v3370 = vsel %vm2858, %v1315, 0.0
          %v3371 = vsel %vm2859, %v1316, 0.0
          %v3372 = vsel %vm2860, %v1317, 0.0
          %v3373 = vsel %vm2861, %v1318, 0.0
          %v3374 = vsel %vm2862, %v1319, 0.0
          %v3375 = vsel %vm2863, %v1320, 0.0
          %v3376 = vsel %vm2864, %v1321, 0.0
          %v3377 = vsel %vm2865, %v1322, 0.0
          %v3378 = vsel %vm2866, %v1323, 0.0
          %v3379 = vsel %vm2867, %v1324, 0.0
          %v3380 = vsel %vm2868, %v1325, 0.0
          %v3381 = vsel %vm2869, %v1326, 0.0
          %v3382 = vsel %vm2870, %v1327, 0.0
          %v3383 = vsel %vm2871, %v1328, 0.0
          %v3384 = vsel %vm2872, %v1329, 0.0
          %v3385 = vsel %vm2873, %v1330, 0.0
          %v3386 = vsel %vm2874, %v1331, 0.0
          %v3387 = vsel %vm2875, %v1332, 0.0
          %v3388 = vsel %vm2876, %v1333, 0.0
          %v3389 = vsel %vm2877, %v1334, 0.0
          %v3390 = vsel %vm2878, %v1335, 0.0
          %v3391 = vsel %vm2879, %v1336, 0.0
          %v3392 = vsel %vm2880, %v1337, 0.0
          %v3393 = vsel %vm2881, %v1338, 0.0
          %v3394 = vsel %vm2882, %v1339, 0.0
          %v3395 = vsel %vm2883, %v1340, 0.0
          %v3396 = vsel %vm2884, %v1341, 0.0
          %v3397 = vsel %vm2885, %v1342, 0.0
          %v3398 = vsel %vm2886, %v1343, 0.0
          %v3399 = vsel %vm2887, %v1344, 0.0
          %v3400 = vsel %vm2888, %v1345, 0.0
          %v3401 = vsel %vm2889, %v1346, 0.0
          %v3402 = vsel %vm2890, %v1347, 0.0
          %v3403 = vsel %vm2891, %v1348, 0.0
          %v3404 = vsel %vm2892, %v1349, 0.0
          %v3405 = vsel %vm2893, %v1350, 0.0
          %v3406 = vsel %vm2894, %v1351, 0.0
          %v3407 = vsel %vm2895, %v1352, 0.0
          %v3408 = vsel %vm2896, %v1353, 0.0
          %v3409 = vsel %vm2897, %v1354, 0.0
          %v3410 = vsel %vm2898, %v1355, 0.0
          %v3411 = vsel %vm2899, %v1356, 0.0
          %v3412 = vsel %vm2900, %v1357, 0.0
          %v3413 = vsel %vm2901, %v1358, 0.0
          %v3414 = vsel %vm2902, %v1359, 0.0
          %v3415 = vsel %vm2903, %v1360, 0.0
          %v3416 = vsel %vm2904, %v1361, 0.0
          %v3417 = vsel %vm2905, %v1362, 0.0
          %v3418 = vsel %vm2906, %v1363, 0.0
          %v3419 = vsel %vm2907, %v1364, 0.0
          %v3420 = vsel %vm2908, %v1365, 0.0
          %v3421 = vsel %vm2909, %v1366, 0.0
          %v3422 = vsel %vm2910, %v1367, 0.0
          %v3423 = vsel %vm2911, %v1368, 0.0
          %v3424 = vsel %vm2912, %v1369, 0.0
          %v3425 = vsel %vm2913, %v1370, 0.0
          %v3426 = vsel %vm2914, %v1371, 0.0
          %v3427 = vsel %vm2915, %v1372, 0.0
          %v3428 = vsel %vm2916, %v1373, 0.0
          %v3429 = vsel %vm2917, %v1374, 0.0
          %v3430 = vsel %vm2918, %v1375, 0.0
          %v3431 = vsel %vm2919, %v1376, 0.0
          %v3432 = vsel %vm2920, %v1377, 0.0
          %v3433 = vsel %vm2921, %v1378, 0.0
          %v3434 = vsel %vm2922, %v1379, 0.0
          %v3435 = vsel %vm2923, %v1380, 0.0
          %v3436 = vsel %vm2924, %v1381, 0.0
          %v3437 = vsel %vm2925, %v1382, 0.0
          %v3438 = vsel %vm2926, %v1383, 0.0
          %v3439 = vsel %vm2927, %v1384, 0.0
          %v3440 = vsel %vm2928, %v1385, 0.0
          %v3441 = vsel %vm2929, %v1386, 0.0
          %v3442 = vsel %vm2930, %v1387, 0.0
          %v3443 = vsel %vm2931, %v1388, 0.0
          %v3444 = vsel %vm2932, %v1389, 0.0
          %v3445 = vsel %vm2933, %v1390, 0.0
          %v3446 = vsel %vm2934, %v1391, 0.0
          %v3447 = vsel %vm2935, %v1392, 0.0
          %v3448 = vsel %vm2936, %v1393, 0.0
          %v3449 = vsel %vm2937, %v1394, 0.0
          %v3450 = vsel %vm2938, %v1395, 0.0
          %v3451 = vsel %vm2939, %v1396, 0.0
          %v3452 = vsel %vm2940, %v1397, 0.0
          %v3453 = vsel %vm2941, %v1398, 0.0
          %v3454 = vsel %vm2942, %v1399, 0.0
          %v3455 = vsel %vm2943, %v1400, 0.0
          %v3456 = vsel %vm2944, %v1401, 0.0
          %v3457 = vsel %vm2945, %v1402, 0.0
          %v3458 = vsel %vm2946, %v1403, 0.0
          %v3459 = vsel %vm2947, %v1404, 0.0
          %v3460 = vsel %vm2948, %v1405, 0.0
          %v3461 = vsel %vm2949, %v1406, 0.0
          %v3462 = vsel %vm2950, %v1407, 0.0
          %v3463 = vsel %vm2951, %v1408, 0.0
          %v3464 = vsel %vm2952, %v1409, 0.0
          %v3465 = vsel %vm2953, %v1410, 0.0
          %v3466 = vsel %vm2954, %v1411, 0.0
          %v3467 = vsel %vm2955, %v1412, 0.0
          %v3468 = vsel %vm2956, %v1413, 0.0
          %v3469 = vsel %vm2957, %v1414, 0.0
          %v3470 = vsel %vm2958, %v1415, 0.0
          %v3471 = vsel %vm2959, %v1416, 0.0
          %v3472 = vsel %vm2960, %v1417, 0.0
          %v3473 = vsel %vm2961, %v1418, 0.0
          %v3474 = vsel %vm2962, %v1419, 0.0
          %v3475 = vsel %vm2963, %v1420, 0.0
          %v3476 = vsel %vm2964, %v1421, 0.0
          %v3477 = vsel %vm2965, %v1422, 0.0
          %v3478 = vsel %vm2966, %v1423, 0.0
          %v3479 = vsel %vm2967, %v1424, 0.0
          %v3480 = vsel %vm2968, %v1425, 0.0
          %v3481 = vsel %vm2969, %v1426, 0.0
          %v3482 = vsel %vm2970, %v1427, 0.0
          %v3483 = vsel %vm2971, %v1428, 0.0
          %v3484 = vsel %vm2972, %v1429, 0.0
          %v3485 = vsel %vm2973, %v1430, 0.0
          %v3486 = vsel %vm2974, %v1431, 0.0
          %v3487 = vsel %vm2975, %v1432, 0.0
          %v3488 = vsel %vm2976, %v1433, 0.0
          %v3489 = vsel %vm2977, %v1434, 0.0
          %v3490 = vsel %vm2978, %v1435, 0.0
          %v3491 = vsel %vm2979, %v1436, 0.0
          %v3492 = vsel %vm2980, %v1437, 0.0
          %v3493 = vsel %vm2981, %v1438, 0.0
          %v3494 = vsel %vm2982, %v1439, 0.0
          %v3495 = vsel %vm2983, %v1440, 0.0
          %v3496 = vsel %vm2984, %v1441, 0.0
          %v3497 = vsel %vm2985, %v1442, 0.0
          %v3498 = vsel %vm2986, %v1443, 0.0
          %v3499 = vsel %vm2987, %v1444, 0.0
          %v3500 = vsel %vm2988, %v1445, 0.0
          %v3501 = vsel %vm2989, %v1446, 0.0
          %v3502 = vsel %vm2990, %v1447, 0.0
          %v3503 = vsel %vm2991, %v1448, 0.0
          %v3504 = vsel %vm2992, %v1449, 0.0
          %v3505 = vsel %vm2993, %v1450, 0.0
          %v3506 = vsel %vm2994, %v1451, 0.0
          %v3507 = vsel %vm2995, %v1452, 0.0
          %v3508 = vsel %vm2996, %v1453, 0.0
          %v3509 = vsel %vm2997, %v1454, 0.0
          %v3510 = vsel %vm2998, %v1455, 0.0
          %v3511 = vsel %vm2999, %v1456, 0.0
          %v3512 = vsel %vm3000, %v1457, 0.0
          %v3513 = vsel %vm3001, %v1458, 0.0
          %v3514 = vsel %vm3002, %v1459, 0.0
          %v3515 = vsel %vm3003, %v1460, 0.0
          %v3516 = vsel %vm3004, %v1461, 0.0
          %v3517 = vsel %vm3005, %v1462, 0.0
          %v3518 = vsel %vm3006, %v1463, 0.0
          %v3519 = vsel %vm3007, %v1464, 0.0
          %v3520 = vsel %vm3008, %v1465, 0.0
          %v3521 = vsel %vm3009, %v1466, 0.0
          %v3522 = vsel %vm3010, %v1467, 0.0
          %v3523 = vsel %vm3011, %v1468, 0.0
          %v3524 = vsel %vm3012, %v1469, 0.0
          %v3525 = vsel %vm3013, %v1470, 0.0
          %v3526 = vsel %vm3014, %v1471, 0.0
          %v3527 = vsel %vm3015, %v1472, 0.0
          %v3528 = vsel %vm3016, %v1473, 0.0
          %v3529 = vsel %vm3017, %v1474, 0.0
          %v3530 = vsel %vm3018, %v1475, 0.0
          %v3531 = vsel %vm3019, %v1476, 0.0
          %v3532 = vsel %vm3020, %v1477, 0.0
          %v3533 = vsel %vm3021, %v1478, 0.0
          %v3534 = vsel %vm3022, %v1479, 0.0
          %v3535 = vsel %vm3023, %v1480, 0.0
          %v3536 = vsel %vm3024, %v1481, 0.0
          %v3537 = vsel %vm3025, %v1482, 0.0
          %v3538 = vsel %vm3026, %v1483, 0.0
          %v3539 = vsel %vm3027, %v1484, 0.0
          %v3540 = vsel %vm3028, %v1485, 0.0
          %v3541 = vsel %vm3029, %v1486, 0.0
          %v3542 = vsel %vm3030, %v1487, 0.0
          %v3543 = vsel %vm3031, %v1488, 0.0
          %v3544 = vsel %vm3032, %v1489, 0.0
          %v3545 = vsel %vm3033, %v1490, 0.0
          %v3546 = vsel %vm3034, %v1491, 0.0
          %v3547 = vsel %vm3035, %v1492, 0.0
          %v3548 = vsel %vm3036, %v1493, 0.0
          %v3549 = vsel %vm3037, %v1494, 0.0
          %v3550 = vsel %vm3038, %v1495, 0.0
          %v3551 = vsel %vm3039, %v1496, 0.0
          %v3552 = vsel %vm3040, %v1497, 0.0
          %v3553 = vsel %vm3041, %v1498, 0.0
          %v3554 = vsel %vm3042, %v1499, 0.0
          %v3555 = vsel %vm3043, %v1500, 0.0
          %v3556 = vsel %vm3044, %v1501, 0.0
          %v3557 = vsel %vm3045, %v1502, 0.0
          %v3558 = vsel %vm3046, %v1503, 0.0
          %v3559 = vsel %vm3047, %v1504, 0.0
          %v3560 = vsel %vm3048, %v1505, 0.0
          %v3561 = vsel %vm3049, %v1506, 0.0
          %v3562 = vsel %vm3050, %v1507, 0.0
          %v3563 = vsel %vm3051, %v1508, 0.0
          %v3564 = vsel %vm3052, %v1509, 0.0
          %v3565 = vsel %vm3053, %v1510, 0.0
          %v3566 = vsel %vm3054, %v1511, 0.0
          %v3567 = vsel %vm3055, %v1512, 0.0
          %v3568 = vsel %vm3056, %v1513, 0.0
          %v3569 = vsel %vm3057, %v1514, 0.0
          %v3570 = vsel %vm3058, %v1515, 0.0
          %v3571 = vsel %vm3059, %v1516, 0.0
          %v3572 = vsel %vm3060, %v1517, 0.0
          %v3573 = vsel %vm3061, %v1518, 0.0
          %v3574 = vsel %vm3062, %v1519, 0.0
          %v3575 = vsel %vm3063, %v1520, 0.0
          %v3576 = vsel %vm3064, %v1521, 0.0
          %v3577 = vsel %vm3065, %v1522, 0.0
          %v3578 = vsel %vm3066, %v1523, 0.0
          %v3579 = vsel %vm3067, %v1524, 0.0
          %v3580 = vsel %vm3068, %v1525, 0.0
          %v3581 = vsel %vm3069, %v1526, 0.0
          %v3582 = vsel %vm3070, %v1527, 0.0
          %v3583 = vsel %vm3071, %v1528, 0.0
          %v3584 = vsel %vm3072, %v1529, 0.0
          %v3585 = vsel %vm3073, %v1530, 0.0
          %v3586 = vsel %vm3074, %v1531, 0.0
          %v3587 = vsel %vm3075, %v1532, 0.0
          %v3588 = vsel %vm3076, %v1533, 0.0
          %v3589 = vsel %vm3077, %v1534, 0.0
          %v3590 = vsel %vm3078, %v1535, 0.0
          %v3591 = vsel %vm3079, %v1536, 0.0
          %v3592 = vsel %vm3080, %v1537, 0.0
          %v3593 = vsel %vm3081, %v1538, 0.0
          %v3594 = vsel %vm3082, %v1539, 0.0
          %v3595 = vsel %vm3083, %v1540, 0.0
          %v3596 = vsel %vm3084, %v1541, 0.0
          %v3597 = vsel %vm3085, %v1542, 0.0
          %v3598 = vsel %vm3086, %v1543, 0.0
          %v3599 = vsel %vm3087, %v1544, 0.0
          %v3600 = vsel %vm3088, %v1545, 0.0
          %v3601 = vsel %vm3089, %v1546, 0.0
          %v3602 = vsel %vm3090, %v1547, 0.0
          %v3603 = vsel %vm3091, %v1548, 0.0
          %v3604 = vsel %vm3092, %v1549, 0.0
          %v3605 = vsel %vm3093, %v1550, 0.0
          %v3606 = vsel %vm3094, %v1551, 0.0
          %v3607 = vsel %vm3095, %v1552, 0.0
          %v3608 = vsel %vm3096, %v1553, 0.0
          %v3609 = vsel %vm3097, %v1554, 0.0
          %v3610 = vsel %vm3098, %v1555, 0.0
          %v3611 = vsel %vm3099, %v1556, 0.0
          %v3612 = vsel %vm3100, %v1557, 0.0
          %v3613 = vsel %vm3101, %v1558, 0.0
          %v3614 = vsel %vm3102, %v1559, 0.0
          %v3615 = vsel %vm3103, %v1560, 0.0
          %v3616 = vsel %vm3104, %v1561, 0.0
          %v3617 = vsel %vm3105, %v1562, 0.0
          %v3618 = vsel %vm3106, %v1563, 0.0
          %v3619 = vsel %vm3107, %v1564, 0.0
          %v3620 = vsel %vm3108, %v1565, 0.0
          %v3621 = vsel %vm3109, %v1566, 0.0
          %v3622 = vsel %vm3110, %v1567, 0.0
          %v3623 = vsel %vm3111, %v1568, 0.0
          %v3624 = vsel %vm3112, %v1569, 0.0
          %v3625 = vsel %vm3113, %v1570, 0.0
          %v3626 = vsel %vm3114, %v1571, 0.0
          %v3627 = vsel %vm3115, %v1572, 0.0
          %v3628 = vsel %vm3116, %v1573, 0.0
          %v3629 = vsel %vm3117, %v1574, 0.0
          %v3630 = vsel %vm3118, %v1575, 0.0
          %v3631 = vsel %vm3119, %v1576, 0.0
          %v3632 = vsel %vm3120, %v1577, 0.0
          %v3633 = vsel %vm3121, %v1578, 0.0
          %v3634 = vsel %vm3122, %v1579, 0.0
          %v3635 = vsel %vm3123, %v1580, 0.0
          %v3636 = vsel %vm3124, %v1581, 0.0
          %v3637 = vsel %vm3125, %v1582, 0.0
          %v3638 = vsel %vm3126, %v1583, 0.0
          %v3639 = vsel %vm3127, %v1584, 0.0
          %v3640 = vsel %vm3128, %v1585, 0.0
          %v3641 = vsel %vm3129, %v1586, 0.0
          %v3642 = vsel %vm3130, %v1587, 0.0
          %v3643 = vsel %vm3131, %v1588, 0.0
          %v3644 = vsel %vm3132, %v1589, 0.0
          %v3645 = vsel %vm3133, %v1590, 0.0
          %v3646 = vsel %vm3134, %v1591, 0.0
          %v3647 = vsel %vm3135, %v1592, 0.0
          %v3648 = vsel %vm3136, %v1593, 0.0
          %v3649 = vsel %vm3137, %v1594, 0.0
          %v3650 = vsel %vm3138, %v1595, 0.0
          %v3651 = vsel %vm3139, %v1596, 0.0
          %v3652 = vsel %vm3140, %v1597, 0.0
          %v3653 = vsel %vm3141, %v1598, 0.0
          %v3654 = vsel %vm3142, %v1599, 0.0
          %v3655 = vsel %vm3143, %v1600, 0.0
          %v3656 = vsel %vm3144, %v1601, 0.0
          %v3657 = vsel %vm3145, %v1602, 0.0
          %v3658 = vsel %vm3146, %v1603, 0.0
          %v3659 = vsel %vm3147, %v1604, 0.0
          %v3660 = vsel %vm3148, %v1605, 0.0
          %v3661 = vsel %vm3149, %v1606, 0.0
          %v3662 = vsel %vm3150, %v1607, 0.0
          %v3663 = vsel %vm3151, %v1608, 0.0
          %v3664 = vsel %vm3152, %v1609, 0.0
          %v3665 = vsel %vm3153, %v1610, 0.0
          %v3666 = vsel %vm3154, %v1611, 0.0
          %v3667 = vsel %vm3155, %v1612, 0.0
          %v3668 = vsel %vm3156, %v1613, 0.0
          %v3669 = vsel %vm3157, %v1614, 0.0
          %v3670 = vsel %vm3158, %v1615, 0.0
          %v3671 = vsel %vm3159, %v1616, 0.0
          %v3672 = vsel %vm3160, %v1617, 0.0
          %v3673 = vsel %vm3161, %v1618, 0.0
          %v3674 = vsel %vm3162, %v1619, 0.0
          %v3675 = vsel %vm3163, %v1620, 0.0
          %v3676 = vsel %vm3164, %v1621, 0.0
          %v3677 = vsel %vm3165, %v1622, 0.0
          %v3678 = vsel %vm3166, %v1623, 0.0
          %v3679 = vsel %vm3167, %v1624, 0.0
          %v3680 = vsel %vm3168, %v1625, 0.0
          %v3681 = vsel %vm3169, %v1626, 0.0
          %v3682 = vsel %vm3170, %v1627, 0.0
          %v3683 = vsel %vm3171, %v1628, 0.0
          %v3684 = vsel %vm3172, %v1629, 0.0
          %v3685 = vsel %vm3173, %v1630, 0.0
          %v3686 = vsel %vm3174, %v1631, 0.0
          %v3687 = vsel %vm3175, %v1632, 0.0
          %v3688 = vsel %vm3176, %v1633, 0.0
          %v3689 = vsel %vm3177, %v1634, 0.0
          %v3690 = vsel %vm3178, %v1635, 0.0
          %v3691 = vsel %vm3179, %v1636, 0.0
          %v3692 = vsel %vm3180, %v1637, 0.0
          %v3693 = vsel %vm3181, %v1638, 0.0
          %v3694 = vsel %vm3182, %v1639, 0.0
          %v3695 = vsel %vm3183, %v1640, 0.0
          %v3696 = vsel %vm3184, %v1641, 0.0
          %v3697 = vsel %vm3185, %v1642, 0.0
          %v3698 = vsel %vm3186, %v1643, 0.0
          %v3699 = vsel %vm3187, %v1644, 0.0
          %v3700 = vsel %vm3188, %v1645, 0.0
          %v3701 = vsel %vm3189, %v1646, 0.0
          %v3702 = vsel %vm3190, %v1647, 0.0
          %v3703 = vsel %vm3191, %v1648, 0.0
          %v3704 = vsel %vm3192, %v1649, 0.0
          %v3705 = vsel %vm3193, %v1650, 0.0
          %v3706 = vsel %vm3194, %v1651, 0.0
          %v3707 = vsel %vm3195, %v1652, 0.0
          %v3708 = vsel %vm3196, %v1653, 0.0
          %v3709 = vsel %vm3197, %v1654, 0.0
          %v3710 = vsel %vm3198, %v1655, 0.0
          %v3711 = vsel %vm3199, %v1656, 0.0
          %v3712 = vsel %vm3200, %v1657, 0.0
          %v3713 = vsel %vm3201, %v1658, 0.0
          %v3714 = vsel %vm3202, %v1659, 0.0
          %v3715 = vsel %vm3203, %v1660, 0.0
          %v3716 = vsel %vm3204, %v1661, 0.0
          %v3717 = vsel %vm3205, %v1662, 0.0
          %v3718 = vsel %vm3206, %v1663, 0.0
          %v3719 = vsel %vm3207, %v1664, 0.0
          %v3720 = vsel %vm3208, %v1665, 0.0
          %v3721 = vsel %vm3209, %v1666, 0.0
          %v3722 = vsel %vm3210, %v1667, 0.0
          %v3723 = vsel %vm3211, %v1668, 0.0
          %v3724 = vsel %vm3212, %v1669, 0.0
          %v3725 = vsel %vm3213, %v1670, 0.0
          %v3726 = vsel %vm3214, %v1671, 0.0
          %v3727 = vsel %vm3215, %v1672, 0.0
          %v3728 = vsel %vm3216, %v1673, 0.0
          %v3729 = vsel %vm3217, %v1674, 0.0
          %v3730 = vsel %vm3218, %v1675, 0.0
          %v3731 = vsel %vm3219, %v1676, 0.0
          %v3732 = vsel %vm3220, %v1677, 0.0
          %v3733 = vsel %vm3221, %v1678, 0.0
          %v3734 = vsel %vm3222, %v1679, 0.0
          %v3735 = vsel %vm3223, %v1680, 0.0
          %v3736 = vsel %vm3224, %v1681, 0.0
          %v3737 = vsel %vm3225, %v1682, 0.0
          %v3738 = vsel %vm3226, %v1683, 0.0
          %v3739 = vsel %vm3227, %v1684, 0.0
          %v3740 = vsel %vm3228, %v1685, 0.0
          %v3741 = vsel %vm3229, %v1686, 0.0
          %v3742 = vsel %vm3230, %v1687, 0.0
          %v3743 = vsel %vm3231, %v1688, 0.0
          %v3744 = vsel %vm3232, %v1689, 0.0
          %v3745 = vsel %vm3233, %v1690, 0.0
          %v3746 = vsel %vm3234, %v1691, 0.0
          %v3747 = vsel %vm3235, %v1692, 0.0
          %v3748 = vsel %vm3236, %v1693, 0.0
          %v3749 = vsel %vm3237, %v1694, 0.0
          %v3750 = vsel %vm3238, %v1695, 0.0
          %v3751 = vsel %vm3239, %v1696, 0.0
          %v3752 = vsel %vm3240, %v1697, 0.0
          %v3753 = vsel %vm3241, %v1698, 0.0
          %v3754 = vsel %vm3242, %v1699, 0.0
          %v3755 = vsel %vm3243, %v1700, 0.0
          %v3756 = vsel %vm3244, %v1701, 0.0
          %v3757 = vsel %vm3245, %v1702, 0.0
          %v3758 = vsel %vm3246, %v1703, 0.0
          %v3759 = vsel %vm3247, %v1704, 0.0
          %v3760 = vsel %vm3248, %v1705, 0.0
          %v3761 = vsel %vm3249, %v1706, 0.0
          %v3762 = vsel %vm3250, %v1707, 0.0
          %v3763 = vsel %vm3251, %v1708, 0.0
          %v3764 = vsel %vm3252, %v1709, 0.0
          %v3765 = vsel %vm3253, %v1710, 0.0
          %v3766 = vsel %vm3254, %v1711, 0.0
          %v3767 = vsel %vm3255, %v1712, 0.0
          %v3768 = vsel %vm3256, %v1713, 0.0
          %v3769 = vsel %vm3257, %v1714, 0.0
          %v3770 = vsel %vm3258, %v1715, 0.0
          %v3771 = vsel %vm3259, %v1716, 0.0
          %v3772 = vsel %vm3260, %v1717, 0.0
          %v3773 = vsel %vm3261, %v1718, 0.0
          %v3774 = vsel %vm3262, %v1719, 0.0
          %v3775 = vsel %vm3263, %v1720, 0.0
          %v3776 = vsel %vm3264, %v1721, 0.0
          %v3777 = vsel %vm3265, %v1722, 0.0
          %v3778 = vsel %vm3266, %v1723, 0.0
          %v3779 = vsel %vm3267, %v1724, 0.0
          %v3780 = vsel %vm3268, %v1725, 0.0
          %v3781 = vsel %vm3269, %v1726, 0.0
          %v3782 = vsel %vm3270, %v1727, 0.0
          %v3783 = vsel %vm3271, %v1728, 0.0
          %v3784 = vsel %vm3272, %v1729, 0.0
          %v3785 = vsel %vm3273, %v1730, 0.0
          %v3786 = vsel %vm3274, %v1731, 0.0
          %v3787 = vsel %vm3275, %v1732, 0.0
          %v3788 = vsel %vm3276, %v1733, 0.0
          %v3789 = vsel %vm3277, %v1734, 0.0
          %v3790 = vsel %vm3278, %v1735, 0.0
          %v3791 = vsel %vm3279, %v1736, 0.0
          %v3792 = vsel %vm3280, %v1737, 0.0
          %v3793 = vsel %vm3281, %v1738, 0.0
          %v3794 = vsel %vm3282, %v1739, 0.0
          %v3795 = vsel %vm3283, %v1740, 0.0
          %v3796 = vsel %vm3284, %v1741, 0.0
          %v3797 = vsel %vm3285, %v1742, 0.0
          %v3798 = vsel %vm3286, %v1743, 0.0
          %v3799 = vsel %vm3287, %v1744, 0.0
          %v3800 = vsel %vm3288, %v1745, 0.0
          %v3801 = vsel %vm3289, %v1746, 0.0
          %v3802 = vsel %vm3290, %v1747, 0.0
          %v3803 = vsel %vm3291, %v1748, 0.0
          %v3804 = vsel %vm3292, %v1749, 0.0
          %v3805 = vsel %vm3293, %v1750, 0.0
          %v3806 = vsel %vm3294, %v1751, 0.0
          %v3807 = vsel %vm3295, %v1752, 0.0
          %v3808 = vmul.f32 %v3296, %v3296
          %v3809 = vmul.f32 %v3297, %v3297
          %v3810 = vmul.f32 %v3298, %v3298
          %v3811 = vmul.f32 %v3299, %v3299
          %v3812 = vmul.f32 %v3300, %v3300
          %v3813 = vmul.f32 %v3301, %v3301
          %v3814 = vmul.f32 %v3302, %v3302
          %v3815 = vmul.f32 %v3303, %v3303
          %v3816 = vmul.f32 %v3304, %v3304
          %v3817 = vmul.f32 %v3305, %v3305
          %v3818 = vmul.f32 %v3306, %v3306
          %v3819 = vmul.f32 %v3307, %v3307
          %v3820 = vmul.f32 %v3308, %v3308
          %v3821 = vmul.f32 %v3309, %v3309
          %v3822 = vmul.f32 %v3310, %v3310
          %v3823 = vmul.f32 %v3311, %v3311
          %v3824 = vmul.f32 %v3312, %v3312
          %v3825 = vmul.f32 %v3313, %v3313
          %v3826 = vmul.f32 %v3314, %v3314
          %v3827 = vmul.f32 %v3315, %v3315
          %v3828 = vmul.f32 %v3316, %v3316
          %v3829 = vmul.f32 %v3317, %v3317
          %v3830 = vmul.f32 %v3318, %v3318
          %v3831 = vmul.f32 %v3319, %v3319
          %v3832 = vmul.f32 %v3320, %v3320
          %v3833 = vmul.f32 %v3321, %v3321
          %v3834 = vmul.f32 %v3322, %v3322
          %v3835 = vmul.f32 %v3323, %v3323
          %v3836 = vmul.f32 %v3324, %v3324
          %v3837 = vmul.f32 %v3325, %v3325
          %v3838 = vmul.f32 %v3326, %v3326
          %v3839 = vmul.f32 %v3327, %v3327
          %v3840 = vmul.f32 %v3328, %v3328
          %v3841 = vmul.f32 %v3329, %v3329
          %v3842 = vmul.f32 %v3330, %v3330
          %v3843 = vmul.f32 %v3331, %v3331
          %v3844 = vmul.f32 %v3332, %v3332
          %v3845 = vmul.f32 %v3333, %v3333
          %v3846 = vmul.f32 %v3334, %v3334
          %v3847 = vmul.f32 %v3335, %v3335
          %v3848 = vmul.f32 %v3336, %v3336
          %v3849 = vmul.f32 %v3337, %v3337
          %v3850 = vmul.f32 %v3338, %v3338
          %v3851 = vmul.f32 %v3339, %v3339
          %v3852 = vmul.f32 %v3340, %v3340
          %v3853 = vmul.f32 %v3341, %v3341
          %v3854 = vmul.f32 %v3342, %v3342
          %v3855 = vmul.f32 %v3343, %v3343
          %v3856 = vmul.f32 %v3344, %v3344
          %v3857 = vmul.f32 %v3345, %v3345
          %v3858 = vmul.f32 %v3346, %v3346
          %v3859 = vmul.f32 %v3347, %v3347
          %v3860 = vmul.f32 %v3348, %v3348
          %v3861 = vmul.f32 %v3349, %v3349
          %v3862 = vmul.f32 %v3350, %v3350
          %v3863 = vmul.f32 %v3351, %v3351
          %v3864 = vmul.f32 %v3352, %v3352
          %v3865 = vmul.f32 %v3353, %v3353
          %v3866 = vmul.f32 %v3354, %v3354
          %v3867 = vmul.f32 %v3355, %v3355
          %v3868 = vmul.f32 %v3356, %v3356
          %v3869 = vmul.f32 %v3357, %v3357
          %v3870 = vmul.f32 %v3358, %v3358
          %v3871 = vmul.f32 %v3359, %v3359
          %v3872 = vmul.f32 %v3360, %v3360
          %v3873 = vmul.f32 %v3361, %v3361
          %v3874 = vmul.f32 %v3362, %v3362
          %v3875 = vmul.f32 %v3363, %v3363
          %v3876 = vmul.f32 %v3364, %v3364
          %v3877 = vmul.f32 %v3365, %v3365
          %v3878 = vmul.f32 %v3366, %v3366
          %v3879 = vmul.f32 %v3367, %v3367
          %v3880 = vmul.f32 %v3368, %v3368
          %v3881 = vmul.f32 %v3369, %v3369
          %v3882 = vmul.f32 %v3370, %v3370
          %v3883 = vmul.f32 %v3371, %v3371
          %v3884 = vmul.f32 %v3372, %v3372
          %v3885 = vmul.f32 %v3373, %v3373
          %v3886 = vmul.f32 %v3374, %v3374
          %v3887 = vmul.f32 %v3375, %v3375
          %v3888 = vmul.f32 %v3376, %v3376
          %v3889 = vmul.f32 %v3377, %v3377
          %v3890 = vmul.f32 %v3378, %v3378
          %v3891 = vmul.f32 %v3379, %v3379
          %v3892 = vmul.f32 %v3380, %v3380
          %v3893 = vmul.f32 %v3381, %v3381
          %v3894 = vmul.f32 %v3382, %v3382
          %v3895 = vmul.f32 %v3383, %v3383
          %v3896 = vmul.f32 %v3384, %v3384
          %v3897 = vmul.f32 %v3385, %v3385
          %v3898 = vmul.f32 %v3386, %v3386
          %v3899 = vmul.f32 %v3387, %v3387
          %v3900 = vmul.f32 %v3388, %v3388
          %v3901 = vmul.f32 %v3389, %v3389
          %v3902 = vmul.f32 %v3390, %v3390
          %v3903 = vmul.f32 %v3391, %v3391
          %v3904 = vmul.f32 %v3392, %v3392
          %v3905 = vmul.f32 %v3393, %v3393
          %v3906 = vmul.f32 %v3394, %v3394
          %v3907 = vmul.f32 %v3395, %v3395
          %v3908 = vmul.f32 %v3396, %v3396
          %v3909 = vmul.f32 %v3397, %v3397
          %v3910 = vmul.f32 %v3398, %v3398
          %v3911 = vmul.f32 %v3399, %v3399
          %v3912 = vmul.f32 %v3400, %v3400
          %v3913 = vmul.f32 %v3401, %v3401
          %v3914 = vmul.f32 %v3402, %v3402
          %v3915 = vmul.f32 %v3403, %v3403
          %v3916 = vmul.f32 %v3404, %v3404
          %v3917 = vmul.f32 %v3405, %v3405
          %v3918 = vmul.f32 %v3406, %v3406
          %v3919 = vmul.f32 %v3407, %v3407
          %v3920 = vmul.f32 %v3408, %v3408
          %v3921 = vmul.f32 %v3409, %v3409
          %v3922 = vmul.f32 %v3410, %v3410
          %v3923 = vmul.f32 %v3411, %v3411
          %v3924 = vmul.f32 %v3412, %v3412
          %v3925 = vmul.f32 %v3413, %v3413
          %v3926 = vmul.f32 %v3414, %v3414
          %v3927 = vmul.f32 %v3415, %v3415
          %v3928 = vmul.f32 %v3416, %v3416
          %v3929 = vmul.f32 %v3417, %v3417
          %v3930 = vmul.f32 %v3418, %v3418
          %v3931 = vmul.f32 %v3419, %v3419
          %v3932 = vmul.f32 %v3420, %v3420
          %v3933 = vmul.f32 %v3421, %v3421
          %v3934 = vmul.f32 %v3422, %v3422
          %v3935 = vmul.f32 %v3423, %v3423
          %v3936 = vmul.f32 %v3424, %v3424
          %v3937 = vmul.f32 %v3425, %v3425
          %v3938 = vmul.f32 %v3426, %v3426
          %v3939 = vmul.f32 %v3427, %v3427
          %v3940 = vmul.f32 %v3428, %v3428
          %v3941 = vmul.f32 %v3429, %v3429
          %v3942 = vmul.f32 %v3430, %v3430
          %v3943 = vmul.f32 %v3431, %v3431
          %v3944 = vmul.f32 %v3432, %v3432
          %v3945 = vmul.f32 %v3433, %v3433
          %v3946 = vmul.f32 %v3434, %v3434
          %v3947 = vmul.f32 %v3435, %v3435
          %v3948 = vmul.f32 %v3436, %v3436
          %v3949 = vmul.f32 %v3437, %v3437
          %v3950 = vmul.f32 %v3438, %v3438
          %v3951 = vmul.f32 %v3439, %v3439
          %v3952 = vmul.f32 %v3440, %v3440
          %v3953 = vmul.f32 %v3441, %v3441
          %v3954 = vmul.f32 %v3442, %v3442
          %v3955 = vmul.f32 %v3443, %v3443
          %v3956 = vmul.f32 %v3444, %v3444
          %v3957 = vmul.f32 %v3445, %v3445
          %v3958 = vmul.f32 %v3446, %v3446
          %v3959 = vmul.f32 %v3447, %v3447
          %v3960 = vmul.f32 %v3448, %v3448
          %v3961 = vmul.f32 %v3449, %v3449
          %v3962 = vmul.f32 %v3450, %v3450
          %v3963 = vmul.f32 %v3451, %v3451
          %v3964 = vmul.f32 %v3452, %v3452
          %v3965 = vmul.f32 %v3453, %v3453
          %v3966 = vmul.f32 %v3454, %v3454
          %v3967 = vmul.f32 %v3455, %v3455
          %v3968 = vmul.f32 %v3456, %v3456
          %v3969 = vmul.f32 %v3457, %v3457
          %v3970 = vmul.f32 %v3458, %v3458
          %v3971 = vmul.f32 %v3459, %v3459
          %v3972 = vmul.f32 %v3460, %v3460
          %v3973 = vmul.f32 %v3461, %v3461
          %v3974 = vmul.f32 %v3462, %v3462
          %v3975 = vmul.f32 %v3463, %v3463
          %v3976 = vmul.f32 %v3464, %v3464
          %v3977 = vmul.f32 %v3465, %v3465
          %v3978 = vmul.f32 %v3466, %v3466
          %v3979 = vmul.f32 %v3467, %v3467
          %v3980 = vmul.f32 %v3468, %v3468
          %v3981 = vmul.f32 %v3469, %v3469
          %v3982 = vmul.f32 %v3470, %v3470
          %v3983 = vmul.f32 %v3471, %v3471
          %v3984 = vmul.f32 %v3472, %v3472
          %v3985 = vmul.f32 %v3473, %v3473
          %v3986 = vmul.f32 %v3474, %v3474
          %v3987 = vmul.f32 %v3475, %v3475
          %v3988 = vmul.f32 %v3476, %v3476
          %v3989 = vmul.f32 %v3477, %v3477
          %v3990 = vmul.f32 %v3478, %v3478
          %v3991 = vmul.f32 %v3479, %v3479
          %v3992 = vmul.f32 %v3480, %v3480
          %v3993 = vmul.f32 %v3481, %v3481
          %v3994 = vmul.f32 %v3482, %v3482
          %v3995 = vmul.f32 %v3483, %v3483
          %v3996 = vmul.f32 %v3484, %v3484
          %v3997 = vmul.f32 %v3485, %v3485
          %v3998 = vmul.f32 %v3486, %v3486
          %v3999 = vmul.f32 %v3487, %v3487
          %v4000 = vmul.f32 %v3488, %v3488
          %v4001 = vmul.f32 %v3489, %v3489
          %v4002 = vmul.f32 %v3490, %v3490
          %v4003 = vmul.f32 %v3491, %v3491
          %v4004 = vmul.f32 %v3492, %v3492
          %v4005 = vmul.f32 %v3493, %v3493
          %v4006 = vmul.f32 %v3494, %v3494
          %v4007 = vmul.f32 %v3495, %v3495
          %v4008 = vmul.f32 %v3496, %v3496
          %v4009 = vmul.f32 %v3497, %v3497
          %v4010 = vmul.f32 %v3498, %v3498
          %v4011 = vmul.f32 %v3499, %v3499
          %v4012 = vmul.f32 %v3500, %v3500
          %v4013 = vmul.f32 %v3501, %v3501
          %v4014 = vmul.f32 %v3502, %v3502
          %v4015 = vmul.f32 %v3503, %v3503
          %v4016 = vmul.f32 %v3504, %v3504
          %v4017 = vmul.f32 %v3505, %v3505
          %v4018 = vmul.f32 %v3506, %v3506
          %v4019 = vmul.f32 %v3507, %v3507
          %v4020 = vmul.f32 %v3508, %v3508
          %v4021 = vmul.f32 %v3509, %v3509
          %v4022 = vmul.f32 %v3510, %v3510
          %v4023 = vmul.f32 %v3511, %v3511
          %v4024 = vmul.f32 %v3512, %v3512
          %v4025 = vmul.f32 %v3513, %v3513
          %v4026 = vmul.f32 %v3514, %v3514
          %v4027 = vmul.f32 %v3515, %v3515
          %v4028 = vmul.f32 %v3516, %v3516
          %v4029 = vmul.f32 %v3517, %v3517
          %v4030 = vmul.f32 %v3518, %v3518
          %v4031 = vmul.f32 %v3519, %v3519
          %v4032 = vmul.f32 %v3520, %v3520
          %v4033 = vmul.f32 %v3521, %v3521
          %v4034 = vmul.f32 %v3522, %v3522
          %v4035 = vmul.f32 %v3523, %v3523
          %v4036 = vmul.f32 %v3524, %v3524
          %v4037 = vmul.f32 %v3525, %v3525
          %v4038 = vmul.f32 %v3526, %v3526
          %v4039 = vmul.f32 %v3527, %v3527
          %v4040 = vmul.f32 %v3528, %v3528
          %v4041 = vmul.f32 %v3529, %v3529
          %v4042 = vmul.f32 %v3530, %v3530
          %v4043 = vmul.f32 %v3531, %v3531
          %v4044 = vmul.f32 %v3532, %v3532
          %v4045 = vmul.f32 %v3533, %v3533
          %v4046 = vmul.f32 %v3534, %v3534
          %v4047 = vmul.f32 %v3535, %v3535
          %v4048 = vmul.f32 %v3536, %v3536
          %v4049 = vmul.f32 %v3537, %v3537
          %v4050 = vmul.f32 %v3538, %v3538
          %v4051 = vmul.f32 %v3539, %v3539
          %v4052 = vmul.f32 %v3540, %v3540
          %v4053 = vmul.f32 %v3541, %v3541
          %v4054 = vmul.f32 %v3542, %v3542
          %v4055 = vmul.f32 %v3543, %v3543
          %v4056 = vmul.f32 %v3544, %v3544
          %v4057 = vmul.f32 %v3545, %v3545
          %v4058 = vmul.f32 %v3546, %v3546
          %v4059 = vmul.f32 %v3547, %v3547
          %v4060 = vmul.f32 %v3548, %v3548
          %v4061 = vmul.f32 %v3549, %v3549
          %v4062 = vmul.f32 %v3550, %v3550
          %v4063 = vmul.f32 %v3551, %v3551
          %v4064 = vmul.f32 %v3552, %v3552
          %v4065 = vmul.f32 %v3553, %v3553
          %v4066 = vmul.f32 %v3554, %v3554
          %v4067 = vmul.f32 %v3555, %v3555
          %v4068 = vmul.f32 %v3556, %v3556
          %v4069 = vmul.f32 %v3557, %v3557
          %v4070 = vmul.f32 %v3558, %v3558
          %v4071 = vmul.f32 %v3559, %v3559
          %v4072 = vmul.f32 %v3560, %v3560
          %v4073 = vmul.f32 %v3561, %v3561
          %v4074 = vmul.f32 %v3562, %v3562
          %v4075 = vmul.f32 %v3563, %v3563
          %v4076 = vmul.f32 %v3564, %v3564
          %v4077 = vmul.f32 %v3565, %v3565
          %v4078 = vmul.f32 %v3566, %v3566
          %v4079 = vmul.f32 %v3567, %v3567
          %v4080 = vmul.f32 %v3568, %v3568
          %v4081 = vmul.f32 %v3569, %v3569
          %v4082 = vmul.f32 %v3570, %v3570
          %v4083 = vmul.f32 %v3571, %v3571
          %v4084 = vmul.f32 %v3572, %v3572
          %v4085 = vmul.f32 %v3573, %v3573
          %v4086 = vmul.f32 %v3574, %v3574
          %v4087 = vmul.f32 %v3575, %v3575
          %v4088 = vmul.f32 %v3576, %v3576
          %v4089 = vmul.f32 %v3577, %v3577
          %v4090 = vmul.f32 %v3578, %v3578
          %v4091 = vmul.f32 %v3579, %v3579
          %v4092 = vmul.f32 %v3580, %v3580
          %v4093 = vmul.f32 %v3581, %v3581
          %v4094 = vmul.f32 %v3582, %v3582
          %v4095 = vmul.f32 %v3583, %v3583
          %v4096 = vmul.f32 %v3584, %v3584
          %v4097 = vmul.f32 %v3585, %v3585
          %v4098 = vmul.f32 %v3586, %v3586
          %v4099 = vmul.f32 %v3587, %v3587
          %v4100 = vmul.f32 %v3588, %v3588
          %v4101 = vmul.f32 %v3589, %v3589
          %v4102 = vmul.f32 %v3590, %v3590
          %v4103 = vmul.f32 %v3591, %v3591
          %v4104 = vmul.f32 %v3592, %v3592
          %v4105 = vmul.f32 %v3593, %v3593
          %v4106 = vmul.f32 %v3594, %v3594
          %v4107 = vmul.f32 %v3595, %v3595
          %v4108 = vmul.f32 %v3596, %v3596
          %v4109 = vmul.f32 %v3597, %v3597
          %v4110 = vmul.f32 %v3598, %v3598
          %v4111 = vmul.f32 %v3599, %v3599
          %v4112 = vmul.f32 %v3600, %v3600
          %v4113 = vmul.f32 %v3601, %v3601
          %v4114 = vmul.f32 %v3602, %v3602
          %v4115 = vmul.f32 %v3603, %v3603
          %v4116 = vmul.f32 %v3604, %v3604
          %v4117 = vmul.f32 %v3605, %v3605
          %v4118 = vmul.f32 %v3606, %v3606
          %v4119 = vmul.f32 %v3607, %v3607
          %v4120 = vmul.f32 %v3608, %v3608
          %v4121 = vmul.f32 %v3609, %v3609
          %v4122 = vmul.f32 %v3610, %v3610
          %v4123 = vmul.f32 %v3611, %v3611
          %v4124 = vmul.f32 %v3612, %v3612
          %v4125 = vmul.f32 %v3613, %v3613
          %v4126 = vmul.f32 %v3614, %v3614
          %v4127 = vmul.f32 %v3615, %v3615
          %v4128 = vmul.f32 %v3616, %v3616
          %v4129 = vmul.f32 %v3617, %v3617
          %v4130 = vmul.f32 %v3618, %v3618
          %v4131 = vmul.f32 %v3619, %v3619
          %v4132 = vmul.f32 %v3620, %v3620
          %v4133 = vmul.f32 %v3621, %v3621
          %v4134 = vmul.f32 %v3622, %v3622
          %v4135 = vmul.f32 %v3623, %v3623
          %v4136 = vmul.f32 %v3624, %v3624
          %v4137 = vmul.f32 %v3625, %v3625
          %v4138 = vmul.f32 %v3626, %v3626
          %v4139 = vmul.f32 %v3627, %v3627
          %v4140 = vmul.f32 %v3628, %v3628
          %v4141 = vmul.f32 %v3629, %v3629
          %v4142 = vmul.f32 %v3630, %v3630
          %v4143 = vmul.f32 %v3631, %v3631
          %v4144 = vmul.f32 %v3632, %v3632
          %v4145 = vmul.f32 %v3633, %v3633
          %v4146 = vmul.f32 %v3634, %v3634
          %v4147 = vmul.f32 %v3635, %v3635
          %v4148 = vmul.f32 %v3636, %v3636
          %v4149 = vmul.f32 %v3637, %v3637
          %v4150 = vmul.f32 %v3638, %v3638
          %v4151 = vmul.f32 %v3639, %v3639
          %v4152 = vmul.f32 %v3640, %v3640
          %v4153 = vmul.f32 %v3641, %v3641
          %v4154 = vmul.f32 %v3642, %v3642
          %v4155 = vmul.f32 %v3643, %v3643
          %v4156 = vmul.f32 %v3644, %v3644
          %v4157 = vmul.f32 %v3645, %v3645
          %v4158 = vmul.f32 %v3646, %v3646
          %v4159 = vmul.f32 %v3647, %v3647
          %v4160 = vmul.f32 %v3648, %v3648
          %v4161 = vmul.f32 %v3649, %v3649
          %v4162 = vmul.f32 %v3650, %v3650
          %v4163 = vmul.f32 %v3651, %v3651
          %v4164 = vmul.f32 %v3652, %v3652
          %v4165 = vmul.f32 %v3653, %v3653
          %v4166 = vmul.f32 %v3654, %v3654
          %v4167 = vmul.f32 %v3655, %v3655
          %v4168 = vmul.f32 %v3656, %v3656
          %v4169 = vmul.f32 %v3657, %v3657
          %v4170 = vmul.f32 %v3658, %v3658
          %v4171 = vmul.f32 %v3659, %v3659
          %v4172 = vmul.f32 %v3660, %v3660
          %v4173 = vmul.f32 %v3661, %v3661
          %v4174 = vmul.f32 %v3662, %v3662
          %v4175 = vmul.f32 %v3663, %v3663
          %v4176 = vmul.f32 %v3664, %v3664
          %v4177 = vmul.f32 %v3665, %v3665
          %v4178 = vmul.f32 %v3666, %v3666
          %v4179 = vmul.f32 %v3667, %v3667
          %v4180 = vmul.f32 %v3668, %v3668
          %v4181 = vmul.f32 %v3669, %v3669
          %v4182 = vmul.f32 %v3670, %v3670
          %v4183 = vmul.f32 %v3671, %v3671
          %v4184 = vmul.f32 %v3672, %v3672
          %v4185 = vmul.f32 %v3673, %v3673
          %v4186 = vmul.f32 %v3674, %v3674
          %v4187 = vmul.f32 %v3675, %v3675
          %v4188 = vmul.f32 %v3676, %v3676
          %v4189 = vmul.f32 %v3677, %v3677
          %v4190 = vmul.f32 %v3678, %v3678
          %v4191 = vmul.f32 %v3679, %v3679
          %v4192 = vmul.f32 %v3680, %v3680
          %v4193 = vmul.f32 %v3681, %v3681
          %v4194 = vmul.f32 %v3682, %v3682
          %v4195 = vmul.f32 %v3683, %v3683
          %v4196 = vmul.f32 %v3684, %v3684
          %v4197 = vmul.f32 %v3685, %v3685
          %v4198 = vmul.f32 %v3686, %v3686
          %v4199 = vmul.f32 %v3687, %v3687
          %v4200 = vmul.f32 %v3688, %v3688
          %v4201 = vmul.f32 %v3689, %v3689
          %v4202 = vmul.f32 %v3690, %v3690
          %v4203 = vmul.f32 %v3691, %v3691
          %v4204 = vmul.f32 %v3692, %v3692
          %v4205 = vmul.f32 %v3693, %v3693
          %v4206 = vmul.f32 %v3694, %v3694
          %v4207 = vmul.f32 %v3695, %v3695
          %v4208 = vmul.f32 %v3696, %v3696
          %v4209 = vmul.f32 %v3697, %v3697
          %v4210 = vmul.f32 %v3698, %v3698
          %v4211 = vmul.f32 %v3699, %v3699
          %v4212 = vmul.f32 %v3700, %v3700
          %v4213 = vmul.f32 %v3701, %v3701
          %v4214 = vmul.f32 %v3702, %v3702
          %v4215 = vmul.f32 %v3703, %v3703
          %v4216 = vmul.f32 %v3704, %v3704
          %v4217 = vmul.f32 %v3705, %v3705
          %v4218 = vmul.f32 %v3706, %v3706
          %v4219 = vmul.f32 %v3707, %v3707
          %v4220 = vmul.f32 %v3708, %v3708
          %v4221 = vmul.f32 %v3709, %v3709
          %v4222 = vmul.f32 %v3710, %v3710
          %v4223 = vmul.f32 %v3711, %v3711
          %v4224 = vmul.f32 %v3712, %v3712
          %v4225 = vmul.f32 %v3713, %v3713
          %v4226 = vmul.f32 %v3714, %v3714
          %v4227 = vmul.f32 %v3715, %v3715
          %v4228 = vmul.f32 %v3716, %v3716
          %v4229 = vmul.f32 %v3717, %v3717
          %v4230 = vmul.f32 %v3718, %v3718
          %v4231 = vmul.f32 %v3719, %v3719
          %v4232 = vmul.f32 %v3720, %v3720
          %v4233 = vmul.f32 %v3721, %v3721
          %v4234 = vmul.f32 %v3722, %v3722
          %v4235 = vmul.f32 %v3723, %v3723
          %v4236 = vmul.f32 %v3724, %v3724
          %v4237 = vmul.f32 %v3725, %v3725
          %v4238 = vmul.f32 %v3726, %v3726
          %v4239 = vmul.f32 %v3727, %v3727
          %v4240 = vmul.f32 %v3728, %v3728
          %v4241 = vmul.f32 %v3729, %v3729
          %v4242 = vmul.f32 %v3730, %v3730
          %v4243 = vmul.f32 %v3731, %v3731
          %v4244 = vmul.f32 %v3732, %v3732
          %v4245 = vmul.f32 %v3733, %v3733
          %v4246 = vmul.f32 %v3734, %v3734
          %v4247 = vmul.f32 %v3735, %v3735
          %v4248 = vmul.f32 %v3736, %v3736
          %v4249 = vmul.f32 %v3737, %v3737
          %v4250 = vmul.f32 %v3738, %v3738
          %v4251 = vmul.f32 %v3739, %v3739
          %v4252 = vmul.f32 %v3740, %v3740
          %v4253 = vmul.f32 %v3741, %v3741
          %v4254 = vmul.f32 %v3742, %v3742
          %v4255 = vmul.f32 %v3743, %v3743
          %v4256 = vmul.f32 %v3744, %v3744
          %v4257 = vmul.f32 %v3745, %v3745
          %v4258 = vmul.f32 %v3746, %v3746
          %v4259 = vmul.f32 %v3747, %v3747
          %v4260 = vmul.f32 %v3748, %v3748
          %v4261 = vmul.f32 %v3749, %v3749
          %v4262 = vmul.f32 %v3750, %v3750
          %v4263 = vmul.f32 %v3751, %v3751
          %v4264 = vmul.f32 %v3752, %v3752
          %v4265 = vmul.f32 %v3753, %v3753
          %v4266 = vmul.f32 %v3754, %v3754
          %v4267 = vmul.f32 %v3755, %v3755
          %v4268 = vmul.f32 %v3756, %v3756
          %v4269 = vmul.f32 %v3757, %v3757
          %v4270 = vmul.f32 %v3758, %v3758
          %v4271 = vmul.f32 %v3759, %v3759
          %v4272 = vmul.f32 %v3760, %v3760
          %v4273 = vmul.f32 %v3761, %v3761
          %v4274 = vmul.f32 %v3762, %v3762
          %v4275 = vmul.f32 %v3763, %v3763
          %v4276 = vmul.f32 %v3764, %v3764
          %v4277 = vmul.f32 %v3765, %v3765
          %v4278 = vmul.f32 %v3766, %v3766
          %v4279 = vmul.f32 %v3767, %v3767
          %v4280 = vmul.f32 %v3768, %v3768
          %v4281 = vmul.f32 %v3769, %v3769
          %v4282 = vmul.f32 %v3770, %v3770
          %v4283 = vmul.f32 %v3771, %v3771
          %v4284 = vmul.f32 %v3772, %v3772
          %v4285 = vmul.f32 %v3773, %v3773
          %v4286 = vmul.f32 %v3774, %v3774
          %v4287 = vmul.f32 %v3775, %v3775
          %v4288 = vmul.f32 %v3776, %v3776
          %v4289 = vmul.f32 %v3777, %v3777
          %v4290 = vmul.f32 %v3778, %v3778
          %v4291 = vmul.f32 %v3779, %v3779
          %v4292 = vmul.f32 %v3780, %v3780
          %v4293 = vmul.f32 %v3781, %v3781
          %v4294 = vmul.f32 %v3782, %v3782
          %v4295 = vmul.f32 %v3783, %v3783
          %v4296 = vmul.f32 %v3784, %v3784
          %v4297 = vmul.f32 %v3785, %v3785
          %v4298 = vmul.f32 %v3786, %v3786
          %v4299 = vmul.f32 %v3787, %v3787
          %v4300 = vmul.f32 %v3788, %v3788
          %v4301 = vmul.f32 %v3789, %v3789
          %v4302 = vmul.f32 %v3790, %v3790
          %v4303 = vmul.f32 %v3791, %v3791
          %v4304 = vmul.f32 %v3792, %v3792
          %v4305 = vmul.f32 %v3793, %v3793
          %v4306 = vmul.f32 %v3794, %v3794
          %v4307 = vmul.f32 %v3795, %v3795
          %v4308 = vmul.f32 %v3796, %v3796
          %v4309 = vmul.f32 %v3797, %v3797
          %v4310 = vmul.f32 %v3798, %v3798
          %v4311 = vmul.f32 %v3799, %v3799
          %v4312 = vmul.f32 %v3800, %v3800
          %v4313 = vmul.f32 %v3801, %v3801
          %v4314 = vmul.f32 %v3802, %v3802
          %v4315 = vmul.f32 %v3803, %v3803
          %v4316 = vmul.f32 %v3804, %v3804
          %v4317 = vmul.f32 %v3805, %v3805
          %v4318 = vmul.f32 %v3806, %v3806
          %v4319 = vmul.f32 %v3807, %v3807
          %v4320 = vld [vmem:[#allocation7] sm:$0xff]
          %v4321 = vadd.f32 %v3808, %v3809
          %v4322 = vadd.f32 %v4321, %v3810
          %v4323 = vadd.f32 %v4322, %v3811
          %v4324 = vadd.f32 %v4323, %v3812
          %v4325 = vadd.f32 %v4324, %v3813
          %v4326 = vadd.f32 %v4325, %v3814
          %v4327 = vadd.f32 %v4326, %v3815
          %v4328 = vadd.f32 %v4327, %v3816
          %v4329 = vadd.f32 %v4328, %v3817
          %v4330 = vadd.f32 %v4329, %v3818
          %v4331 = vadd.f32 %v4330, %v3819
          %v4332 = vadd.f32 %v4331, %v3820
          %v4333 = vadd.f32 %v4332, %v3821
          %v4334 = vadd.f32 %v4333, %v3822
          %v4335 = vadd.f32 %v4334, %v3823
          %v4336 = vadd.f32 %v4335, %v3824
          %v4337 = vadd.f32 %v4336, %v3825
          %v4338 = vadd.f32 %v4337, %v3826
          %v4339 = vadd.f32 %v4338, %v3827
          %v4340 = vadd.f32 %v4339, %v3828
          %v4341 = vadd.f32 %v4340, %v3829
          %v4342 = vadd.f32 %v4341, %v3830
          %v4343 = vadd.f32 %v4342, %v3831
          %v4344 = vadd.f32 %v4343, %v3832
          %v4345 = vadd.f32 %v4344, %v3833
          %v4346 = vadd.f32 %v4345, %v3834
          %v4347 = vadd.f32 %v4346, %v3835
          %v4348 = vadd.f32 %v4347, %v3836
          %v4349 = vadd.f32 %v4348, %v3837
          %v4350 = vadd.f32 %v4349, %v3838
          %v4351 = vadd.f32 %v4350, %v3839
          %v4352 = vadd.f32 %v4351, %v3840
          %v4353 = vadd.f32 %v4352, %v3841
          %v4354 = vadd.f32 %v4353, %v3842
          %v4355 = vadd.f32 %v4354, %v3843
          %v4356 = vadd.f32 %v4355, %v3844
          %v4357 = vadd.f32 %v4356, %v3845
          %v4358 = vadd.f32 %v4357, %v3846
          %v4359 = vadd.f32 %v4358, %v3847
          %v4360 = vadd.f32 %v4359, %v3848
          %v4361 = vadd.f32 %v4360, %v3849
          %v4362 = vadd.f32 %v4361, %v3850
          %v4363 = vadd.f32 %v4362, %v3851
          %v4364 = vadd.f32 %v4363, %v3852
          %v4365 = vadd.f32 %v4364, %v3853
          %v4366 = vadd.f32 %v4365, %v3854
          %v4367 = vadd.f32 %v4366, %v3855
          %v4368 = vadd.f32 %v4367, %v3856
          %v4369 = vadd.f32 %v4368, %v3857
          %v4370 = vadd.f32 %v4369, %v3858
          %v4371 = vadd.f32 %v4370, %v3859
          %v4372 = vadd.f32 %v4371, %v3860
          %v4373 = vadd.f32 %v4372, %v3861
          %v4374 = vadd.f32 %v4373, %v3862
          %v4375 = vadd.f32 %v4374, %v3863
          %v4376 = vadd.f32 %v4375, %v3864
          %v4377 = vadd.f32 %v4376, %v3865
          %v4378 = vadd.f32 %v4377, %v3866
          %v4379 = vadd.f32 %v4378, %v3867
          %v4380 = vadd.f32 %v4379, %v3868
          %v4381 = vadd.f32 %v4380, %v3869
          %v4382 = vadd.f32 %v4381, %v3870
          %v4383 = vadd.f32 %v4382, %v3871
          %v4384 = vadd.f32 %v4383, %v3872
          %v4385 = vadd.f32 %v4384, %v3873
          %v4386 = vadd.f32 %v4385, %v3874
          %v4387 = vadd.f32 %v4386, %v3875
          %v4388 = vadd.f32 %v4387, %v3876
          %v4389 = vadd.f32 %v4388, %v3877
          %v4390 = vadd.f32 %v4389, %v3878
          %v4391 = vadd.f32 %v4390, %v3879
          %v4392 = vadd.f32 %v4391, %v3880
          %v4393 = vadd.f32 %v4392, %v3881
          %v4394 = vadd.f32 %v4393, %v3882
          %v4395 = vadd.f32 %v4394, %v3883
          %v4396 = vadd.f32 %v4395, %v3884
          %v4397 = vadd.f32 %v4396, %v3885
          %v4398 = vadd.f32 %v4397, %v3886
          %v4399 = vadd.f32 %v4398, %v3887
          %v4400 = vadd.f32 %v4399, %v3888
          %v4401 = vadd.f32 %v4400, %v3889
          %v4402 = vadd.f32 %v4401, %v3890
          %v4403 = vadd.f32 %v4402, %v3891
          %v4404 = vadd.f32 %v4403, %v3892
          %v4405 = vadd.f32 %v4404, %v3893
          %v4406 = vadd.f32 %v4405, %v3894
          %v4407 = vadd.f32 %v4406, %v3895
          %v4408 = vadd.f32 %v4407, %v3896
          %v4409 = vadd.f32 %v4408, %v3897
          %v4410 = vadd.f32 %v4409, %v3898
          %v4411 = vadd.f32 %v4410, %v3899
          %v4412 = vadd.f32 %v4411, %v3900
          %v4413 = vadd.f32 %v4412, %v3901
          %v4414 = vadd.f32 %v4413, %v3902
          %v4415 = vadd.f32 %v4414, %v3903
          %v4416 = vadd.f32 %v4415, %v3904
          %v4417 = vadd.f32 %v4416, %v3905
          %v4418 = vadd.f32 %v4417, %v3906
          %v4419 = vadd.f32 %v4418, %v3907
          %v4420 = vadd.f32 %v4419, %v3908
          %v4421 = vadd.f32 %v4420, %v3909
          %v4422 = vadd.f32 %v4421, %v3910
          %v4423 = vadd.f32 %v4422, %v3911
          %v4424 = vadd.f32 %v4423, %v3912
          %v4425 = vadd.f32 %v4424, %v3913
          %v4426 = vadd.f32 %v4425, %v3914
          %v4427 = vadd.f32 %v4426, %v3915
          %v4428 = vadd.f32 %v4427, %v3916
          %v4429 = vadd.f32 %v4428, %v3917
          %v4430 = vadd.f32 %v4429, %v3918
          %v4431 = vadd.f32 %v4430, %v3919
          %v4432 = vadd.f32 %v4431, %v3920
          %v4433 = vadd.f32 %v4432, %v3921
          %v4434 = vadd.f32 %v4433, %v3922
          %v4435 = vadd.f32 %v4434, %v3923
          %v4436 = vadd.f32 %v4435, %v3924
          %v4437 = vadd.f32 %v4436, %v3925
          %v4438 = vadd.f32 %v4437, %v3926
          %v4439 = vadd.f32 %v4438, %v3927
          %v4440 = vadd.f32 %v4439, %v3928
          %v4441 = vadd.f32 %v4440, %v3929
          %v4442 = vadd.f32 %v4441, %v3930
          %v4443 = vadd.f32 %v4442, %v3931
          %v4444 = vadd.f32 %v4443, %v3932
          %v4445 = vadd.f32 %v4444, %v3933
          %v4446 = vadd.f32 %v4445, %v3934
          %v4447 = vadd.f32 %v4446, %v3935
          %v4448 = vadd.f32 %v4447, %v3936
          %v4449 = vadd.f32 %v4448, %v3937
          %v4450 = vadd.f32 %v4449, %v3938
          %v4451 = vadd.f32 %v4450, %v3939
          %v4452 = vadd.f32 %v4451, %v3940
          %v4453 = vadd.f32 %v4452, %v3941
          %v4454 = vadd.f32 %v4453, %v3942
          %v4455 = vadd.f32 %v4454, %v3943
          %v4456 = vadd.f32 %v4455, %v3944
          %v4457 = vadd.f32 %v4456, %v3945
          %v4458 = vadd.f32 %v4457, %v3946
          %v4459 = vadd.f32 %v4458, %v3947
          %v4460 = vadd.f32 %v4459, %v3948
          %v4461 = vadd.f32 %v4460, %v3949
          %v4462 = vadd.f32 %v4461, %v3950
          %v4463 = vadd.f32 %v4462, %v3951
          %v4464 = vadd.f32 %v4463, %v3952
          %v4465 = vadd.f32 %v4464, %v3953
          %v4466 = vadd.f32 %v4465, %v3954
          %v4467 = vadd.f32 %v4466, %v3955
          %v4468 = vadd.f32 %v4467, %v3956
          %v4469 = vadd.f32 %v4468, %v3957
          %v4470 = vadd.f32 %v4469, %v3958
          %v4471 = vadd.f32 %v4470, %v3959
          %v4472 = vadd.f32 %v4471, %v3960
          %v4473 = vadd.f32 %v4472, %v3961
          %v4474 = vadd.f32 %v4473, %v3962
          %v4475 = vadd.f32 %v4474, %v3963
          %v4476 = vadd.f32 %v4475, %v3964
          %v4477 = vadd.f32 %v4476, %v3965
          %v4478 = vadd.f32 %v4477, %v3966
          %v4479 = vadd.f32 %v4478, %v3967
          %v4480 = vadd.f32 %v4479, %v3968
          %v4481 = vadd.f32 %v4480, %v3969
          %v4482 = vadd.f32 %v4481, %v3970
          %v4483 = vadd.f32 %v4482, %v3971
          %v4484 = vadd.f32 %v4483, %v3972
          %v4485 = vadd.f32 %v4484, %v3973
          %v4486 = vadd.f32 %v4485, %v3974
          %v4487 = vadd.f32 %v4486, %v3975
          %v4488 = vadd.f32 %v4487, %v3976
          %v4489 = vadd.f32 %v4488, %v3977
          %v4490 = vadd.f32 %v4489, %v3978
          %v4491 = vadd.f32 %v4490, %v3979
          %v4492 = vadd.f32 %v4491, %v3980
          %v4493 = vadd.f32 %v4492, %v3981
          %v4494 = vadd.f32 %v4493, %v3982
          %v4495 = vadd.f32 %v4494, %v3983
          %v4496 = vadd.f32 %v4495, %v3984
          %v4497 = vadd.f32 %v4496, %v3985
          %v4498 = vadd.f32 %v4497, %v3986
          %v4499 = vadd.f32 %v4498, %v3987
          %v4500 = vadd.f32 %v4499, %v3988
          %v4501 = vadd.f32 %v4500, %v3989
          %v4502 = vadd.f32 %v4501, %v3990
          %v4503 = vadd.f32 %v4502, %v3991
          %v4504 = vadd.f32 %v4503, %v3992
          %v4505 = vadd.f32 %v4504, %v3993
          %v4506 = vadd.f32 %v4505, %v3994
          %v4507 = vadd.f32 %v4506, %v3995
          %v4508 = vadd.f32 %v4507, %v3996
          %v4509 = vadd.f32 %v4508, %v3997
          %v4510 = vadd.f32 %v4509, %v3998
          %v4511 = vadd.f32 %v4510, %v3999
          %v4512 = vadd.f32 %v4511, %v4000
          %v4513 = vadd.f32 %v4512, %v4001
          %v4514 = vadd.f32 %v4513, %v4002
          %v4515 = vadd.f32 %v4514, %v4003
          %v4516 = vadd.f32 %v4515, %v4004
          %v4517 = vadd.f32 %v4516, %v4005
          %v4518 = vadd.f32 %v4517, %v4006
          %v4519 = vadd.f32 %v4518, %v4007
          %v4520 = vadd.f32 %v4519, %v4008
          %v4521 = vadd.f32 %v4520, %v4009
          %v4522 = vadd.f32 %v4521, %v4010
          %v4523 = vadd.f32 %v4522, %v4011
          %v4524 = vadd.f32 %v4523, %v4012
          %v4525 = vadd.f32 %v4524, %v4013
          %v4526 = vadd.f32 %v4525, %v4014
          %v4527 = vadd.f32 %v4526, %v4015
          %v4528 = vadd.f32 %v4527, %v4016
          %v4529 = vadd.f32 %v4528, %v4017
          %v4530 = vadd.f32 %v4529, %v4018
          %v4531 = vadd.f32 %v4530, %v4019
          %v4532 = vadd.f32 %v4531, %v4020
          %v4533 = vadd.f32 %v4532, %v4021
          %v4534 = vadd.f32 %v4533, %v4022
          %v4535 = vadd.f32 %v4534, %v4023
          %v4536 = vadd.f32 %v4535, %v4024
          %v4537 = vadd.f32 %v4536, %v4025
          %v4538 = vadd.f32 %v4537, %v4026
          %v4539 = vadd.f32 %v4538, %v4027
          %v4540 = vadd.f32 %v4539, %v4028
          %v4541 = vadd.f32 %v4540, %v4029
          %v4542 = vadd.f32 %v4541, %v4030
          %v4543 = vadd.f32 %v4542, %v4031
          %v4544 = vadd.f32 %v4543, %v4032
          %v4545 = vadd.f32 %v4544, %v4033
          %v4546 = vadd.f32 %v4545, %v4034
          %v4547 = vadd.f32 %v4546, %v4035
          %v4548 = vadd.f32 %v4547, %v4036
          %v4549 = vadd.f32 %v4548, %v4037
          %v4550 = vadd.f32 %v4549, %v4038
          %v4551 = vadd.f32 %v4550, %v4039
          %v4552 = vadd.f32 %v4551, %v4040
          %v4553 = vadd.f32 %v4552, %v4041
          %v4554 = vadd.f32 %v4553, %v4042
          %v4555 = vadd.f32 %v4554, %v4043
          %v4556 = vadd.f32 %v4555, %v4044
          %v4557 = vadd.f32 %v4556, %v4045
          %v4558 = vadd.f32 %v4557, %v4046
          %v4559 = vadd.f32 %v4558, %v4047
          %v4560 = vadd.f32 %v4559, %v4048
          %v4561 = vadd.f32 %v4560, %v4049
          %v4562 = vadd.f32 %v4561, %v4050
          %v4563 = vadd.f32 %v4562, %v4051
          %v4564 = vadd.f32 %v4563, %v4052
          %v4565 = vadd.f32 %v4564, %v4053
          %v4566 = vadd.f32 %v4565, %v4054
          %v4567 = vadd.f32 %v4566, %v4055
          %v4568 = vadd.f32 %v4567, %v4056
          %v4569 = vadd.f32 %v4568, %v4057
          %v4570 = vadd.f32 %v4569, %v4058
          %v4571 = vadd.f32 %v4570, %v4059
          %v4572 = vadd.f32 %v4571, %v4060
          %v4573 = vadd.f32 %v4572, %v4061
          %v4574 = vadd.f32 %v4573, %v4062
          %v4575 = vadd.f32 %v4574, %v4063
          %v4576 = vadd.f32 %v4575, %v4064
          %v4577 = vadd.f32 %v4576, %v4065
          %v4578 = vadd.f32 %v4577, %v4066
          %v4579 = vadd.f32 %v4578, %v4067
          %v4580 = vadd.f32 %v4579, %v4068
          %v4581 = vadd.f32 %v4580, %v4069
          %v4582 = vadd.f32 %v4581, %v4070
          %v4583 = vadd.f32 %v4582, %v4071
          %v4584 = vadd.f32 %v4583, %v4072
          %v4585 = vadd.f32 %v4584, %v4073
          %v4586 = vadd.f32 %v4585, %v4074
          %v4587 = vadd.f32 %v4586, %v4075
          %v4588 = vadd.f32 %v4587, %v4076
          %v4589 = vadd.f32 %v4588, %v4077
          %v4590 = vadd.f32 %v4589, %v4078
          %v4591 = vadd.f32 %v4590, %v4079
          %v4592 = vadd.f32 %v4591, %v4080
          %v4593 = vadd.f32 %v4592, %v4081
          %v4594 = vadd.f32 %v4593, %v4082
          %v4595 = vadd.f32 %v4594, %v4083
          %v4596 = vadd.f32 %v4595, %v4084
          %v4597 = vadd.f32 %v4596, %v4085
          %v4598 = vadd.f32 %v4597, %v4086
          %v4599 = vadd.f32 %v4598, %v4087
          %v4600 = vadd.f32 %v4599, %v4088
          %v4601 = vadd.f32 %v4600, %v4089
          %v4602 = vadd.f32 %v4601, %v4090
          %v4603 = vadd.f32 %v4602, %v4091
          %v4604 = vadd.f32 %v4603, %v4092
          %v4605 = vadd.f32 %v4604, %v4093
          %v4606 = vadd.f32 %v4605, %v4094
          %v4607 = vadd.f32 %v4606, %v4095
          %v4608 = vadd.f32 %v4607, %v4096
          %v4609 = vadd.f32 %v4608, %v4097
          %v4610 = vadd.f32 %v4609, %v4098
          %v4611 = vadd.f32 %v4610, %v4099
          %v4612 = vadd.f32 %v4611, %v4100
          %v4613 = vadd.f32 %v4612, %v4101
          %v4614 = vadd.f32 %v4613, %v4102
          %v4615 = vadd.f32 %v4614, %v4103
          %v4616 = vadd.f32 %v4615, %v4104
          %v4617 = vadd.f32 %v4616, %v4105
          %v4618 = vadd.f32 %v4617, %v4106
          %v4619 = vadd.f32 %v4618, %v4107
          %v4620 = vadd.f32 %v4619, %v4108
          %v4621 = vadd.f32 %v4620, %v4109
          %v4622 = vadd.f32 %v4621, %v4110
          %v4623 = vadd.f32 %v4622, %v4111
          %v4624 = vadd.f32 %v4623, %v4112
          %v4625 = vadd.f32 %v4624, %v4113
          %v4626 = vadd.f32 %v4625, %v4114
          %v4627 = vadd.f32 %v4626, %v4115
          %v4628 = vadd.f32 %v4627, %v4116
          %v4629 = vadd.f32 %v4628, %v4117
          %v4630 = vadd.f32 %v4629, %v4118
          %v4631 = vadd.f32 %v4630, %v4119
          %v4632 = vadd.f32 %v4631, %v4120
          %v4633 = vadd.f32 %v4632, %v4121
          %v4634 = vadd.f32 %v4633, %v4122
          %v4635 = vadd.f32 %v4634, %v4123
          %v4636 = vadd.f32 %v4635, %v4124
          %v4637 = vadd.f32 %v4636, %v4125
          %v4638 = vadd.f32 %v4637, %v4126
          %v4639 = vadd.f32 %v4638, %v4127
          %v4640 = vadd.f32 %v4639, %v4128
          %v4641 = vadd.f32 %v4640, %v4129
          %v4642 = vadd.f32 %v4641, %v4130
          %v4643 = vadd.f32 %v4642, %v4131
          %v4644 = vadd.f32 %v4643, %v4132
          %v4645 = vadd.f32 %v4644, %v4133
          %v4646 = vadd.f32 %v4645, %v4134
          %v4647 = vadd.f32 %v4646, %v4135
          %v4648 = vadd.f32 %v4647, %v4136
          %v4649 = vadd.f32 %v4648, %v4137
          %v4650 = vadd.f32 %v4649, %v4138
          %v4651 = vadd.f32 %v4650, %v4139
          %v4652 = vadd.f32 %v4651, %v4140
          %v4653 = vadd.f32 %v4652, %v4141
          %v4654 = vadd.f32 %v4653, %v4142
          %v4655 = vadd.f32 %v4654, %v4143
          %v4656 = vadd.f32 %v4655, %v4144
          %v4657 = vadd.f32 %v4656, %v4145
          %v4658 = vadd.f32 %v4657, %v4146
          %v4659 = vadd.f32 %v4658, %v4147
          %v4660 = vadd.f32 %v4659, %v4148
          %v4661 = vadd.f32 %v4660, %v4149
          %v4662 = vadd.f32 %v4661, %v4150
          %v4663 = vadd.f32 %v4662, %v4151
          %v4664 = vadd.f32 %v4663, %v4152
          %v4665 = vadd.f32 %v4664, %v4153
          %v4666 = vadd.f32 %v4665, %v4154
          %v4667 = vadd.f32 %v4666, %v4155
          %v4668 = vadd.f32 %v4667, %v4156
          %v4669 = vadd.f32 %v4668, %v4157
          %v4670 = vadd.f32 %v4669, %v4158
          %v4671 = vadd.f32 %v4670, %v4159
          %v4672 = vadd.f32 %v4671, %v4160
          %v4673 = vadd.f32 %v4672, %v4161
          %v4674 = vadd.f32 %v4673, %v4162
          %v4675 = vadd.f32 %v4674, %v4163
          %v4676 = vadd.f32 %v4675, %v4164
          %v4677 = vadd.f32 %v4676, %v4165
          %v4678 = vadd.f32 %v4677, %v4166
          %v4679 = vadd.f32 %v4678, %v4167
          %v4680 = vadd.f32 %v4679, %v4168
          %v4681 = vadd.f32 %v4680, %v4169
          %v4682 = vadd.f32 %v4681, %v4170
          %v4683 = vadd.f32 %v4682, %v4171
          %v4684 = vadd.f32 %v4683, %v4172
          %v4685 = vadd.f32 %v4684, %v4173
          %v4686 = vadd.f32 %v4685, %v4174
          %v4687 = vadd.f32 %v4686, %v4175
          %v4688 = vadd.f32 %v4687, %v4176
          %v4689 = vadd.f32 %v4688, %v4177
          %v4690 = vadd.f32 %v4689, %v4178
          %v4691 = vadd.f32 %v4690, %v4179
          %v4692 = vadd.f32 %v4691, %v4180
          %v4693 = vadd.f32 %v4692, %v4181
          %v4694 = vadd.f32 %v4693, %v4182
          %v4695 = vadd.f32 %v4694, %v4183
          %v4696 = vadd.f32 %v4695, %v4184
          %v4697 = vadd.f32 %v4696, %v4185
          %v4698 = vadd.f32 %v4697, %v4186
          %v4699 = vadd.f32 %v4698, %v4187
          %v4700 = vadd.f32 %v4699, %v4188
          %v4701 = vadd.f32 %v4700, %v4189
          %v4702 = vadd.f32 %v4701, %v4190
          %v4703 = vadd.f32 %v4702, %v4191
          %v4704 = vadd.f32 %v4703, %v4192
          %v4705 = vadd.f32 %v4704, %v4193
          %v4706 = vadd.f32 %v4705, %v4194
          %v4707 = vadd.f32 %v4706, %v4195
          %v4708 = vadd.f32 %v4707, %v4196
          %v4709 = vadd.f32 %v4708, %v4197
          %v4710 = vadd.f32 %v4709, %v4198
          %v4711 = vadd.f32 %v4710, %v4199
          %v4712 = vadd.f32 %v4711, %v4200
          %v4713 = vadd.f32 %v4712, %v4201
          %v4714 = vadd.f32 %v4713, %v4202
          %v4715 = vadd.f32 %v4714, %v4203
          %v4716 = vadd.f32 %v4715, %v4204
          %v4717 = vadd.f32 %v4716, %v4205
          %v4718 = vadd.f32 %v4717, %v4206
          %v4719 = vadd.f32 %v4718, %v4207
          %v4720 = vadd.f32 %v4719, %v4208
          %v4721 = vadd.f32 %v4720, %v4209
          %v4722 = vadd.f32 %v4721, %v4210
          %v4723 = vadd.f32 %v4722, %v4211
          %v4724 = vadd.f32 %v4723, %v4212
          %v4725 = vadd.f32 %v4724, %v4213
          %v4726 = vadd.f32 %v4725, %v4214
          %v4727 = vadd.f32 %v4726, %v4215
          %v4728 = vadd.f32 %v4727, %v4216
          %v4729 = vadd.f32 %v4728, %v4217
          %v4730 = vadd.f32 %v4729, %v4218
          %v4731 = vadd.f32 %v4730, %v4219
          %v4732 = vadd.f32 %v4731, %v4220
          %v4733 = vadd.f32 %v4732, %v4221
          %v4734 = vadd.f32 %v4733, %v4222
          %v4735 = vadd.f32 %v4734, %v4223
          %v4736 = vadd.f32 %v4735, %v4224
          %v4737 = vadd.f32 %v4736, %v4225
          %v4738 = vadd.f32 %v4737, %v4226
          %v4739 = vadd.f32 %v4738, %v4227
          %v4740 = vadd.f32 %v4739, %v4228
          %v4741 = vadd.f32 %v4740, %v4229
          %v4742 = vadd.f32 %v4741, %v4230
          %v4743 = vadd.f32 %v4742, %v4231
          %v4744 = vadd.f32 %v4743, %v4232
          %v4745 = vadd.f32 %v4744, %v4233
          %v4746 = vadd.f32 %v4745, %v4234
          %v4747 = vadd.f32 %v4746, %v4235
          %v4748 = vadd.f32 %v4747, %v4236
          %v4749 = vadd.f32 %v4748, %v4237
          %v4750 = vadd.f32 %v4749, %v4238
          %v4751 = vadd.f32 %v4750, %v4239
          %v4752 = vadd.f32 %v4751, %v4240
          %v4753 = vadd.f32 %v4752, %v4241
          %v4754 = vadd.f32 %v4753, %v4242
          %v4755 = vadd.f32 %v4754, %v4243
          %v4756 = vadd.f32 %v4755, %v4244
          %v4757 = vadd.f32 %v4756, %v4245
          %v4758 = vadd.f32 %v4757, %v4246
          %v4759 = vadd.f32 %v4758, %v4247
          %v4760 = vadd.f32 %v4759, %v4248
          %v4761 = vadd.f32 %v4760, %v4249
          %v4762 = vadd.f32 %v4761, %v4250
          %v4763 = vadd.f32 %v4762, %v4251
          %v4764 = vadd.f32 %v4763, %v4252
          %v4765 = vadd.f32 %v4764, %v4253
          %v4766 = vadd.f32 %v4765, %v4254
          %v4767 = vadd.f32 %v4766, %v4255
          %v4768 = vadd.f32 %v4767, %v4256
          %v4769 = vadd.f32 %v4768, %v4257
          %v4770 = vadd.f32 %v4769, %v4258
          %v4771 = vadd.f32 %v4770, %v4259
          %v4772 = vadd.f32 %v4771, %v4260
          %v4773 = vadd.f32 %v4772, %v4261
          %v4774 = vadd.f32 %v4773, %v4262
          %v4775 = vadd.f32 %v4774, %v4263
          %v4776 = vadd.f32 %v4775, %v4264
          %v4777 = vadd.f32 %v4776, %v4265
          %v4778 = vadd.f32 %v4777, %v4266
          %v4779 = vadd.f32 %v4778, %v4267
          %v4780 = vadd.f32 %v4779, %v4268
          %v4781 = vadd.f32 %v4780, %v4269
          %v4782 = vadd.f32 %v4781, %v4270
          %v4783 = vadd.f32 %v4782, %v4271
          %v4784 = vadd.f32 %v4783, %v4272
          %v4785 = vadd.f32 %v4784, %v4273
          %v4786 = vadd.f32 %v4785, %v4274
          %v4787 = vadd.f32 %v4786, %v4275
          %v4788 = vadd.f32 %v4787, %v4276
          %v4789 = vadd.f32 %v4788, %v4277
          %v4790 = vadd.f32 %v4789, %v4278
          %v4791 = vadd.f32 %v4790, %v4279
          %v4792 = vadd.f32 %v4791, %v4280
          %v4793 = vadd.f32 %v4792, %v4281
          %v4794 = vadd.f32 %v4793, %v4282
          %v4795 = vadd.f32 %v4794, %v4283
          %v4796 = vadd.f32 %v4795, %v4284
          %v4797 = vadd.f32 %v4796, %v4285
          %v4798 = vadd.f32 %v4797, %v4286
          %v4799 = vadd.f32 %v4798, %v4287
          %v4800 = vadd.f32 %v4799, %v4288
          %v4801 = vadd.f32 %v4800, %v4289
          %v4802 = vadd.f32 %v4801, %v4290
          %v4803 = vadd.f32 %v4802, %v4291
          %v4804 = vadd.f32 %v4803, %v4292
          %v4805 = vadd.f32 %v4804, %v4293
          %v4806 = vadd.f32 %v4805, %v4294
          %v4807 = vadd.f32 %v4806, %v4295
          %v4808 = vadd.f32 %v4807, %v4296
          %v4809 = vadd.f32 %v4808, %v4297
          %v4810 = vadd.f32 %v4809, %v4298
          %v4811 = vadd.f32 %v4810, %v4299
          %v4812 = vadd.f32 %v4811, %v4300
          %v4813 = vadd.f32 %v4812, %v4301
          %v4814 = vadd.f32 %v4813, %v4302
          %v4815 = vadd.f32 %v4814, %v4303
          %v4816 = vadd.f32 %v4815, %v4304
          %v4817 = vadd.f32 %v4816, %v4305
          %v4818 = vadd.f32 %v4817, %v4306
          %v4819 = vadd.f32 %v4818, %v4307
          %v4820 = vadd.f32 %v4819, %v4308
          %v4821 = vadd.f32 %v4820, %v4309
          %v4822 = vadd.f32 %v4821, %v4310
          %v4823 = vadd.f32 %v4822, %v4311
          %v4824 = vadd.f32 %v4823, %v4312
          %v4825 = vadd.f32 %v4824, %v4313
          %v4826 = vadd.f32 %v4825, %v4314
          %v4827 = vadd.f32 %v4826, %v4315
          %v4828 = vadd.f32 %v4827, %v4316
          %v4829 = vadd.f32 %v4828, %v4317
          %v4830 = vadd.f32 %v4829, %v4318
          %v4831 = vadd.f32 %v4830, %v4319
          %v4832 = vadd.f32 %v4320, %v4831
          %4833 = vst [vmem:[#allocation7] sm:$0xff] %v4832
        $region44: #{tpu_custom_call.1} parent=27 // pred_fallthru
          _
        %p4834 = scmp.ne.s32.totalorder %s20, 1
        // Predicated region
        $region45: #{tpu_custom_call.1} parent=27 // pred_check
          %p4835 = pneg %p4834
        $region46: #{tpu_custom_call.1} parent=27 // pred_check_branch
          %4837 = sbr.rel (%p4835) target = $region48
        $region47: #{tpu_custom_call.1} parent=27 // pred_region
          %v4838 = vmul.f32 %v1241, %v1241
          %v4839 = vmul.f32 %v1242, %v1242
          %v4840 = vmul.f32 %v1243, %v1243
          %v4841 = vmul.f32 %v1244, %v1244
          %v4842 = vmul.f32 %v1245, %v1245
          %v4843 = vmul.f32 %v1246, %v1246
          %v4844 = vmul.f32 %v1247, %v1247
          %v4845 = vmul.f32 %v1248, %v1248
          %v4846 = vmul.f32 %v1249, %v1249
          %v4847 = vmul.f32 %v1250, %v1250
          %v4848 = vmul.f32 %v1251, %v1251
          %v4849 = vmul.f32 %v1252, %v1252
          %v4850 = vmul.f32 %v1253, %v1253
          %v4851 = vmul.f32 %v1254, %v1254
          %v4852 = vmul.f32 %v1255, %v1255
          %v4853 = vmul.f32 %v1256, %v1256
          %v4854 = vmul.f32 %v1257, %v1257
          %v4855 = vmul.f32 %v1258, %v1258
          %v4856 = vmul.f32 %v1259, %v1259
          %v4857 = vmul.f32 %v1260, %v1260
          %v4858 = vmul.f32 %v1261, %v1261
          %v4859 = vmul.f32 %v1262, %v1262
          %v4860 = vmul.f32 %v1263, %v1263
          %v4861 = vmul.f32 %v1264, %v1264
          %v4862 = vmul.f32 %v1265, %v1265
          %v4863 = vmul.f32 %v1266, %v1266
          %v4864 = vmul.f32 %v1267, %v1267
          %v4865 = vmul.f32 %v1268, %v1268
          %v4866 = vmul.f32 %v1269, %v1269
          %v4867 = vmul.f32 %v1270, %v1270
          %v4868 = vmul.f32 %v1271, %v1271
          %v4869 = vmul.f32 %v1272, %v1272
          %v4870 = vmul.f32 %v1273, %v1273
          %v4871 = vmul.f32 %v1274, %v1274
          %v4872 = vmul.f32 %v1275, %v1275
          %v4873 = vmul.f32 %v1276, %v1276
          %v4874 = vmul.f32 %v1277, %v1277
          %v4875 = vmul.f32 %v1278, %v1278
          %v4876 = vmul.f32 %v1279, %v1279
          %v4877 = vmul.f32 %v1280, %v1280
          %v4878 = vmul.f32 %v1281, %v1281
          %v4879 = vmul.f32 %v1282, %v1282
          %v4880 = vmul.f32 %v1283, %v1283
          %v4881 = vmul.f32 %v1284, %v1284
          %v4882 = vmul.f32 %v1285, %v1285
          %v4883 = vmul.f32 %v1286, %v1286
          %v4884 = vmul.f32 %v1287, %v1287
          %v4885 = vmul.f32 %v1288, %v1288
          %v4886 = vmul.f32 %v1289, %v1289
          %v4887 = vmul.f32 %v1290, %v1290
          %v4888 = vmul.f32 %v1291, %v1291
          %v4889 = vmul.f32 %v1292, %v1292
          %v4890 = vmul.f32 %v1293, %v1293
          %v4891 = vmul.f32 %v1294, %v1294
          %v4892 = vmul.f32 %v1295, %v1295
          %v4893 = vmul.f32 %v1296, %v1296
          %v4894 = vmul.f32 %v1297, %v1297
          %v4895 = vmul.f32 %v1298, %v1298
          %v4896 = vmul.f32 %v1299, %v1299
          %v4897 = vmul.f32 %v1300, %v1300
          %v4898 = vmul.f32 %v1301, %v1301
          %v4899 = vmul.f32 %v1302, %v1302
          %v4900 = vmul.f32 %v1303, %v1303
          %v4901 = vmul.f32 %v1304, %v1304
          %v4902 = vmul.f32 %v1305, %v1305
          %v4903 = vmul.f32 %v1306, %v1306
          %v4904 = vmul.f32 %v1307, %v1307
          %v4905 = vmul.f32 %v1308, %v1308
          %v4906 = vmul.f32 %v1309, %v1309
          %v4907 = vmul.f32 %v1310, %v1310
          %v4908 = vmul.f32 %v1311, %v1311
          %v4909 = vmul.f32 %v1312, %v1312
          %v4910 = vmul.f32 %v1313, %v1313
          %v4911 = vmul.f32 %v1314, %v1314
          %v4912 = vmul.f32 %v1315, %v1315
          %v4913 = vmul.f32 %v1316, %v1316
          %v4914 = vmul.f32 %v1317, %v1317
          %v4915 = vmul.f32 %v1318, %v1318
          %v4916 = vmul.f32 %v1319, %v1319
          %v4917 = vmul.f32 %v1320, %v1320
          %v4918 = vmul.f32 %v1321, %v1321
          %v4919 = vmul.f32 %v1322, %v1322
          %v4920 = vmul.f32 %v1323, %v1323
          %v4921 = vmul.f32 %v1324, %v1324
          %v4922 = vmul.f32 %v1325, %v1325
          %v4923 = vmul.f32 %v1326, %v1326
          %v4924 = vmul.f32 %v1327, %v1327
          %v4925 = vmul.f32 %v1328, %v1328
          %v4926 = vmul.f32 %v1329, %v1329
          %v4927 = vmul.f32 %v1330, %v1330
          %v4928 = vmul.f32 %v1331, %v1331
          %v4929 = vmul.f32 %v1332, %v1332
          %v4930 = vmul.f32 %v1333, %v1333
          %v4931 = vmul.f32 %v1334, %v1334
          %v4932 = vmul.f32 %v1335, %v1335
          %v4933 = vmul.f32 %v1336, %v1336
          %v4934 = vmul.f32 %v1337, %v1337
          %v4935 = vmul.f32 %v1338, %v1338
          %v4936 = vmul.f32 %v1339, %v1339
          %v4937 = vmul.f32 %v1340, %v1340
          %v4938 = vmul.f32 %v1341, %v1341
          %v4939 = vmul.f32 %v1342, %v1342
          %v4940 = vmul.f32 %v1343, %v1343
          %v4941 = vmul.f32 %v1344, %v1344
          %v4942 = vmul.f32 %v1345, %v1345
          %v4943 = vmul.f32 %v1346, %v1346
          %v4944 = vmul.f32 %v1347, %v1347
          %v4945 = vmul.f32 %v1348, %v1348
          %v4946 = vmul.f32 %v1349, %v1349
          %v4947 = vmul.f32 %v1350, %v1350
          %v4948 = vmul.f32 %v1351, %v1351
          %v4949 = vmul.f32 %v1352, %v1352
          %v4950 = vmul.f32 %v1353, %v1353
          %v4951 = vmul.f32 %v1354, %v1354
          %v4952 = vmul.f32 %v1355, %v1355
          %v4953 = vmul.f32 %v1356, %v1356
          %v4954 = vmul.f32 %v1357, %v1357
          %v4955 = vmul.f32 %v1358, %v1358
          %v4956 = vmul.f32 %v1359, %v1359
          %v4957 = vmul.f32 %v1360, %v1360
          %v4958 = vmul.f32 %v1361, %v1361
          %v4959 = vmul.f32 %v1362, %v1362
          %v4960 = vmul.f32 %v1363, %v1363
          %v4961 = vmul.f32 %v1364, %v1364
          %v4962 = vmul.f32 %v1365, %v1365
          %v4963 = vmul.f32 %v1366, %v1366
          %v4964 = vmul.f32 %v1367, %v1367
          %v4965 = vmul.f32 %v1368, %v1368
          %v4966 = vmul.f32 %v1369, %v1369
          %v4967 = vmul.f32 %v1370, %v1370
          %v4968 = vmul.f32 %v1371, %v1371
          %v4969 = vmul.f32 %v1372, %v1372
          %v4970 = vmul.f32 %v1373, %v1373
          %v4971 = vmul.f32 %v1374, %v1374
          %v4972 = vmul.f32 %v1375, %v1375
          %v4973 = vmul.f32 %v1376, %v1376
          %v4974 = vmul.f32 %v1377, %v1377
          %v4975 = vmul.f32 %v1378, %v1378
          %v4976 = vmul.f32 %v1379, %v1379
          %v4977 = vmul.f32 %v1380, %v1380
          %v4978 = vmul.f32 %v1381, %v1381
          %v4979 = vmul.f32 %v1382, %v1382
          %v4980 = vmul.f32 %v1383, %v1383
          %v4981 = vmul.f32 %v1384, %v1384
          %v4982 = vmul.f32 %v1385, %v1385
          %v4983 = vmul.f32 %v1386, %v1386
          %v4984 = vmul.f32 %v1387, %v1387
          %v4985 = vmul.f32 %v1388, %v1388
          %v4986 = vmul.f32 %v1389, %v1389
          %v4987 = vmul.f32 %v1390, %v1390
          %v4988 = vmul.f32 %v1391, %v1391
          %v4989 = vmul.f32 %v1392, %v1392
          %v4990 = vmul.f32 %v1393, %v1393
          %v4991 = vmul.f32 %v1394, %v1394
          %v4992 = vmul.f32 %v1395, %v1395
          %v4993 = vmul.f32 %v1396, %v1396
          %v4994 = vmul.f32 %v1397, %v1397
          %v4995 = vmul.f32 %v1398, %v1398
          %v4996 = vmul.f32 %v1399, %v1399
          %v4997 = vmul.f32 %v1400, %v1400
          %v4998 = vmul.f32 %v1401, %v1401
          %v4999 = vmul.f32 %v1402, %v1402
          %v5000 = vmul.f32 %v1403, %v1403
          %v5001 = vmul.f32 %v1404, %v1404
          %v5002 = vmul.f32 %v1405, %v1405
          %v5003 = vmul.f32 %v1406, %v1406
          %v5004 = vmul.f32 %v1407, %v1407
          %v5005 = vmul.f32 %v1408, %v1408
          %v5006 = vmul.f32 %v1409, %v1409
          %v5007 = vmul.f32 %v1410, %v1410
          %v5008 = vmul.f32 %v1411, %v1411
          %v5009 = vmul.f32 %v1412, %v1412
          %v5010 = vmul.f32 %v1413, %v1413
          %v5011 = vmul.f32 %v1414, %v1414
          %v5012 = vmul.f32 %v1415, %v1415
          %v5013 = vmul.f32 %v1416, %v1416
          %v5014 = vmul.f32 %v1417, %v1417
          %v5015 = vmul.f32 %v1418, %v1418
          %v5016 = vmul.f32 %v1419, %v1419
          %v5017 = vmul.f32 %v1420, %v1420
          %v5018 = vmul.f32 %v1421, %v1421
          %v5019 = vmul.f32 %v1422, %v1422
          %v5020 = vmul.f32 %v1423, %v1423
          %v5021 = vmul.f32 %v1424, %v1424
          %v5022 = vmul.f32 %v1425, %v1425
          %v5023 = vmul.f32 %v1426, %v1426
          %v5024 = vmul.f32 %v1427, %v1427
          %v5025 = vmul.f32 %v1428, %v1428
          %v5026 = vmul.f32 %v1429, %v1429
          %v5027 = vmul.f32 %v1430, %v1430
          %v5028 = vmul.f32 %v1431, %v1431
          %v5029 = vmul.f32 %v1432, %v1432
          %v5030 = vmul.f32 %v1433, %v1433
          %v5031 = vmul.f32 %v1434, %v1434
          %v5032 = vmul.f32 %v1435, %v1435
          %v5033 = vmul.f32 %v1436, %v1436
          %v5034 = vmul.f32 %v1437, %v1437
          %v5035 = vmul.f32 %v1438, %v1438
          %v5036 = vmul.f32 %v1439, %v1439
          %v5037 = vmul.f32 %v1440, %v1440
          %v5038 = vmul.f32 %v1441, %v1441
          %v5039 = vmul.f32 %v1442, %v1442
          %v5040 = vmul.f32 %v1443, %v1443
          %v5041 = vmul.f32 %v1444, %v1444
          %v5042 = vmul.f32 %v1445, %v1445
          %v5043 = vmul.f32 %v1446, %v1446
          %v5044 = vmul.f32 %v1447, %v1447
          %v5045 = vmul.f32 %v1448, %v1448
          %v5046 = vmul.f32 %v1449, %v1449
          %v5047 = vmul.f32 %v1450, %v1450
          %v5048 = vmul.f32 %v1451, %v1451
          %v5049 = vmul.f32 %v1452, %v1452
          %v5050 = vmul.f32 %v1453, %v1453
          %v5051 = vmul.f32 %v1454, %v1454
          %v5052 = vmul.f32 %v1455, %v1455
          %v5053 = vmul.f32 %v1456, %v1456
          %v5054 = vmul.f32 %v1457, %v1457
          %v5055 = vmul.f32 %v1458, %v1458
          %v5056 = vmul.f32 %v1459, %v1459
          %v5057 = vmul.f32 %v1460, %v1460
          %v5058 = vmul.f32 %v1461, %v1461
          %v5059 = vmul.f32 %v1462, %v1462
          %v5060 = vmul.f32 %v1463, %v1463
          %v5061 = vmul.f32 %v1464, %v1464
          %v5062 = vmul.f32 %v1465, %v1465
          %v5063 = vmul.f32 %v1466, %v1466
          %v5064 = vmul.f32 %v1467, %v1467
          %v5065 = vmul.f32 %v1468, %v1468
          %v5066 = vmul.f32 %v1469, %v1469
          %v5067 = vmul.f32 %v1470, %v1470
          %v5068 = vmul.f32 %v1471, %v1471
          %v5069 = vmul.f32 %v1472, %v1472
          %v5070 = vmul.f32 %v1473, %v1473
          %v5071 = vmul.f32 %v1474, %v1474
          %v5072 = vmul.f32 %v1475, %v1475
          %v5073 = vmul.f32 %v1476, %v1476
          %v5074 = vmul.f32 %v1477, %v1477
          %v5075 = vmul.f32 %v1478, %v1478
          %v5076 = vmul.f32 %v1479, %v1479
          %v5077 = vmul.f32 %v1480, %v1480
          %v5078 = vmul.f32 %v1481, %v1481
          %v5079 = vmul.f32 %v1482, %v1482
          %v5080 = vmul.f32 %v1483, %v1483
          %v5081 = vmul.f32 %v1484, %v1484
          %v5082 = vmul.f32 %v1485, %v1485
          %v5083 = vmul.f32 %v1486, %v1486
          %v5084 = vmul.f32 %v1487, %v1487
          %v5085 = vmul.f32 %v1488, %v1488
          %v5086 = vmul.f32 %v1489, %v1489
          %v5087 = vmul.f32 %v1490, %v1490
          %v5088 = vmul.f32 %v1491, %v1491
          %v5089 = vmul.f32 %v1492, %v1492
          %v5090 = vmul.f32 %v1493, %v1493
          %v5091 = vmul.f32 %v1494, %v1494
          %v5092 = vmul.f32 %v1495, %v1495
          %v5093 = vmul.f32 %v1496, %v1496
          %v5094 = vmul.f32 %v1497, %v1497
          %v5095 = vmul.f32 %v1498, %v1498
          %v5096 = vmul.f32 %v1499, %v1499
          %v5097 = vmul.f32 %v1500, %v1500
          %v5098 = vmul.f32 %v1501, %v1501
          %v5099 = vmul.f32 %v1502, %v1502
          %v5100 = vmul.f32 %v1503, %v1503
          %v5101 = vmul.f32 %v1504, %v1504
          %v5102 = vmul.f32 %v1505, %v1505
          %v5103 = vmul.f32 %v1506, %v1506
          %v5104 = vmul.f32 %v1507, %v1507
          %v5105 = vmul.f32 %v1508, %v1508
          %v5106 = vmul.f32 %v1509, %v1509
          %v5107 = vmul.f32 %v1510, %v1510
          %v5108 = vmul.f32 %v1511, %v1511
          %v5109 = vmul.f32 %v1512, %v1512
          %v5110 = vmul.f32 %v1513, %v1513
          %v5111 = vmul.f32 %v1514, %v1514
          %v5112 = vmul.f32 %v1515, %v1515
          %v5113 = vmul.f32 %v1516, %v1516
          %v5114 = vmul.f32 %v1517, %v1517
          %v5115 = vmul.f32 %v1518, %v1518
          %v5116 = vmul.f32 %v1519, %v1519
          %v5117 = vmul.f32 %v1520, %v1520
          %v5118 = vmul.f32 %v1521, %v1521
          %v5119 = vmul.f32 %v1522, %v1522
          %v5120 = vmul.f32 %v1523, %v1523
          %v5121 = vmul.f32 %v1524, %v1524
          %v5122 = vmul.f32 %v1525, %v1525
          %v5123 = vmul.f32 %v1526, %v1526
          %v5124 = vmul.f32 %v1527, %v1527
          %v5125 = vmul.f32 %v1528, %v1528
          %v5126 = vmul.f32 %v1529, %v1529
          %v5127 = vmul.f32 %v1530, %v1530
          %v5128 = vmul.f32 %v1531, %v1531
          %v5129 = vmul.f32 %v1532, %v1532
          %v5130 = vmul.f32 %v1533, %v1533
          %v5131 = vmul.f32 %v1534, %v1534
          %v5132 = vmul.f32 %v1535, %v1535
          %v5133 = vmul.f32 %v1536, %v1536
          %v5134 = vmul.f32 %v1537, %v1537
          %v5135 = vmul.f32 %v1538, %v1538
          %v5136 = vmul.f32 %v1539, %v1539
          %v5137 = vmul.f32 %v1540, %v1540
          %v5138 = vmul.f32 %v1541, %v1541
          %v5139 = vmul.f32 %v1542, %v1542
          %v5140 = vmul.f32 %v1543, %v1543
          %v5141 = vmul.f32 %v1544, %v1544
          %v5142 = vmul.f32 %v1545, %v1545
          %v5143 = vmul.f32 %v1546, %v1546
          %v5144 = vmul.f32 %v1547, %v1547
          %v5145 = vmul.f32 %v1548, %v1548
          %v5146 = vmul.f32 %v1549, %v1549
          %v5147 = vmul.f32 %v1550, %v1550
          %v5148 = vmul.f32 %v1551, %v1551
          %v5149 = vmul.f32 %v1552, %v1552
          %v5150 = vmul.f32 %v1553, %v1553
          %v5151 = vmul.f32 %v1554, %v1554
          %v5152 = vmul.f32 %v1555, %v1555
          %v5153 = vmul.f32 %v1556, %v1556
          %v5154 = vmul.f32 %v1557, %v1557
          %v5155 = vmul.f32 %v1558, %v1558
          %v5156 = vmul.f32 %v1559, %v1559
          %v5157 = vmul.f32 %v1560, %v1560
          %v5158 = vmul.f32 %v1561, %v1561
          %v5159 = vmul.f32 %v1562, %v1562
          %v5160 = vmul.f32 %v1563, %v1563
          %v5161 = vmul.f32 %v1564, %v1564
          %v5162 = vmul.f32 %v1565, %v1565
          %v5163 = vmul.f32 %v1566, %v1566
          %v5164 = vmul.f32 %v1567, %v1567
          %v5165 = vmul.f32 %v1568, %v1568
          %v5166 = vmul.f32 %v1569, %v1569
          %v5167 = vmul.f32 %v1570, %v1570
          %v5168 = vmul.f32 %v1571, %v1571
          %v5169 = vmul.f32 %v1572, %v1572
          %v5170 = vmul.f32 %v1573, %v1573
          %v5171 = vmul.f32 %v1574, %v1574
          %v5172 = vmul.f32 %v1575, %v1575
          %v5173 = vmul.f32 %v1576, %v1576
          %v5174 = vmul.f32 %v1577, %v1577
          %v5175 = vmul.f32 %v1578, %v1578
          %v5176 = vmul.f32 %v1579, %v1579
          %v5177 = vmul.f32 %v1580, %v1580
          %v5178 = vmul.f32 %v1581, %v1581
          %v5179 = vmul.f32 %v1582, %v1582
          %v5180 = vmul.f32 %v1583, %v1583
          %v5181 = vmul.f32 %v1584, %v1584
          %v5182 = vmul.f32 %v1585, %v1585
          %v5183 = vmul.f32 %v1586, %v1586
          %v5184 = vmul.f32 %v1587, %v1587
          %v5185 = vmul.f32 %v1588, %v1588
          %v5186 = vmul.f32 %v1589, %v1589
          %v5187 = vmul.f32 %v1590, %v1590
          %v5188 = vmul.f32 %v1591, %v1591
          %v5189 = vmul.f32 %v1592, %v1592
          %v5190 = vmul.f32 %v1593, %v1593
          %v5191 = vmul.f32 %v1594, %v1594
          %v5192 = vmul.f32 %v1595, %v1595
          %v5193 = vmul.f32 %v1596, %v1596
          %v5194 = vmul.f32 %v1597, %v1597
          %v5195 = vmul.f32 %v1598, %v1598
          %v5196 = vmul.f32 %v1599, %v1599
          %v5197 = vmul.f32 %v1600, %v1600
          %v5198 = vmul.f32 %v1601, %v1601
          %v5199 = vmul.f32 %v1602, %v1602
          %v5200 = vmul.f32 %v1603, %v1603
          %v5201 = vmul.f32 %v1604, %v1604
          %v5202 = vmul.f32 %v1605, %v1605
          %v5203 = vmul.f32 %v1606, %v1606
          %v5204 = vmul.f32 %v1607, %v1607
          %v5205 = vmul.f32 %v1608, %v1608
          %v5206 = vmul.f32 %v1609, %v1609
          %v5207 = vmul.f32 %v1610, %v1610
          %v5208 = vmul.f32 %v1611, %v1611
          %v5209 = vmul.f32 %v1612, %v1612
          %v5210 = vmul.f32 %v1613, %v1613
          %v5211 = vmul.f32 %v1614, %v1614
          %v5212 = vmul.f32 %v1615, %v1615
          %v5213 = vmul.f32 %v1616, %v1616
          %v5214 = vmul.f32 %v1617, %v1617
          %v5215 = vmul.f32 %v1618, %v1618
          %v5216 = vmul.f32 %v1619, %v1619
          %v5217 = vmul.f32 %v1620, %v1620
          %v5218 = vmul.f32 %v1621, %v1621
          %v5219 = vmul.f32 %v1622, %v1622
          %v5220 = vmul.f32 %v1623, %v1623
          %v5221 = vmul.f32 %v1624, %v1624
          %v5222 = vmul.f32 %v1625, %v1625
          %v5223 = vmul.f32 %v1626, %v1626
          %v5224 = vmul.f32 %v1627, %v1627
          %v5225 = vmul.f32 %v1628, %v1628
          %v5226 = vmul.f32 %v1629, %v1629
          %v5227 = vmul.f32 %v1630, %v1630
          %v5228 = vmul.f32 %v1631, %v1631
          %v5229 = vmul.f32 %v1632, %v1632
          %v5230 = vmul.f32 %v1633, %v1633
          %v5231 = vmul.f32 %v1634, %v1634
          %v5232 = vmul.f32 %v1635, %v1635
          %v5233 = vmul.f32 %v1636, %v1636
          %v5234 = vmul.f32 %v1637, %v1637
          %v5235 = vmul.f32 %v1638, %v1638
          %v5236 = vmul.f32 %v1639, %v1639
          %v5237 = vmul.f32 %v1640, %v1640
          %v5238 = vmul.f32 %v1641, %v1641
          %v5239 = vmul.f32 %v1642, %v1642
          %v5240 = vmul.f32 %v1643, %v1643
          %v5241 = vmul.f32 %v1644, %v1644
          %v5242 = vmul.f32 %v1645, %v1645
          %v5243 = vmul.f32 %v1646, %v1646
          %v5244 = vmul.f32 %v1647, %v1647
          %v5245 = vmul.f32 %v1648, %v1648
          %v5246 = vmul.f32 %v1649, %v1649
          %v5247 = vmul.f32 %v1650, %v1650
          %v5248 = vmul.f32 %v1651, %v1651
          %v5249 = vmul.f32 %v1652, %v1652
          %v5250 = vmul.f32 %v1653, %v1653
          %v5251 = vmul.f32 %v1654, %v1654
          %v5252 = vmul.f32 %v1655, %v1655
          %v5253 = vmul.f32 %v1656, %v1656
          %v5254 = vmul.f32 %v1657, %v1657
          %v5255 = vmul.f32 %v1658, %v1658
          %v5256 = vmul.f32 %v1659, %v1659
          %v5257 = vmul.f32 %v1660, %v1660
          %v5258 = vmul.f32 %v1661, %v1661
          %v5259 = vmul.f32 %v1662, %v1662
          %v5260 = vmul.f32 %v1663, %v1663
          %v5261 = vmul.f32 %v1664, %v1664
          %v5262 = vmul.f32 %v1665, %v1665
          %v5263 = vmul.f32 %v1666, %v1666
          %v5264 = vmul.f32 %v1667, %v1667
          %v5265 = vmul.f32 %v1668, %v1668
          %v5266 = vmul.f32 %v1669, %v1669
          %v5267 = vmul.f32 %v1670, %v1670
          %v5268 = vmul.f32 %v1671, %v1671
          %v5269 = vmul.f32 %v1672, %v1672
          %v5270 = vmul.f32 %v1673, %v1673
          %v5271 = vmul.f32 %v1674, %v1674
          %v5272 = vmul.f32 %v1675, %v1675
          %v5273 = vmul.f32 %v1676, %v1676
          %v5274 = vmul.f32 %v1677, %v1677
          %v5275 = vmul.f32 %v1678, %v1678
          %v5276 = vmul.f32 %v1679, %v1679
          %v5277 = vmul.f32 %v1680, %v1680
          %v5278 = vmul.f32 %v1681, %v1681
          %v5279 = vmul.f32 %v1682, %v1682
          %v5280 = vmul.f32 %v1683, %v1683
          %v5281 = vmul.f32 %v1684, %v1684
          %v5282 = vmul.f32 %v1685, %v1685
          %v5283 = vmul.f32 %v1686, %v1686
          %v5284 = vmul.f32 %v1687, %v1687
          %v5285 = vmul.f32 %v1688, %v1688
          %v5286 = vmul.f32 %v1689, %v1689
          %v5287 = vmul.f32 %v1690, %v1690
          %v5288 = vmul.f32 %v1691, %v1691
          %v5289 = vmul.f32 %v1692, %v1692
          %v5290 = vmul.f32 %v1693, %v1693
          %v5291 = vmul.f32 %v1694, %v1694
          %v5292 = vmul.f32 %v1695, %v1695
          %v5293 = vmul.f32 %v1696, %v1696
          %v5294 = vmul.f32 %v1697, %v1697
          %v5295 = vmul.f32 %v1698, %v1698
          %v5296 = vmul.f32 %v1699, %v1699
          %v5297 = vmul.f32 %v1700, %v1700
          %v5298 = vmul.f32 %v1701, %v1701
          %v5299 = vmul.f32 %v1702, %v1702
          %v5300 = vmul.f32 %v1703, %v1703
          %v5301 = vmul.f32 %v1704, %v1704
          %v5302 = vmul.f32 %v1705, %v1705
          %v5303 = vmul.f32 %v1706, %v1706
          %v5304 = vmul.f32 %v1707, %v1707
          %v5305 = vmul.f32 %v1708, %v1708
          %v5306 = vmul.f32 %v1709, %v1709
          %v5307 = vmul.f32 %v1710, %v1710
          %v5308 = vmul.f32 %v1711, %v1711
          %v5309 = vmul.f32 %v1712, %v1712
          %v5310 = vmul.f32 %v1713, %v1713
          %v5311 = vmul.f32 %v1714, %v1714
          %v5312 = vmul.f32 %v1715, %v1715
          %v5313 = vmul.f32 %v1716, %v1716
          %v5314 = vmul.f32 %v1717, %v1717
          %v5315 = vmul.f32 %v1718, %v1718
          %v5316 = vmul.f32 %v1719, %v1719
          %v5317 = vmul.f32 %v1720, %v1720
          %v5318 = vmul.f32 %v1721, %v1721
          %v5319 = vmul.f32 %v1722, %v1722
          %v5320 = vmul.f32 %v1723, %v1723
          %v5321 = vmul.f32 %v1724, %v1724
          %v5322 = vmul.f32 %v1725, %v1725
          %v5323 = vmul.f32 %v1726, %v1726
          %v5324 = vmul.f32 %v1727, %v1727
          %v5325 = vmul.f32 %v1728, %v1728
          %v5326 = vmul.f32 %v1729, %v1729
          %v5327 = vmul.f32 %v1730, %v1730
          %v5328 = vmul.f32 %v1731, %v1731
          %v5329 = vmul.f32 %v1732, %v1732
          %v5330 = vmul.f32 %v1733, %v1733
          %v5331 = vmul.f32 %v1734, %v1734
          %v5332 = vmul.f32 %v1735, %v1735
          %v5333 = vmul.f32 %v1736, %v1736
          %v5334 = vmul.f32 %v1737, %v1737
          %v5335 = vmul.f32 %v1738, %v1738
          %v5336 = vmul.f32 %v1739, %v1739
          %v5337 = vmul.f32 %v1740, %v1740
          %v5338 = vmul.f32 %v1741, %v1741
          %v5339 = vmul.f32 %v1742, %v1742
          %v5340 = vmul.f32 %v1743, %v1743
          %v5341 = vmul.f32 %v1744, %v1744
          %v5342 = vmul.f32 %v1745, %v1745
          %v5343 = vmul.f32 %v1746, %v1746
          %v5344 = vmul.f32 %v1747, %v1747
          %v5345 = vmul.f32 %v1748, %v1748
          %v5346 = vmul.f32 %v1749, %v1749
          %v5347 = vmul.f32 %v1750, %v1750
          %v5348 = vmul.f32 %v1751, %v1751
          %v5349 = vmul.f32 %v1752, %v1752
          %v5350 = vld [vmem:[#allocation7] sm:$0xff]
          %v5351 = vadd.f32 %v4838, %v4839
          %v5352 = vadd.f32 %v5351, %v4840
          %v5353 = vadd.f32 %v5352, %v4841
          %v5354 = vadd.f32 %v5353, %v4842
          %v5355 = vadd.f32 %v5354, %v4843
          %v5356 = vadd.f32 %v5355, %v4844
          %v5357 = vadd.f32 %v5356, %v4845
          %v5358 = vadd.f32 %v5357, %v4846
          %v5359 = vadd.f32 %v5358, %v4847
          %v5360 = vadd.f32 %v5359, %v4848
          %v5361 = vadd.f32 %v5360, %v4849
          %v5362 = vadd.f32 %v5361, %v4850
          %v5363 = vadd.f32 %v5362, %v4851
          %v5364 = vadd.f32 %v5363, %v4852
          %v5365 = vadd.f32 %v5364, %v4853
          %v5366 = vadd.f32 %v5365, %v4854
          %v5367 = vadd.f32 %v5366, %v4855
          %v5368 = vadd.f32 %v5367, %v4856
          %v5369 = vadd.f32 %v5368, %v4857
          %v5370 = vadd.f32 %v5369, %v4858
          %v5371 = vadd.f32 %v5370, %v4859
          %v5372 = vadd.f32 %v5371, %v4860
          %v5373 = vadd.f32 %v5372, %v4861
          %v5374 = vadd.f32 %v5373, %v4862
          %v5375 = vadd.f32 %v5374, %v4863
          %v5376 = vadd.f32 %v5375, %v4864
          %v5377 = vadd.f32 %v5376, %v4865
          %v5378 = vadd.f32 %v5377, %v4866
          %v5379 = vadd.f32 %v5378, %v4867
          %v5380 = vadd.f32 %v5379, %v4868
          %v5381 = vadd.f32 %v5380, %v4869
          %v5382 = vadd.f32 %v5381, %v4870
          %v5383 = vadd.f32 %v5382, %v4871
          %v5384 = vadd.f32 %v5383, %v4872
          %v5385 = vadd.f32 %v5384, %v4873
          %v5386 = vadd.f32 %v5385, %v4874
          %v5387 = vadd.f32 %v5386, %v4875
          %v5388 = vadd.f32 %v5387, %v4876
          %v5389 = vadd.f32 %v5388, %v4877
          %v5390 = vadd.f32 %v5389, %v4878
          %v5391 = vadd.f32 %v5390, %v4879
          %v5392 = vadd.f32 %v5391, %v4880
          %v5393 = vadd.f32 %v5392, %v4881
          %v5394 = vadd.f32 %v5393, %v4882
          %v5395 = vadd.f32 %v5394, %v4883
          %v5396 = vadd.f32 %v5395, %v4884
          %v5397 = vadd.f32 %v5396, %v4885
          %v5398 = vadd.f32 %v5397, %v4886
          %v5399 = vadd.f32 %v5398, %v4887
          %v5400 = vadd.f32 %v5399, %v4888
          %v5401 = vadd.f32 %v5400, %v4889
          %v5402 = vadd.f32 %v5401, %v4890
          %v5403 = vadd.f32 %v5402, %v4891
          %v5404 = vadd.f32 %v5403, %v4892
          %v5405 = vadd.f32 %v5404, %v4893
          %v5406 = vadd.f32 %v5405, %v4894
          %v5407 = vadd.f32 %v5406, %v4895
          %v5408 = vadd.f32 %v5407, %v4896
          %v5409 = vadd.f32 %v5408, %v4897
          %v5410 = vadd.f32 %v5409, %v4898
          %v5411 = vadd.f32 %v5410, %v4899
          %v5412 = vadd.f32 %v5411, %v4900
          %v5413 = vadd.f32 %v5412, %v4901
          %v5414 = vadd.f32 %v5413, %v4902
          %v5415 = vadd.f32 %v5414, %v4903
          %v5416 = vadd.f32 %v5415, %v4904
          %v5417 = vadd.f32 %v5416, %v4905
          %v5418 = vadd.f32 %v5417, %v4906
          %v5419 = vadd.f32 %v5418, %v4907
          %v5420 = vadd.f32 %v5419, %v4908
          %v5421 = vadd.f32 %v5420, %v4909
          %v5422 = vadd.f32 %v5421, %v4910
          %v5423 = vadd.f32 %v5422, %v4911
          %v5424 = vadd.f32 %v5423, %v4912
          %v5425 = vadd.f32 %v5424, %v4913
          %v5426 = vadd.f32 %v5425, %v4914
          %v5427 = vadd.f32 %v5426, %v4915
          %v5428 = vadd.f32 %v5427, %v4916
          %v5429 = vadd.f32 %v5428, %v4917
          %v5430 = vadd.f32 %v5429, %v4918
          %v5431 = vadd.f32 %v5430, %v4919
          %v5432 = vadd.f32 %v5431, %v4920
          %v5433 = vadd.f32 %v5432, %v4921
          %v5434 = vadd.f32 %v5433, %v4922
          %v5435 = vadd.f32 %v5434, %v4923
          %v5436 = vadd.f32 %v5435, %v4924
          %v5437 = vadd.f32 %v5436, %v4925
          %v5438 = vadd.f32 %v5437, %v4926
          %v5439 = vadd.f32 %v5438, %v4927
          %v5440 = vadd.f32 %v5439, %v4928
          %v5441 = vadd.f32 %v5440, %v4929
          %v5442 = vadd.f32 %v5441, %v4930
          %v5443 = vadd.f32 %v5442, %v4931
          %v5444 = vadd.f32 %v5443, %v4932
          %v5445 = vadd.f32 %v5444, %v4933
          %v5446 = vadd.f32 %v5445, %v4934
          %v5447 = vadd.f32 %v5446, %v4935
          %v5448 = vadd.f32 %v5447, %v4936
          %v5449 = vadd.f32 %v5448, %v4937
          %v5450 = vadd.f32 %v5449, %v4938
          %v5451 = vadd.f32 %v5450, %v4939
          %v5452 = vadd.f32 %v5451, %v4940
          %v5453 = vadd.f32 %v5452, %v4941
          %v5454 = vadd.f32 %v5453, %v4942
          %v5455 = vadd.f32 %v5454, %v4943
          %v5456 = vadd.f32 %v5455, %v4944
          %v5457 = vadd.f32 %v5456, %v4945
          %v5458 = vadd.f32 %v5457, %v4946
          %v5459 = vadd.f32 %v5458, %v4947
          %v5460 = vadd.f32 %v5459, %v4948
          %v5461 = vadd.f32 %v5460, %v4949
          %v5462 = vadd.f32 %v5461, %v4950
          %v5463 = vadd.f32 %v5462, %v4951
          %v5464 = vadd.f32 %v5463, %v4952
          %v5465 = vadd.f32 %v5464, %v4953
          %v5466 = vadd.f32 %v5465, %v4954
          %v5467 = vadd.f32 %v5466, %v4955
          %v5468 = vadd.f32 %v5467, %v4956
          %v5469 = vadd.f32 %v5468, %v4957
          %v5470 = vadd.f32 %v5469, %v4958
          %v5471 = vadd.f32 %v5470, %v4959
          %v5472 = vadd.f32 %v5471, %v4960
          %v5473 = vadd.f32 %v5472, %v4961
          %v5474 = vadd.f32 %v5473, %v4962
          %v5475 = vadd.f32 %v5474, %v4963
          %v5476 = vadd.f32 %v5475, %v4964
          %v5477 = vadd.f32 %v5476, %v4965
          %v5478 = vadd.f32 %v5477, %v4966
          %v5479 = vadd.f32 %v5478, %v4967
          %v5480 = vadd.f32 %v5479, %v4968
          %v5481 = vadd.f32 %v5480, %v4969
          %v5482 = vadd.f32 %v5481, %v4970
          %v5483 = vadd.f32 %v5482, %v4971
          %v5484 = vadd.f32 %v5483, %v4972
          %v5485 = vadd.f32 %v5484, %v4973
          %v5486 = vadd.f32 %v5485, %v4974
          %v5487 = vadd.f32 %v5486, %v4975
          %v5488 = vadd.f32 %v5487, %v4976
          %v5489 = vadd.f32 %v5488, %v4977
          %v5490 = vadd.f32 %v5489, %v4978
          %v5491 = vadd.f32 %v5490, %v4979
          %v5492 = vadd.f32 %v5491, %v4980
          %v5493 = vadd.f32 %v5492, %v4981
          %v5494 = vadd.f32 %v5493, %v4982
          %v5495 = vadd.f32 %v5494, %v4983
          %v5496 = vadd.f32 %v5495, %v4984
          %v5497 = vadd.f32 %v5496, %v4985
          %v5498 = vadd.f32 %v5497, %v4986
          %v5499 = vadd.f32 %v5498, %v4987
          %v5500 = vadd.f32 %v5499, %v4988
          %v5501 = vadd.f32 %v5500, %v4989
          %v5502 = vadd.f32 %v5501, %v4990
          %v5503 = vadd.f32 %v5502, %v4991
          %v5504 = vadd.f32 %v5503, %v4992
          %v5505 = vadd.f32 %v5504, %v4993
          %v5506 = vadd.f32 %v5505, %v4994
          %v5507 = vadd.f32 %v5506, %v4995
          %v5508 = vadd.f32 %v5507, %v4996
          %v5509 = vadd.f32 %v5508, %v4997
          %v5510 = vadd.f32 %v5509, %v4998
          %v5511 = vadd.f32 %v5510, %v4999
          %v5512 = vadd.f32 %v5511, %v5000
          %v5513 = vadd.f32 %v5512, %v5001
          %v5514 = vadd.f32 %v5513, %v5002
          %v5515 = vadd.f32 %v5514, %v5003
          %v5516 = vadd.f32 %v5515, %v5004
          %v5517 = vadd.f32 %v5516, %v5005
          %v5518 = vadd.f32 %v5517, %v5006
          %v5519 = vadd.f32 %v5518, %v5007
          %v5520 = vadd.f32 %v5519, %v5008
          %v5521 = vadd.f32 %v5520, %v5009
          %v5522 = vadd.f32 %v5521, %v5010
          %v5523 = vadd.f32 %v5522, %v5011
          %v5524 = vadd.f32 %v5523, %v5012
          %v5525 = vadd.f32 %v5524, %v5013
          %v5526 = vadd.f32 %v5525, %v5014
          %v5527 = vadd.f32 %v5526, %v5015
          %v5528 = vadd.f32 %v5527, %v5016
          %v5529 = vadd.f32 %v5528, %v5017
          %v5530 = vadd.f32 %v5529, %v5018
          %v5531 = vadd.f32 %v5530, %v5019
          %v5532 = vadd.f32 %v5531, %v5020
          %v5533 = vadd.f32 %v5532, %v5021
          %v5534 = vadd.f32 %v5533, %v5022
          %v5535 = vadd.f32 %v5534, %v5023
          %v5536 = vadd.f32 %v5535, %v5024
          %v5537 = vadd.f32 %v5536, %v5025
          %v5538 = vadd.f32 %v5537, %v5026
          %v5539 = vadd.f32 %v5538, %v5027
          %v5540 = vadd.f32 %v5539, %v5028
          %v5541 = vadd.f32 %v5540, %v5029
          %v5542 = vadd.f32 %v5541, %v5030
          %v5543 = vadd.f32 %v5542, %v5031
          %v5544 = vadd.f32 %v5543, %v5032
          %v5545 = vadd.f32 %v5544, %v5033
          %v5546 = vadd.f32 %v5545, %v5034
          %v5547 = vadd.f32 %v5546, %v5035
          %v5548 = vadd.f32 %v5547, %v5036
          %v5549 = vadd.f32 %v5548, %v5037
          %v5550 = vadd.f32 %v5549, %v5038
          %v5551 = vadd.f32 %v5550, %v5039
          %v5552 = vadd.f32 %v5551, %v5040
          %v5553 = vadd.f32 %v5552, %v5041
          %v5554 = vadd.f32 %v5553, %v5042
          %v5555 = vadd.f32 %v5554, %v5043
          %v5556 = vadd.f32 %v5555, %v5044
          %v5557 = vadd.f32 %v5556, %v5045
          %v5558 = vadd.f32 %v5557, %v5046
          %v5559 = vadd.f32 %v5558, %v5047
          %v5560 = vadd.f32 %v5559, %v5048
          %v5561 = vadd.f32 %v5560, %v5049
          %v5562 = vadd.f32 %v5561, %v5050
          %v5563 = vadd.f32 %v5562, %v5051
          %v5564 = vadd.f32 %v5563, %v5052
          %v5565 = vadd.f32 %v5564, %v5053
          %v5566 = vadd.f32 %v5565, %v5054
          %v5567 = vadd.f32 %v5566, %v5055
          %v5568 = vadd.f32 %v5567, %v5056
          %v5569 = vadd.f32 %v5568, %v5057
          %v5570 = vadd.f32 %v5569, %v5058
          %v5571 = vadd.f32 %v5570, %v5059
          %v5572 = vadd.f32 %v5571, %v5060
          %v5573 = vadd.f32 %v5572, %v5061
          %v5574 = vadd.f32 %v5573, %v5062
          %v5575 = vadd.f32 %v5574, %v5063
          %v5576 = vadd.f32 %v5575, %v5064
          %v5577 = vadd.f32 %v5576, %v5065
          %v5578 = vadd.f32 %v5577, %v5066
          %v5579 = vadd.f32 %v5578, %v5067
          %v5580 = vadd.f32 %v5579, %v5068
          %v5581 = vadd.f32 %v5580, %v5069
          %v5582 = vadd.f32 %v5581, %v5070
          %v5583 = vadd.f32 %v5582, %v5071
          %v5584 = vadd.f32 %v5583, %v5072
          %v5585 = vadd.f32 %v5584, %v5073
          %v5586 = vadd.f32 %v5585, %v5074
          %v5587 = vadd.f32 %v5586, %v5075
          %v5588 = vadd.f32 %v5587, %v5076
          %v5589 = vadd.f32 %v5588, %v5077
          %v5590 = vadd.f32 %v5589, %v5078
          %v5591 = vadd.f32 %v5590, %v5079
          %v5592 = vadd.f32 %v5591, %v5080
          %v5593 = vadd.f32 %v5592, %v5081
          %v5594 = vadd.f32 %v5593, %v5082
          %v5595 = vadd.f32 %v5594, %v5083
          %v5596 = vadd.f32 %v5595, %v5084
          %v5597 = vadd.f32 %v5596, %v5085
          %v5598 = vadd.f32 %v5597, %v5086
          %v5599 = vadd.f32 %v5598, %v5087
          %v5600 = vadd.f32 %v5599, %v5088
          %v5601 = vadd.f32 %v5600, %v5089
          %v5602 = vadd.f32 %v5601, %v5090
          %v5603 = vadd.f32 %v5602, %v5091
          %v5604 = vadd.f32 %v5603, %v5092
          %v5605 = vadd.f32 %v5604, %v5093
          %v5606 = vadd.f32 %v5605, %v5094
          %v5607 = vadd.f32 %v5606, %v5095
          %v5608 = vadd.f32 %v5607, %v5096
          %v5609 = vadd.f32 %v5608, %v5097
          %v5610 = vadd.f32 %v5609, %v5098
          %v5611 = vadd.f32 %v5610, %v5099
          %v5612 = vadd.f32 %v5611, %v5100
          %v5613 = vadd.f32 %v5612, %v5101
          %v5614 = vadd.f32 %v5613, %v5102
          %v5615 = vadd.f32 %v5614, %v5103
          %v5616 = vadd.f32 %v5615, %v5104
          %v5617 = vadd.f32 %v5616, %v5105
          %v5618 = vadd.f32 %v5617, %v5106
          %v5619 = vadd.f32 %v5618, %v5107
          %v5620 = vadd.f32 %v5619, %v5108
          %v5621 = vadd.f32 %v5620, %v5109
          %v5622 = vadd.f32 %v5621, %v5110
          %v5623 = vadd.f32 %v5622, %v5111
          %v5624 = vadd.f32 %v5623, %v5112
          %v5625 = vadd.f32 %v5624, %v5113
          %v5626 = vadd.f32 %v5625, %v5114
          %v5627 = vadd.f32 %v5626, %v5115
          %v5628 = vadd.f32 %v5627, %v5116
          %v5629 = vadd.f32 %v5628, %v5117
          %v5630 = vadd.f32 %v5629, %v5118
          %v5631 = vadd.f32 %v5630, %v5119
          %v5632 = vadd.f32 %v5631, %v5120
          %v5633 = vadd.f32 %v5632, %v5121
          %v5634 = vadd.f32 %v5633, %v5122
          %v5635 = vadd.f32 %v5634, %v5123
          %v5636 = vadd.f32 %v5635, %v5124
          %v5637 = vadd.f32 %v5636, %v5125
          %v5638 = vadd.f32 %v5637, %v5126
          %v5639 = vadd.f32 %v5638, %v5127
          %v5640 = vadd.f32 %v5639, %v5128
          %v5641 = vadd.f32 %v5640, %v5129
          %v5642 = vadd.f32 %v5641, %v5130
          %v5643 = vadd.f32 %v5642, %v5131
          %v5644 = vadd.f32 %v5643, %v5132
          %v5645 = vadd.f32 %v5644, %v5133
          %v5646 = vadd.f32 %v5645, %v5134
          %v5647 = vadd.f32 %v5646, %v5135
          %v5648 = vadd.f32 %v5647, %v5136
          %v5649 = vadd.f32 %v5648, %v5137
          %v5650 = vadd.f32 %v5649, %v5138
          %v5651 = vadd.f32 %v5650, %v5139
          %v5652 = vadd.f32 %v5651, %v5140
          %v5653 = vadd.f32 %v5652, %v5141
          %v5654 = vadd.f32 %v5653, %v5142
          %v5655 = vadd.f32 %v5654, %v5143
          %v5656 = vadd.f32 %v5655, %v5144
          %v5657 = vadd.f32 %v5656, %v5145
          %v5658 = vadd.f32 %v5657, %v5146
          %v5659 = vadd.f32 %v5658, %v5147
          %v5660 = vadd.f32 %v5659, %v5148
          %v5661 = vadd.f32 %v5660, %v5149
          %v5662 = vadd.f32 %v5661, %v5150
          %v5663 = vadd.f32 %v5662, %v5151
          %v5664 = vadd.f32 %v5663, %v5152
          %v5665 = vadd.f32 %v5664, %v5153
          %v5666 = vadd.f32 %v5665, %v5154
          %v5667 = vadd.f32 %v5666, %v5155
          %v5668 = vadd.f32 %v5667, %v5156
          %v5669 = vadd.f32 %v5668, %v5157
          %v5670 = vadd.f32 %v5669, %v5158
          %v5671 = vadd.f32 %v5670, %v5159
          %v5672 = vadd.f32 %v5671, %v5160
          %v5673 = vadd.f32 %v5672, %v5161
          %v5674 = vadd.f32 %v5673, %v5162
          %v5675 = vadd.f32 %v5674, %v5163
          %v5676 = vadd.f32 %v5675, %v5164
          %v5677 = vadd.f32 %v5676, %v5165
          %v5678 = vadd.f32 %v5677, %v5166
          %v5679 = vadd.f32 %v5678, %v5167
          %v5680 = vadd.f32 %v5679, %v5168
          %v5681 = vadd.f32 %v5680, %v5169
          %v5682 = vadd.f32 %v5681, %v5170
          %v5683 = vadd.f32 %v5682, %v5171
          %v5684 = vadd.f32 %v5683, %v5172
          %v5685 = vadd.f32 %v5684, %v5173
          %v5686 = vadd.f32 %v5685, %v5174
          %v5687 = vadd.f32 %v5686, %v5175
          %v5688 = vadd.f32 %v5687, %v5176
          %v5689 = vadd.f32 %v5688, %v5177
          %v5690 = vadd.f32 %v5689, %v5178
          %v5691 = vadd.f32 %v5690, %v5179
          %v5692 = vadd.f32 %v5691, %v5180
          %v5693 = vadd.f32 %v5692, %v5181
          %v5694 = vadd.f32 %v5693, %v5182
          %v5695 = vadd.f32 %v5694, %v5183
          %v5696 = vadd.f32 %v5695, %v5184
          %v5697 = vadd.f32 %v5696, %v5185
          %v5698 = vadd.f32 %v5697, %v5186
          %v5699 = vadd.f32 %v5698, %v5187
          %v5700 = vadd.f32 %v5699, %v5188
          %v5701 = vadd.f32 %v5700, %v5189
          %v5702 = vadd.f32 %v5701, %v5190
          %v5703 = vadd.f32 %v5702, %v5191
          %v5704 = vadd.f32 %v5703, %v5192
          %v5705 = vadd.f32 %v5704, %v5193
          %v5706 = vadd.f32 %v5705, %v5194
          %v5707 = vadd.f32 %v5706, %v5195
          %v5708 = vadd.f32 %v5707, %v5196
          %v5709 = vadd.f32 %v5708, %v5197
          %v5710 = vadd.f32 %v5709, %v5198
          %v5711 = vadd.f32 %v5710, %v5199
          %v5712 = vadd.f32 %v5711, %v5200
          %v5713 = vadd.f32 %v5712, %v5201
          %v5714 = vadd.f32 %v5713, %v5202
          %v5715 = vadd.f32 %v5714, %v5203
          %v5716 = vadd.f32 %v5715, %v5204
          %v5717 = vadd.f32 %v5716, %v5205
          %v5718 = vadd.f32 %v5717, %v5206
          %v5719 = vadd.f32 %v5718, %v5207
          %v5720 = vadd.f32 %v5719, %v5208
          %v5721 = vadd.f32 %v5720, %v5209
          %v5722 = vadd.f32 %v5721, %v5210
          %v5723 = vadd.f32 %v5722, %v5211
          %v5724 = vadd.f32 %v5723, %v5212
          %v5725 = vadd.f32 %v5724, %v5213
          %v5726 = vadd.f32 %v5725, %v5214
          %v5727 = vadd.f32 %v5726, %v5215
          %v5728 = vadd.f32 %v5727, %v5216
          %v5729 = vadd.f32 %v5728, %v5217
          %v5730 = vadd.f32 %v5729, %v5218
          %v5731 = vadd.f32 %v5730, %v5219
          %v5732 = vadd.f32 %v5731, %v5220
          %v5733 = vadd.f32 %v5732, %v5221
          %v5734 = vadd.f32 %v5733, %v5222
          %v5735 = vadd.f32 %v5734, %v5223
          %v5736 = vadd.f32 %v5735, %v5224
          %v5737 = vadd.f32 %v5736, %v5225
          %v5738 = vadd.f32 %v5737, %v5226
          %v5739 = vadd.f32 %v5738, %v5227
          %v5740 = vadd.f32 %v5739, %v5228
          %v5741 = vadd.f32 %v5740, %v5229
          %v5742 = vadd.f32 %v5741, %v5230
          %v5743 = vadd.f32 %v5742, %v5231
          %v5744 = vadd.f32 %v5743, %v5232
          %v5745 = vadd.f32 %v5744, %v5233
          %v5746 = vadd.f32 %v5745, %v5234
          %v5747 = vadd.f32 %v5746, %v5235
          %v5748 = vadd.f32 %v5747, %v5236
          %v5749 = vadd.f32 %v5748, %v5237
          %v5750 = vadd.f32 %v5749, %v5238
          %v5751 = vadd.f32 %v5750, %v5239
          %v5752 = vadd.f32 %v5751, %v5240
          %v5753 = vadd.f32 %v5752, %v5241
          %v5754 = vadd.f32 %v5753, %v5242
          %v5755 = vadd.f32 %v5754, %v5243
          %v5756 = vadd.f32 %v5755, %v5244
          %v5757 = vadd.f32 %v5756, %v5245
          %v5758 = vadd.f32 %v5757, %v5246
          %v5759 = vadd.f32 %v5758, %v5247
          %v5760 = vadd.f32 %v5759, %v5248
          %v5761 = vadd.f32 %v5760, %v5249
          %v5762 = vadd.f32 %v5761, %v5250
          %v5763 = vadd.f32 %v5762, %v5251
          %v5764 = vadd.f32 %v5763, %v5252
          %v5765 = vadd.f32 %v5764, %v5253
          %v5766 = vadd.f32 %v5765, %v5254
          %v5767 = vadd.f32 %v5766, %v5255
          %v5768 = vadd.f32 %v5767, %v5256
          %v5769 = vadd.f32 %v5768, %v5257
          %v5770 = vadd.f32 %v5769, %v5258
          %v5771 = vadd.f32 %v5770, %v5259
          %v5772 = vadd.f32 %v5771, %v5260
          %v5773 = vadd.f32 %v5772, %v5261
          %v5774 = vadd.f32 %v5773, %v5262
          %v5775 = vadd.f32 %v5774, %v5263
          %v5776 = vadd.f32 %v5775, %v5264
          %v5777 = vadd.f32 %v5776, %v5265
          %v5778 = vadd.f32 %v5777, %v5266
          %v5779 = vadd.f32 %v5778, %v5267
          %v5780 = vadd.f32 %v5779, %v5268
          %v5781 = vadd.f32 %v5780, %v5269
          %v5782 = vadd.f32 %v5781, %v5270
          %v5783 = vadd.f32 %v5782, %v5271
          %v5784 = vadd.f32 %v5783, %v5272
          %v5785 = vadd.f32 %v5784, %v5273
          %v5786 = vadd.f32 %v5785, %v5274
          %v5787 = vadd.f32 %v5786, %v5275
          %v5788 = vadd.f32 %v5787, %v5276
          %v5789 = vadd.f32 %v5788, %v5277
          %v5790 = vadd.f32 %v5789, %v5278
          %v5791 = vadd.f32 %v5790, %v5279
          %v5792 = vadd.f32 %v5791, %v5280
          %v5793 = vadd.f32 %v5792, %v5281
          %v5794 = vadd.f32 %v5793, %v5282
          %v5795 = vadd.f32 %v5794, %v5283
          %v5796 = vadd.f32 %v5795, %v5284
          %v5797 = vadd.f32 %v5796, %v5285
          %v5798 = vadd.f32 %v5797, %v5286
          %v5799 = vadd.f32 %v5798, %v5287
          %v5800 = vadd.f32 %v5799, %v5288
          %v5801 = vadd.f32 %v5800, %v5289
          %v5802 = vadd.f32 %v5801, %v5290
          %v5803 = vadd.f32 %v5802, %v5291
          %v5804 = vadd.f32 %v5803, %v5292
          %v5805 = vadd.f32 %v5804, %v5293
          %v5806 = vadd.f32 %v5805, %v5294
          %v5807 = vadd.f32 %v5806, %v5295
          %v5808 = vadd.f32 %v5807, %v5296
          %v5809 = vadd.f32 %v5808, %v5297
          %v5810 = vadd.f32 %v5809, %v5298
          %v5811 = vadd.f32 %v5810, %v5299
          %v5812 = vadd.f32 %v5811, %v5300
          %v5813 = vadd.f32 %v5812, %v5301
          %v5814 = vadd.f32 %v5813, %v5302
          %v5815 = vadd.f32 %v5814, %v5303
          %v5816 = vadd.f32 %v5815, %v5304
          %v5817 = vadd.f32 %v5816, %v5305
          %v5818 = vadd.f32 %v5817, %v5306
          %v5819 = vadd.f32 %v5818, %v5307
          %v5820 = vadd.f32 %v5819, %v5308
          %v5821 = vadd.f32 %v5820, %v5309
          %v5822 = vadd.f32 %v5821, %v5310
          %v5823 = vadd.f32 %v5822, %v5311
          %v5824 = vadd.f32 %v5823, %v5312
          %v5825 = vadd.f32 %v5824, %v5313
          %v5826 = vadd.f32 %v5825, %v5314
          %v5827 = vadd.f32 %v5826, %v5315
          %v5828 = vadd.f32 %v5827, %v5316
          %v5829 = vadd.f32 %v5828, %v5317
          %v5830 = vadd.f32 %v5829, %v5318
          %v5831 = vadd.f32 %v5830, %v5319
          %v5832 = vadd.f32 %v5831, %v5320
          %v5833 = vadd.f32 %v5832, %v5321
          %v5834 = vadd.f32 %v5833, %v5322
          %v5835 = vadd.f32 %v5834, %v5323
          %v5836 = vadd.f32 %v5835, %v5324
          %v5837 = vadd.f32 %v5836, %v5325
          %v5838 = vadd.f32 %v5837, %v5326
          %v5839 = vadd.f32 %v5838, %v5327
          %v5840 = vadd.f32 %v5839, %v5328
          %v5841 = vadd.f32 %v5840, %v5329
          %v5842 = vadd.f32 %v5841, %v5330
          %v5843 = vadd.f32 %v5842, %v5331
          %v5844 = vadd.f32 %v5843, %v5332
          %v5845 = vadd.f32 %v5844, %v5333
          %v5846 = vadd.f32 %v5845, %v5334
          %v5847 = vadd.f32 %v5846, %v5335
          %v5848 = vadd.f32 %v5847, %v5336
          %v5849 = vadd.f32 %v5848, %v5337
          %v5850 = vadd.f32 %v5849, %v5338
          %v5851 = vadd.f32 %v5850, %v5339
          %v5852 = vadd.f32 %v5851, %v5340
          %v5853 = vadd.f32 %v5852, %v5341
          %v5854 = vadd.f32 %v5853, %v5342
          %v5855 = vadd.f32 %v5854, %v5343
          %v5856 = vadd.f32 %v5855, %v5344
          %v5857 = vadd.f32 %v5856, %v5345
          %v5858 = vadd.f32 %v5857, %v5346
          %v5859 = vadd.f32 %v5858, %v5347
          %v5860 = vadd.f32 %v5859, %v5348
          %v5861 = vadd.f32 %v5860, %v5349
          %v5862 = vadd.f32 %v5350, %v5861
          %5863 = vst [vmem:[#allocation7] sm:$0xff] %v5862
        $region48: #{tpu_custom_call.1} parent=27 // pred_fallthru
          _
        // Predicated region
        $region49: #{tpu_custom_call.1} parent=27 // pred_check
          %p5864 = pneg %p85
        $region50: #{tpu_custom_call.1} parent=27 // pred_check_branch
          %5866 = sbr.rel (%p5864) target = $region52
        $region51: #{tpu_custom_call.1} parent=27 // pred_region
          %s5868 = ssub.s32 128, 128
          %5869 = vsyncadd [#allocation4], %s5868
          %s5871 = sshll.u32 [#allocation7], 4
          %s5872 = int_to_ptr.vmem [resolvable:$true] %s5871
          %5874 = dma.vmem_to_hbm [thread:$0]  %s5872, 128, %s2, [#allocation4]
        $region52: #{tpu_custom_call.1} parent=27 // pred_fallthru
          _
        // Predicated region
        $region53: #{tpu_custom_call.1} parent=27 // pred_check
          %p5875 = pneg %p85
        $region54: #{tpu_custom_call.1} parent=27 // pred_check_branch
          %5877 = sbr.rel (%p5875) target = $region56
        $region55: #{tpu_custom_call.1} parent=27 // pred_region
          %5878 = dma.done [#allocation4], 128
        $region56: #{tpu_custom_call.1} parent=27 // pred_fallthru
          _
      $region28: #{tpu_custom_call.1} parent=5 // pred_fallthru
        _
      %p5879 = scmp.le.s32.totalorder 2, %s15
      // Predicated region
      $region57: #{tpu_custom_call.1} parent=5 // pred_check
        %p5880 = pneg %p5879
      $region58: #{tpu_custom_call.1} parent=5 // pred_check_branch
        %5882 = sbr.rel (%p5880) target = $region60
      $region59: #{tpu_custom_call.1} parent=5 // pred_region
        %s5883 = ssub.s32 %s15, 2
      $region60: #{tpu_custom_call.1} parent=5 // pred_fallthru
        _
    $region6: #{tpu_custom_call.1} parent=1 // loop_footer
      %s19 = sadd.s32 1, %s15
    $region7: #{tpu_custom_call.1} parent=1 // loop_footer_branch
      %14 = sbr.rel target = $region3
    $region8: #{tpu_custom_call.1} parent=1 // loop_exit
      _
    %5884 = vsyncpa [#allocation3], 1
    %s5885 = scalar_lea.sflag [#allocation3], 1
    %5886 = vsyncpa %s5885, 1
    %5887 = vsyncpa [#allocation6], 1
    %s5888 = scalar_lea.sflag [#allocation6], 1
    %5889 = vsyncpa %s5888, 1
    %5890 = vsyncpa [#allocation4], 1
    %s5891 = scalar_lea.sflag [#allocation4], 1
    %5892 = vsyncpa %s5891, 1

</llo_original>
